<compile_context>
chip_gen: v7x
topology: tpu7x:2x2x1
jax: 0.10.0
libtpu: 0.0.40
codegen_flags: <defaults>
</compile_context>

<pallas_src>
import functools

import jax
import jax.numpy as jnp
from jax.experimental import pallas as pl
from jax.experimental.pallas import tpu as pltpu

# ------------------------- model configuration -------------------------
IMAGE_SIZE = 16
PATCH = 4
CHANNELS = 4
DIM = 32
DEPTH = 2
HEADS = 4
DIM_HEAD = 8
MLP_DIM = 64
NUM_CLASSES = 10
BATCH = 2

N_PATCHES = (IMAGE_SIZE // PATCH) * (IMAGE_SIZE // PATCH)   # 16
PATCH_DIM = CHANNELS * PATCH * PATCH                         # 64
INNER = HEADS * DIM_HEAD                                     # 32
N1 = N_PATCHES + 1                                           # 17 (cls + patches)
STRIDE = 24                                                  # padded per-image rows (mult. of 8)
SCALE = DIM_HEAD ** (-0.5)
LN_EPS = 1e-5

# ------------------------- packed-parameter slab layouts -------------------------
# Global slab GSLAB: (G_ROWS, PATCH_DIM) f32, everything starts at column 0.
GR_PE_W = 0                       # rows 0:64,  cols 0:DIM          patch-embed linear weight
GR_PLN1_G = GR_PE_W + PATCH_DIM   # 64          cols 0:PATCH_DIM    LN(patch_dim) gamma
GR_PLN1_B = GR_PLN1_G + 1         # 65          cols 0:PATCH_DIM    LN(patch_dim) beta
GR_PE_B = GR_PLN1_B + 1           # 66          cols 0:DIM          patch-embed linear bias
GR_PLN2_G = GR_PE_B + 1           # 67          cols 0:DIM          LN(dim) gamma
GR_PLN2_B = GR_PLN2_G + 1         # 68          cols 0:DIM          LN(dim) beta
GR_CLS = GR_PLN2_B + 1            # 69          cols 0:DIM          cls token + pos[0] (folded)
GR_LNO_G = GR_CLS + 1             # 70          cols 0:DIM          final LN gamma
GR_LNO_B = GR_LNO_G + 1           # 71          cols 0:DIM          final LN beta
GR_POS = GR_LNO_B + 1             # rows 72:88, cols 0:DIM          pos[1:N1]
GR_WHEAD = GR_POS + N_PATCHES     # rows 88:120,cols 0:NUM_CLASSES  head weight
GR_BHEAD = GR_WHEAD + DIM         # 120         cols 0:NUM_CLASSES  head bias
G_ROWS = 128                      # padded

# Per-layer slab LSLAB: (DEPTH, L_ROWS, LW) f32, everything starts at column 0.
LW = 3 * INNER                    # 96
LR_WQKV = 0                       # rows 0:32,   cols 0:96   fused QKV weight (Q cols pre-scaled)
LR_WO = LR_WQKV + DIM             # rows 32:64,  cols 0:32   attention output weight
LR_W1 = LR_WO + INNER             # rows 64:96,  cols 0:64   MLP weight 1
LR_W2 = LR_W1 + DIM               # rows 96:160, cols 0:32   MLP weight 2
LR_LNA_G = LR_W2 + MLP_DIM        # 160          cols 0:DIM  attn pre-LN gamma
LR_LNA_B = LR_LNA_G + 1           # 161          cols 0:DIM  attn pre-LN beta
LR_BO = LR_LNA_B + 1              # 162          cols 0:DIM  attention output bias
LR_LNF_G = LR_BO + 1              # 163          cols 0:DIM  MLP pre-LN gamma
LR_LNF_B = LR_LNF_G + 1           # 164          cols 0:DIM  MLP pre-LN beta
LR_B1 = LR_LNF_B + 1              # 165          cols 0:64   MLP bias 1
LR_B2 = LR_B1 + 1                 # 166          cols 0:DIM  MLP bias 2
L_ROWS = 168                      # padded (multiple of 8)


# ------------------------- in-kernel helpers -------------------------
def _layernorm(x, gamma, beta, eps=LN_EPS):
    mu = jnp.mean(x, axis=-1, keepdims=True)
    xc = x - mu
    var = jnp.mean(xc * xc, axis=-1, keepdims=True)
    return xc * jax.lax.rsqrt(var + eps) * gamma + beta


def _gelu_exact(x):
    # nn.GELU() default = exact erf formulation
    return 0.5 * x * (1.0 + jax.lax.erf(x * 0.7071067811865476))


# ------------------------- fused Pallas kernel -------------------------
def vit_kernel(bb, patches_ref, gslab_ref, lslab_ref, o_ref, xs, att_s, cls_s):
    """Full ViT forward for `bb` images (bb is a static Python int)."""
    R = bb * STRIDE

    # ---- patch embedding: LN(patch_dim) -> Linear -> LN(dim) ----
    g1 = gslab_ref[GR_PLN1_G:GR_PLN1_G + 1, 0:PATCH_DIM]
    b1 = gslab_ref[GR_PLN1_B:GR_PLN1_B + 1, 0:PATCH_DIM]
    pt = _layernorm(patches_ref[...], g1, b1)                        # (bb*16, 64)
    pe_w = gslab_ref[GR_PE_W:GR_PE_W + PATCH_DIM, 0:DIM]             # (64, 32)
    pe_b = gslab_ref[GR_PE_B:GR_PE_B + 1, 0:DIM]
    tok = jnp.dot(pt, pe_w, preferred_element_type=jnp.float32) + pe_b
    g2 = gslab_ref[GR_PLN2_G:GR_PLN2_G + 1, 0:DIM]
    b2 = gslab_ref[GR_PLN2_B:GR_PLN2_B + 1, 0:DIM]
    tok = _layernorm(tok, g2, b2)                                    # (bb*16, 32)

    # ---- assemble [cls+pos0; patch tokens + pos[1:]] into padded xs ----
    cls_row = gslab_ref[GR_CLS:GR_CLS + 1, 0:DIM]                    # cls + pos[0] (pre-folded)
    pos_pat = gslab_ref[GR_POS:GR_POS + N_PATCHES, 0:DIM]            # (16, 32)
    zero_pad = jnp.zeros((STRIDE - N1, DIM), jnp.float32)
    for bi in range(bb):
        r0 = bi * STRIDE                                             # 8-aligned
        xs[r0:r0 + 1, :] = cls_row
        xs[r0 + 1:r0 + N1, :] = tok[bi * N_PATCHES:(bi + 1) * N_PATCHES, :] + pos_pat
        xs[r0 + N1:r0 + STRIDE, :] = zero_pad                        # keep padding rows finite

    # ---- attention mask: same image AND key index < N1 (hoisted, reused) ----
    row_i = jax.lax.broadcasted_iota(jnp.int32, (R, R), 0)
    col_i = jax.lax.broadcasted_iota(jnp.int32, (R, R), 1)
    valid = None
    for bi in range(bb):
        r0 = bi * STRIDE
        blk = ((row_i >= r0) & (row_i < r0 + STRIDE)
               & (col_i >= r0) & (col_i < r0 + N1))
        valid = blk if valid is None else (valid | blk)
    neg_big = jnp.float32(-1e30)

    # ---- transformer layers ----
    for l in range(DEPTH):
        # -------- attention block (pre-LN) --------
        lng = lslab_ref[l, LR_LNA_G:LR_LNA_G + 1, 0:DIM]
        lnb = lslab_ref[l, LR_LNA_B:LR_LNA_B + 1, 0:DIM]
        xn = _layernorm(xs[...], lng, lnb)                           # (R, 32)
        wqkv = lslab_ref[l, LR_WQKV:LR_WQKV + DIM, 0:3 * INNER]      # (32, 96), Q pre-scaled
        qkv = jnp.dot(xn, wqkv, preferred_element_type=jnp.float32)  # (R, 96)

        for h in range(HEADS):
            c = h * DIM_HEAD
            q = qkv[:, c:c + DIM_HEAD]                               # (R, 8) all images
            k = qkv[:, INNER + c:INNER + c + DIM_HEAD]               # (R, 8)
            v = qkv[:, 2 * INNER + c:2 * INNER + c + DIM_HEAD]       # (R, 8)
            s = jax.lax.dot_general(q, k, (((1,), (1,)), ((), ())),
                                    preferred_element_type=jnp.float32)  # (R, R)
            s = jnp.where(valid, s, neg_big)                         # block-diag + key-pad mask
            m = jnp.max(s, axis=-1, keepdims=True)
            e = jnp.exp(s - m)
            den = jnp.sum(e, axis=-1, keepdims=True)
            attn = e * (1.0 / den)                                   # exact softmax
            att_s[:, c:c + DIM_HEAD] = jnp.dot(
                attn, v, preferred_element_type=jnp.float32)         # (R, 8)

        wo = lslab_ref[l, LR_WO:LR_WO + INNER, 0:DIM]                # (32, 32)
        bo = lslab_ref[l, LR_BO:LR_BO + 1, 0:DIM]
        xs[...] = (xs[...]
                   + jnp.dot(att_s[...], wo, preferred_element_type=jnp.float32)
                   + bo)

        # -------- feed-forward block (pre-LN, exact GELU) --------
        fng = lslab_ref[l, LR_LNF_G:LR_LNF_G + 1, 0:DIM]
        fnb = lslab_ref[l, LR_LNF_B:LR_LNF_B + 1, 0:DIM]
        xn = _layernorm(xs[...], fng, fnb)
        w1 = lslab_ref[l, LR_W1:LR_W1 + DIM, 0:MLP_DIM]              # (32, 64)
        bb1 = lslab_ref[l, LR_B1:LR_B1 + 1, 0:MLP_DIM]
        h1 = _gelu_exact(jnp.dot(xn, w1, preferred_element_type=jnp.float32) + bb1)
        w2 = lslab_ref[l, LR_W2:LR_W2 + MLP_DIM, 0:DIM]              # (64, 32)
        bb2 = lslab_ref[l, LR_B2:LR_B2 + 1, 0:DIM]
        xs[...] = (xs[...]
                   + jnp.dot(h1, w2, preferred_element_type=jnp.float32)
                   + bb2)

    # ---- pool cls rows first, then final LayerNorm (LN is per-row) ----
    for bi in range(bb):
        cls_s[bi:bi + 1, :] = xs[bi * STRIDE:bi * STRIDE + 1, :]
    og = gslab_ref[GR_LNO_G:GR_LNO_G + 1, 0:DIM]
    ob = gslab_ref[GR_LNO_B:GR_LNO_B + 1, 0:DIM]
    cls_n = _layernorm(cls_s[...], og, ob)                           # (bb, 32)
    wh = gslab_ref[GR_WHEAD:GR_WHEAD + DIM, 0:NUM_CLASSES]           # (32, 10)
    bh = gslab_ref[GR_BHEAD:GR_BHEAD + 1, 0:NUM_CLASSES]             # (1, 10)
    o_ref[...] = jnp.dot(cls_n, wh, preferred_element_type=jnp.float32) + bh


# ------------------------- wrapper -------------------------
def _rearrange_patches(img):
    """'b c (h p1) (w p2) -> b (h w) (p1 p2 c)'  (glue, plain JAX)."""
    b, c, hh, ww = img.shape
    h, w = hh // PATCH, ww // PATCH
    x = img.reshape(b, c, h, PATCH, w, PATCH)
    x = x.transpose(0, 2, 4, 3, 5, 1)                  # b h w p1 p2 c
    return x.reshape(b, h * w, PATCH * PATCH * c)


def pack_params(p):
    """One-time repack OUTSIDE the jitted forward into two dense slabs.
    Also folds the attention scale into the Q columns of w_qkv and folds
    cls_token + pos[0] into a single row."""
    gslab = jnp.zeros((G_ROWS, PATCH_DIM), jnp.float32)
    gslab = gslab.at[GR_PE_W:GR_PE_W + PATCH_DIM, :DIM].set(p['pe_w'])
    gslab = gslab.at[GR_PLN1_G, :PATCH_DIM].set(p['pe_ln1_g'].reshape(-1))
    gslab = gslab.at[GR_PLN1_B, :PATCH_DIM].set(p['pe_ln1_b'].reshape(-1))
    gslab = gslab.at[GR_PE_B, :DIM].set(p['pe_b'].reshape(-1))
    gslab = gslab.at[GR_PLN2_G, :DIM].set(p['pe_ln2_g'].reshape(-1))
    gslab = gslab.at[GR_PLN2_B, :DIM].set(p['pe_ln2_b'].reshape(-1))
    pos = p['pos'].reshape(N1, DIM)
    gslab = gslab.at[GR_CLS, :DIM].set(p['cls'].reshape(DIM) + pos[0])
    gslab = gslab.at[GR_LNO_G, :DIM].set(p['ln_out_g'].reshape(-1))
    gslab = gslab.at[GR_LNO_B, :DIM].set(p['ln_out_b'].reshape(-1))
    gslab = gslab.at[GR_POS:GR_POS + N_PATCHES, :DIM].set(pos[1:])
    gslab = gslab.at[GR_WHEAD:GR_WHEAD + DIM, :NUM_CLASSES].set(p['w_head'])
    gslab = gslab.at[GR_BHEAD, :NUM_CLASSES].set(p['b_head'].reshape(-1))

    lslab = jnp.zeros((DEPTH, L_ROWS, LW), jnp.float32)
    wqkv_scaled = p['w_qkv'].at[:, :, :INNER].multiply(SCALE)   # fold attention scale into Q
    lslab = lslab.at[:, LR_WQKV:LR_WQKV + DIM, :3 * INNER].set(wqkv_scaled)
    lslab = lslab.at[:, LR_WO:LR_WO + INNER, :DIM].set(p['w_o'])
    lslab = lslab.at[:, LR_W1:LR_W1 + DIM, :MLP_DIM].set(p['w1'])
    lslab = lslab.at[:, LR_W2:LR_W2 + MLP_DIM, :DIM].set(p['w2'])
    lslab = lslab.at[:, LR_LNA_G, :DIM].set(p['ln_a_g'].reshape(DEPTH, DIM))
    lslab = lslab.at[:, LR_LNA_B, :DIM].set(p['ln_a_b'].reshape(DEPTH, DIM))
    lslab = lslab.at[:, LR_BO, :DIM].set(p['b_o'].reshape(DEPTH, DIM))
    lslab = lslab.at[:, LR_LNF_G, :DIM].set(p['ln_f_g'].reshape(DEPTH, DIM))
    lslab = lslab.at[:, LR_LNF_B, :DIM].set(p['ln_f_b'].reshape(DEPTH, DIM))
    lslab = lslab.at[:, LR_B1, :MLP_DIM].set(p['b1'].reshape(DEPTH, MLP_DIM))
    lslab = lslab.at[:, LR_B2, :DIM].set(p['b2'].reshape(DEPTH, DIM))
    return gslab, lslab


@jax.jit
def vit_forward(img, gslab, lslab):
    b = img.shape[0]
    patches = _rearrange_patches(img).reshape(b * N_PATCHES, PATCH_DIM)

    # Whole batch in one grid step: at 17 tokens/image a cross-core batch split
    # costs more in per-step overhead than it saves, and a single full-array
    # output block avoids sub-8 block-shape issues.
    R = b * STRIDE
    flops = 2 * b * N_PATCHES * PATCH_DIM * DIM
    flops += DEPTH * (2 * R * DIM * (3 * INNER)
                      + 4 * HEADS * R * R * DIM_HEAD
                      + 2 * R * INNER * DIM
                      + 4 * R * DIM * MLP_DIM)
    flops += 2 * b * DIM * NUM_CLASSES
    transc = DEPTH * (HEADS * R * R + R * MLP_DIM)
    bytes_accessed = 4 * (patches.size + gslab.size + lslab.size + b * NUM_CLASSES)

    logits = pl.pallas_call(
        functools.partial(vit_kernel, b),
        grid=(1,),
        in_specs=[
            pl.BlockSpec((b * N_PATCHES, PATCH_DIM), lambda i: (0, 0)),
            pl.BlockSpec((G_ROWS, PATCH_DIM), lambda i: (0, 0)),
            pl.BlockSpec((DEPTH, L_ROWS, LW), lambda i: (0, 0, 0)),
        ],
        out_specs=pl.BlockSpec((b, NUM_CLASSES), lambda i: (0, 0)),
        out_shape=jax.ShapeDtypeStruct((b, NUM_CLASSES), jnp.float32),
        scratch_shapes=[
            pltpu.VMEM((b * STRIDE, DIM), jnp.float32),    # activations (padded stride)
            pltpu.VMEM((b * STRIDE, INNER), jnp.float32),  # gathered head outputs
            pltpu.VMEM((b, DIM), jnp.float32),             # pooled cls rows
        ],
        compiler_params=pltpu.CompilerParams(
            dimension_semantics=("arbitrary",)),
        cost_estimate=pl.CostEstimate(flops=int(flops), transcendentals=int(transc),
                                      bytes_accessed=int(bytes_accessed)),
    )(patches, gslab, lslab)
    return logits                                           # (B, NUM_CLASSES)


# ------------------------- pure-JAX reference (for verification) -------------------------
def vit_reference(img, p):
    x = _rearrange_patches(img)
    x = _layernorm(x, p['pe_ln1_g'], p['pe_ln1_b'])
    x = x @ p['pe_w'] + p['pe_b']
    x = _layernorm(x, p['pe_ln2_g'], p['pe_ln2_b'])
    b = img.shape[0]
    x = jnp.concatenate([jnp.broadcast_to(p['cls'], (b, 1, DIM)), x], axis=1)
    x = x + p['pos'][:, :N1]
    for l in range(DEPTH):
        xn = _layernorm(x, p['ln_a_g'][l], p['ln_a_b'][l])
        qkv = xn @ p['w_qkv'][l]
        q, k, v = jnp.split(qkv, 3, axis=-1)
        to_h = lambda t: t.reshape(b, N1, HEADS, DIM_HEAD).transpose(0, 2, 1, 3)
        q, k, v = to_h(q), to_h(k), to_h(v)
        dots = jnp.einsum('bhnd,bhmd->bhnm', q, k) * SCALE
        attn = jax.nn.softmax(dots, axis=-1)
        o = jnp.einsum('bhnm,bhmd->bhnd', attn, v)
        o = o.transpose(0, 2, 1, 3).reshape(b, N1, INNER)
        x = x + (o @ p['w_o'][l] + p['b_o'][l])
        xn = _layernorm(x, p['ln_f_g'][l], p['ln_f_b'][l])
        h1 = _gelu_exact(xn @ p['w1'][l] + p['b1'][l])
        x = x + (h1 @ p['w2'][l] + p['b2'][l])
    x = _layernorm(x, p['ln_out_g'], p['ln_out_b'])
    return x[:, 0] @ p['w_head'] + p['b_head']


# ------------------------- deterministic parameter init -------------------------
def init_params(key):
    keys = iter(jax.random.split(key, 32))
    nrm = lambda shape, s=0.05: s * jax.random.normal(next(keys), shape, jnp.float32)
    p = {
        'pe_ln1_g': 1.0 + nrm((1, PATCH_DIM)), 'pe_ln1_b': nrm((1, PATCH_DIM)),
        'pe_w': nrm((PATCH_DIM, DIM)),         'pe_b': nrm((1, DIM)),
        'pe_ln2_g': 1.0 + nrm((1, DIM)),       'pe_ln2_b': nrm((1, DIM)),
        'cls': nrm((1, 1, DIM), 1.0),
        'pos': nrm((1, N1, DIM), 1.0),
        'ln_a_g': 1.0 + nrm((DEPTH, 1, DIM)),  'ln_a_b': nrm((DEPTH, 1, DIM)),
        'w_qkv': nrm((DEPTH, DIM, 3 * INNER)),
        'w_o': nrm((DEPTH, INNER, DIM)),       'b_o': nrm((DEPTH, 1, DIM)),
        'ln_f_g': 1.0 + nrm((DEPTH, 1, DIM)),  'ln_f_b': nrm((DEPTH, 1, DIM)),
        'w1': nrm((DEPTH, DIM, MLP_DIM)),      'b1': nrm((DEPTH, 1, MLP_DIM)),
        'w2': nrm((DEPTH, MLP_DIM, DIM)),      'b2': nrm((DEPTH, 1, DIM)),
        'ln_out_g': 1.0 + nrm((1, DIM)),       'ln_out_b': nrm((1, DIM)),
        'w_head': nrm((DIM, NUM_CLASSES)),     'b_head': nrm((1, NUM_CLASSES)),
    }
    return p


# ------------------------- main -------------------------
if __name__ == "__main__":
    root = jax.random.PRNGKey(0)
    k_img, k_par = jax.random.split(root)
    img = jax.random.normal(k_img, (BATCH, CHANNELS, IMAGE_SIZE, IMAGE_SIZE), jnp.float32)
    params = init_params(k_par)

    gslab, lslab = pack_params(params)     # one-time repack, hoisted out of jit

    out = vit_forward(img, gslab, lslab)
    out = jax.block_until_ready(out)
    assert out.shape == (BATCH, NUM_CLASSES), out.shape

    ref = vit_reference(img, params)
    err = float(jnp.max(jnp.abs(out - ref)))
    if err > 2e-3:
        raise AssertionError(f"Pallas output mismatch vs reference, max abs err = {err}")

    print("KERNEL_OK")
</pallas_src>

<mosaic_0001>
module attributes {stable_mosaic.version = 11 : i64} {
  func.func @vit_kernel(%arg0: i32, %arg1: memref<32x64xf32, #tpu.memory_space<vmem>>, %arg2: memref<128x64xf32, #tpu.memory_space<vmem>>, %arg3: memref<2x168x96xf32, #tpu.memory_space<vmem>>, %arg4: memref<2x10xf32, #tpu.memory_space<vmem>>, %arg5: memref<48x32xf32, #tpu.memory_space<vmem>>, %arg6: memref<48x32xf32, #tpu.memory_space<vmem>>, %arg7: memref<2x32xf32, #tpu.memory_space<vmem>>) attributes {dimension_semantics = [#tpu.dimension_semantics<arbitrary>], iteration_bounds = array<i64: 1>, scalar_prefetch = 0 : i64, scratch_operands = 3 : i64, tpu.core_type = #tpu.core_type<tc>, window_params = [{pipeline_mode = #tpu.pipeline_mode<synchronous>, transform_indices = @transform_0, window_bounds = array<i64: 32, 64>}, {pipeline_mode = #tpu.pipeline_mode<synchronous>, transform_indices = @transform_1, window_bounds = array<i64: 128, 64>}, {pipeline_mode = #tpu.pipeline_mode<synchronous>, transform_indices = @transform_2, window_bounds = array<i64: 2, 168, 96>}, {pipeline_mode = #tpu.pipeline_mode<synchronous>, transform_indices = @transform_3, window_bounds = array<i64: 2, 10>}]} {
    %c64 = arith.constant 64 : index
    %c0 = arith.constant 0 : index
    %0 = vector.load %arg2[%c64, %c0] : memref<128x64xf32, #tpu.memory_space<vmem>>, vector<1x64xf32>
    %c65 = arith.constant 65 : index
    %c0_0 = arith.constant 0 : index
    %1 = vector.load %arg2[%c65, %c0_0] : memref<128x64xf32, #tpu.memory_space<vmem>>, vector<1x64xf32>
    %c0_1 = arith.constant 0 : index
    %c0_2 = arith.constant 0 : index
    %2 = vector.load %arg1[%c0_1, %c0_2] : memref<32x64xf32, #tpu.memory_space<vmem>>, vector<32x64xf32>
    %cst = arith.constant dense<0.000000e+00> : vector<32xf32>
    %3 = vector.multi_reduction <add>, %2, %cst [1] : vector<32x64xf32> to vector<32xf32>
    %4 = vector.shape_cast %3 : vector<32xf32> to vector<32x1xf32>
    %cst_3 = arith.constant 6.400000e+01 : f32
    %5 = vector.broadcast %cst_3 : f32 to vector<32x1xf32>
    %6 = arith.divf %4, %5 : vector<32x1xf32>
    %7 = vector.broadcast %6 : vector<32x1xf32> to vector<32x64xf32>
    %8 = arith.subf %2, %7 : vector<32x64xf32>
    %9 = arith.mulf %8, %8 : vector<32x64xf32>
    %cst_4 = arith.constant dense<0.000000e+00> : vector<32xf32>
    %10 = vector.multi_reduction <add>, %9, %cst_4 [1] : vector<32x64xf32> to vector<32xf32>
    %11 = vector.shape_cast %10 : vector<32xf32> to vector<32x1xf32>
    %cst_5 = arith.constant 6.400000e+01 : f32
    %12 = vector.broadcast %cst_5 : f32 to vector<32x1xf32>
    %13 = arith.divf %11, %12 : vector<32x1xf32>
    %cst_6 = arith.constant 9.99999974E-6 : f32
    %14 = vector.broadcast %cst_6 : f32 to vector<32x1xf32>
    %15 = arith.addf %13, %14 : vector<32x1xf32>
    %16 = math.rsqrt %15 : vector<32x1xf32>
    %17 = vector.broadcast %16 : vector<32x1xf32> to vector<32x64xf32>
    %18 = arith.mulf %8, %17 : vector<32x64xf32>
    %19 = vector.broadcast %0 : vector<1x64xf32> to vector<32x64xf32>
    %20 = arith.mulf %18, %19 : vector<32x64xf32>
    %21 = vector.broadcast %1 : vector<1x64xf32> to vector<32x64xf32>
    %22 = arith.addf %20, %21 : vector<32x64xf32>
    %c0_7 = arith.constant 0 : index
    %c0_8 = arith.constant 0 : index
    %23 = vector.load %arg2[%c0_7, %c0_8] : memref<128x64xf32, #tpu.memory_space<vmem>>, vector<64x32xf32>
    %c66 = arith.constant 66 : index
    %c0_9 = arith.constant 0 : index
    %24 = vector.load %arg2[%c66, %c0_9] : memref<128x64xf32, #tpu.memory_space<vmem>>, vector<1x32xf32>
    %cst_10 = arith.constant dense<0.000000e+00> : vector<32x32xf32>
    %25 = tpu.matmul %22, %23, %cst_10 {dimension_numbers = #tpu.dot_dimension_numbers<[1], [0], [0], [1], [0, 0, 1, 1], [], []>} : vector<32x64xf32>, vector<64x32xf32>, vector<32x32xf32> -> vector<32x32xf32>
    %26 = vector.broadcast %24 : vector<1x32xf32> to vector<32x32xf32>
    %27 = arith.addf %25, %26 : vector<32x32xf32>
    %c67 = arith.constant 67 : index
    %c0_11 = arith.constant 0 : index
    %28 = vector.load %arg2[%c67, %c0_11] : memref<128x64xf32, #tpu.memory_space<vmem>>, vector<1x32xf32>
    %c68 = arith.constant 68 : index
    %c0_12 = arith.constant 0 : index
    %29 = vector.load %arg2[%c68, %c0_12] : memref<128x64xf32, #tpu.memory_space<vmem>>, vector<1x32xf32>
    %cst_13 = arith.constant dense<0.000000e+00> : vector<32xf32>
    %30 = vector.multi_reduction <add>, %27, %cst_13 [1] : vector<32x32xf32> to vector<32xf32>
    %31 = vector.shape_cast %30 : vector<32xf32> to vector<32x1xf32>
    %cst_14 = arith.constant 3.200000e+01 : f32
    %32 = vector.broadcast %cst_14 : f32 to vector<32x1xf32>
    %33 = arith.divf %31, %32 : vector<32x1xf32>
    %34 = vector.broadcast %33 : vector<32x1xf32> to vector<32x32xf32>
    %35 = arith.subf %27, %34 : vector<32x32xf32>
    %36 = arith.mulf %35, %35 : vector<32x32xf32>
    %cst_15 = arith.constant dense<0.000000e+00> : vector<32xf32>
    %37 = vector.multi_reduction <add>, %36, %cst_15 [1] : vector<32x32xf32> to vector<32xf32>
    %38 = vector.shape_cast %37 : vector<32xf32> to vector<32x1xf32>
    %cst_16 = arith.constant 3.200000e+01 : f32
    %39 = vector.broadcast %cst_16 : f32 to vector<32x1xf32>
    %40 = arith.divf %38, %39 : vector<32x1xf32>
    %cst_17 = arith.constant 9.99999974E-6 : f32
    %41 = vector.broadcast %cst_17 : f32 to vector<32x1xf32>
    %42 = arith.addf %40, %41 : vector<32x1xf32>
    %43 = math.rsqrt %42 : vector<32x1xf32>
    %44 = vector.broadcast %43 : vector<32x1xf32> to vector<32x32xf32>
    %45 = arith.mulf %35, %44 : vector<32x32xf32>
    %46 = vector.broadcast %28 : vector<1x32xf32> to vector<32x32xf32>
    %47 = arith.mulf %45, %46 : vector<32x32xf32>
    %48 = vector.broadcast %29 : vector<1x32xf32> to vector<32x32xf32>
    %49 = arith.addf %47, %48 : vector<32x32xf32>
    %c69 = arith.constant 69 : index
    %c0_18 = arith.constant 0 : index
    %50 = vector.load %arg2[%c69, %c0_18] : memref<128x64xf32, #tpu.memory_space<vmem>>, vector<1x32xf32>
    %c72 = arith.constant 72 : index
    %c0_19 = arith.constant 0 : index
    %51 = vector.load %arg2[%c72, %c0_19] : memref<128x64xf32, #tpu.memory_space<vmem>>, vector<16x32xf32>
    %cst_20 = arith.constant 0.000000e+00 : f32
    %52 = vector.broadcast %cst_20 : f32 to vector<7x32xf32>
    %c0_21 = arith.constant 0 : index
    %c0_22 = arith.constant 0 : index
    %53 = vector.load %arg5[%c0_21, %c0_22] : memref<48x32xf32, #tpu.memory_space<vmem>>, vector<1x32xf32>
    tpu.vector_store %arg5[%c0_21, %c0_22], %50 {strides = array<i32>} : memref<48x32xf32, #tpu.memory_space<vmem>>, vector<1x32xf32>,
    %54 = vector.extract_strided_slice %49 {offsets = [0, 0], sizes = [16, 32], strides = [1, 1]} : vector<32x32xf32> to vector<16x32xf32>
    %55 = arith.addf %54, %51 : vector<16x32xf32>
    %c1 = arith.constant 1 : index
    %c0_23 = arith.constant 0 : index
    %56 = vector.load %arg5[%c1, %c0_23] : memref<48x32xf32, #tpu.memory_space<vmem>>, vector<16x32xf32>
    tpu.vector_store %arg5[%c1, %c0_23], %55 {strides = array<i32>} : memref<48x32xf32, #tpu.memory_space<vmem>>, vector<16x32xf32>,
    %c17 = arith.constant 17 : index
    %c0_24 = arith.constant 0 : index
    %57 = vector.load %arg5[%c17, %c0_24] : memref<48x32xf32, #tpu.memory_space<vmem>>, vector<7x32xf32>
    tpu.vector_store %arg5[%c17, %c0_24], %52 {strides = array<i32>} : memref<48x32xf32, #tpu.memory_space<vmem>>, vector<7x32xf32>,
    %c24 = arith.constant 24 : index
    %c0_25 = arith.constant 0 : index
    %58 = vector.load %arg5[%c24, %c0_25] : memref<48x32xf32, #tpu.memory_space<vmem>>, vector<1x32xf32>
    tpu.vector_store %arg5[%c24, %c0_25], %50 {strides = array<i32>} : memref<48x32xf32, #tpu.memory_space<vmem>>, vector<1x32xf32>,
    %59 = vector.extract_strided_slice %49 {offsets = [16, 0], sizes = [16, 32], strides = [1, 1]} : vector<32x32xf32> to vector<16x32xf32>
    %60 = arith.addf %59, %51 : vector<16x32xf32>
    %c25 = arith.constant 25 : index
    %c0_26 = arith.constant 0 : index
    %61 = vector.load %arg5[%c25, %c0_26] : memref<48x32xf32, #tpu.memory_space<vmem>>, vector<16x32xf32>
    tpu.vector_store %arg5[%c25, %c0_26], %60 {strides = array<i32>} : memref<48x32xf32, #tpu.memory_space<vmem>>, vector<16x32xf32>,
    %c41 = arith.constant 41 : index
    %c0_27 = arith.constant 0 : index
    %62 = vector.load %arg5[%c41, %c0_27] : memref<48x32xf32, #tpu.memory_space<vmem>>, vector<7x32xf32>
    tpu.vector_store %arg5[%c41, %c0_27], %52 {strides = array<i32>} : memref<48x32xf32, #tpu.memory_space<vmem>>, vector<7x32xf32>,
    %63 = tpu.iota {dimensions = array<i32: 0>} : vector<48x48xi32>
    %64 = tpu.iota {dimensions = array<i32: 1>} : vector<48x48xi32>
    %c0_i32 = arith.constant 0 : i32
    %65 = vector.broadcast %c0_i32 : i32 to vector<48x48xi32>
    %66 = arith.cmpi sge, %63, %65 : vector<48x48xi32>
    %c24_i32 = arith.constant 24 : i32
    %67 = vector.broadcast %c24_i32 : i32 to vector<48x48xi32>
    %68 = arith.cmpi slt, %63, %67 : vector<48x48xi32>
    %69 = arith.andi %66, %68 : vector<48x48xi1>
    %c0_i32_28 = arith.constant 0 : i32
    %70 = vector.broadcast %c0_i32_28 : i32 to vector<48x48xi32>
    %71 = arith.cmpi sge, %64, %70 : vector<48x48xi32>
    %72 = arith.andi %69, %71 : vector<48x48xi1>
    %c17_i32 = arith.constant 17 : i32
    %73 = vector.broadcast %c17_i32 : i32 to vector<48x48xi32>
    %74 = arith.cmpi slt, %64, %73 : vector<48x48xi32>
    %75 = arith.andi %72, %74 : vector<48x48xi1>
    %c24_i32_29 = arith.constant 24 : i32
    %76 = vector.broadcast %c24_i32_29 : i32 to vector<48x48xi32>
    %77 = arith.cmpi sge, %63, %76 : vector<48x48xi32>
    %c48_i32 = arith.constant 48 : i32
    %78 = vector.broadcast %c48_i32 : i32 to vector<48x48xi32>
    %79 = arith.cmpi slt, %63, %78 : vector<48x48xi32>
    %80 = arith.andi %77, %79 : vector<48x48xi1>
    %c24_i32_30 = arith.constant 24 : i32
    %81 = vector.broadcast %c24_i32_30 : i32 to vector<48x48xi32>
    %82 = arith.cmpi sge, %64, %81 : vector<48x48xi32>
    %83 = arith.andi %80, %82 : vector<48x48xi1>
    %c41_i32 = arith.constant 41 : i32
    %84 = vector.broadcast %c41_i32 : i32 to vector<48x48xi32>
    %85 = arith.cmpi slt, %64, %84 : vector<48x48xi32>
    %86 = arith.andi %83, %85 : vector<48x48xi1>
    %87 = arith.ori %75, %86 : vector<48x48xi1>
    %c0_31 = arith.constant 0 : index
    %c160 = arith.constant 160 : index
    %c0_32 = arith.constant 0 : index
    %88 = vector.load %arg3[%c0_31, %c160, %c0_32] : memref<2x168x96xf32, #tpu.memory_space<vmem>>, vector<1x1x32xf32>
    %89 = vector.shape_cast %88 : vector<1x1x32xf32> to vector<1x32xf32>
    %c0_33 = arith.constant 0 : index
    %c161 = arith.constant 161 : index
    %c0_34 = arith.constant 0 : index
    %90 = vector.load %arg3[%c0_33, %c161, %c0_34] : memref<2x168x96xf32, #tpu.memory_space<vmem>>, vector<1x1x32xf32>
    %91 = vector.shape_cast %90 : vector<1x1x32xf32> to vector<1x32xf32>
    %c0_35 = arith.constant 0 : index
    %c0_36 = arith.constant 0 : index
    %92 = vector.load %arg5[%c0_35, %c0_36] : memref<48x32xf32, #tpu.memory_space<vmem>>, vector<48x32xf32>
    %cst_37 = arith.constant dense<0.000000e+00> : vector<48xf32>
    %93 = vector.multi_reduction <add>, %92, %cst_37 [1] : vector<48x32xf32> to vector<48xf32>
    %94 = vector.shape_cast %93 : vector<48xf32> to vector<48x1xf32>
    %cst_38 = arith.constant 3.200000e+01 : f32
    %95 = vector.broadcast %cst_38 : f32 to vector<48x1xf32>
    %96 = arith.divf %94, %95 : vector<48x1xf32>
    %97 = vector.broadcast %96 : vector<48x1xf32> to vector<48x32xf32>
    %98 = arith.subf %92, %97 : vector<48x32xf32>
    %99 = arith.mulf %98, %98 : vector<48x32xf32>
    %cst_39 = arith.constant dense<0.000000e+00> : vector<48xf32>
    %100 = vector.multi_reduction <add>, %99, %cst_39 [1] : vector<48x32xf32> to vector<48xf32>
    %101 = vector.shape_cast %100 : vector<48xf32> to vector<48x1xf32>
    %cst_40 = arith.constant 3.200000e+01 : f32
    %102 = vector.broadcast %cst_40 : f32 to vector<48x1xf32>
    %103 = arith.divf %101, %102 : vector<48x1xf32>
    %cst_41 = arith.constant 9.99999974E-6 : f32
    %104 = vector.broadcast %cst_41 : f32 to vector<48x1xf32>
    %105 = arith.addf %103, %104 : vector<48x1xf32>
    %106 = math.rsqrt %105 : vector<48x1xf32>
    %107 = vector.broadcast %106 : vector<48x1xf32> to vector<48x32xf32>
    %108 = arith.mulf %98, %107 : vector<48x32xf32>
    %109 = vector.broadcast %89 : vector<1x32xf32> to vector<48x32xf32>
    %110 = arith.mulf %108, %109 : vector<48x32xf32>
    %111 = vector.broadcast %91 : vector<1x32xf32> to vector<48x32xf32>
    %112 = arith.addf %110, %111 : vector<48x32xf32>
    %c0_42 = arith.constant 0 : index
    %c0_43 = arith.constant 0 : index
    %c0_44 = arith.constant 0 : index
    %113 = vector.load %arg3[%c0_42, %c0_43, %c0_44] : memref<2x168x96xf32, #tpu.memory_space<vmem>>, vector<1x32x96xf32>
    %114 = vector.shape_cast %113 : vector<1x32x96xf32> to vector<32x96xf32>
    %cst_45 = arith.constant dense<0.000000e+00> : vector<48x96xf32>
    %115 = tpu.matmul %112, %114, %cst_45 {dimension_numbers = #tpu.dot_dimension_numbers<[1], [0], [0], [1], [0, 0, 1, 1], [], []>} : vector<48x32xf32>, vector<32x96xf32>, vector<48x96xf32> -> vector<48x96xf32>
    %116 = vector.extract_strided_slice %115 {offsets = [0, 0], sizes = [48, 8], strides = [1, 1]} : vector<48x96xf32> to vector<48x8xf32>
    %117 = vector.extract_strided_slice %115 {offsets = [0, 32], sizes = [48, 8], strides = [1, 1]} : vector<48x96xf32> to vector<48x8xf32>
    %118 = vector.extract_strided_slice %115 {offsets = [0, 64], sizes = [48, 8], strides = [1, 1]} : vector<48x96xf32> to vector<48x8xf32>
    %cst_46 = arith.constant dense<0.000000e+00> : vector<48x48xf32>
    %119 = tpu.matmul %116, %117, %cst_46 {dimension_numbers = #tpu.dot_dimension_numbers<[1], [1], [0], [0], [0, 0, 1, 0], [], []>} : vector<48x8xf32>, vector<48x8xf32>, vector<48x48xf32> -> vector<48x48xf32>
    %cst_47 = arith.constant -1.000000e+30 : f32
    %120 = vector.broadcast %cst_47 : f32 to vector<48x48xf32>
    %121 = arith.select %87, %119, %120 : vector<48x48xi1>, vector<48x48xf32>
    %cst_48 = arith.constant dense<0xFF800000> : vector<48xf32>
    %122 = vector.multi_reduction <maximumf>, %121, %cst_48 [1] : vector<48x48xf32> to vector<48xf32>
    %123 = vector.shape_cast %122 : vector<48xf32> to vector<48x1xf32>
    %124 = vector.broadcast %123 : vector<48x1xf32> to vector<48x48xf32>
    %125 = arith.subf %121, %124 : vector<48x48xf32>
    %126 = math.exp %125 : vector<48x48xf32>
    %cst_49 = arith.constant dense<0.000000e+00> : vector<48xf32>
    %127 = vector.multi_reduction <add>, %126, %cst_49 [1] : vector<48x48xf32> to vector<48xf32>
    %128 = vector.shape_cast %127 : vector<48xf32> to vector<48x1xf32>
    %cst_50 = arith.constant 1.000000e+00 : f32
    %129 = vector.broadcast %cst_50 : f32 to vector<48x1xf32>
    %130 = arith.divf %129, %128 : vector<48x1xf32>
    %131 = vector.broadcast %130 : vector<48x1xf32> to vector<48x48xf32>
    %132 = arith.mulf %126, %131 : vector<48x48xf32>
    %cst_51 = arith.constant dense<0.000000e+00> : vector<48x8xf32>
    %133 = tpu.matmul %132, %118, %cst_51 {dimension_numbers = #tpu.dot_dimension_numbers<[1], [0], [0], [1], [0, 0, 1, 1], [], []>} : vector<48x48xf32>, vector<48x8xf32>, vector<48x8xf32> -> vector<48x8xf32>
    %c0_52 = arith.constant 0 : index
    %c0_53 = arith.constant 0 : index
    %134 = vector.load %arg6[%c0_52, %c0_53] : memref<48x32xf32, #tpu.memory_space<vmem>>, vector<48x8xf32>
    tpu.vector_store %arg6[%c0_52, %c0_53], %133 {strides = array<i32>} : memref<48x32xf32, #tpu.memory_space<vmem>>, vector<48x8xf32>,
    %135 = vector.extract_strided_slice %115 {offsets = [0, 8], sizes = [48, 8], strides = [1, 1]} : vector<48x96xf32> to vector<48x8xf32>
    %136 = vector.extract_strided_slice %115 {offsets = [0, 40], sizes = [48, 8], strides = [1, 1]} : vector<48x96xf32> to vector<48x8xf32>
    %137 = vector.extract_strided_slice %115 {offsets = [0, 72], sizes = [48, 8], strides = [1, 1]} : vector<48x96xf32> to vector<48x8xf32>
    %cst_54 = arith.constant dense<0.000000e+00> : vector<48x48xf32>
    %138 = tpu.matmul %135, %136, %cst_54 {dimension_numbers = #tpu.dot_dimension_numbers<[1], [1], [0], [0], [0, 0, 1, 0], [], []>} : vector<48x8xf32>, vector<48x8xf32>, vector<48x48xf32> -> vector<48x48xf32>
    %cst_55 = arith.constant -1.000000e+30 : f32
    %139 = vector.broadcast %cst_55 : f32 to vector<48x48xf32>
    %140 = arith.select %87, %138, %139 : vector<48x48xi1>, vector<48x48xf32>
    %cst_56 = arith.constant dense<0xFF800000> : vector<48xf32>
    %141 = vector.multi_reduction <maximumf>, %140, %cst_56 [1] : vector<48x48xf32> to vector<48xf32>
    %142 = vector.shape_cast %141 : vector<48xf32> to vector<48x1xf32>
    %143 = vector.broadcast %142 : vector<48x1xf32> to vector<48x48xf32>
    %144 = arith.subf %140, %143 : vector<48x48xf32>
    %145 = math.exp %144 : vector<48x48xf32>
    %cst_57 = arith.constant dense<0.000000e+00> : vector<48xf32>
    %146 = vector.multi_reduction <add>, %145, %cst_57 [1] : vector<48x48xf32> to vector<48xf32>
    %147 = vector.shape_cast %146 : vector<48xf32> to vector<48x1xf32>
    %cst_58 = arith.constant 1.000000e+00 : f32
    %148 = vector.broadcast %cst_58 : f32 to vector<48x1xf32>
    %149 = arith.divf %148, %147 : vector<48x1xf32>
    %150 = vector.broadcast %149 : vector<48x1xf32> to vector<48x48xf32>
    %151 = arith.mulf %145, %150 : vector<48x48xf32>
    %cst_59 = arith.constant dense<0.000000e+00> : vector<48x8xf32>
    %152 = tpu.matmul %151, %137, %cst_59 {dimension_numbers = #tpu.dot_dimension_numbers<[1], [0], [0], [1], [0, 0, 1, 1], [], []>} : vector<48x48xf32>, vector<48x8xf32>, vector<48x8xf32> -> vector<48x8xf32>
    %c0_60 = arith.constant 0 : index
    %c8 = arith.constant 8 : index
    %153 = vector.load %arg6[%c0_60, %c8] : memref<48x32xf32, #tpu.memory_space<vmem>>, vector<48x8xf32>
    tpu.vector_store %arg6[%c0_60, %c8], %152 {strides = array<i32>} : memref<48x32xf32, #tpu.memory_space<vmem>>, vector<48x8xf32>,
    %154 = vector.extract_strided_slice %115 {offsets = [0, 16], sizes = [48, 8], strides = [1, 1]} : vector<48x96xf32> to vector<48x8xf32>
    %155 = vector.extract_strided_slice %115 {offsets = [0, 48], sizes = [48, 8], strides = [1, 1]} : vector<48x96xf32> to vector<48x8xf32>
    %156 = vector.extract_strided_slice %115 {offsets = [0, 80], sizes = [48, 8], strides = [1, 1]} : vector<48x96xf32> to vector<48x8xf32>
    %cst_61 = arith.constant dense<0.000000e+00> : vector<48x48xf32>
    %157 = tpu.matmul %154, %155, %cst_61 {dimension_numbers = #tpu.dot_dimension_numbers<[1], [1], [0], [0], [0, 0, 1, 0], [], []>} : vector<48x8xf32>, vector<48x8xf32>, vector<48x48xf32> -> vector<48x48xf32>
    %cst_62 = arith.constant -1.000000e+30 : f32
    %158 = vector.broadcast %cst_62 : f32 to vector<48x48xf32>
    %159 = arith.select %87, %157, %158 : vector<48x48xi1>, vector<48x48xf32>
    %cst_63 = arith.constant dense<0xFF800000> : vector<48xf32>
    %160 = vector.multi_reduction <maximumf>, %159, %cst_63 [1] : vector<48x48xf32> to vector<48xf32>
    %161 = vector.shape_cast %160 : vector<48xf32> to vector<48x1xf32>
    %162 = vector.broadcast %161 : vector<48x1xf32> to vector<48x48xf32>
    %163 = arith.subf %159, %162 : vector<48x48xf32>
    %164 = math.exp %163 : vector<48x48xf32>
    %cst_64 = arith.constant dense<0.000000e+00> : vector<48xf32>
    %165 = vector.multi_reduction <add>, %164, %cst_64 [1] : vector<48x48xf32> to vector<48xf32>
    %166 = vector.shape_cast %165 : vector<48xf32> to vector<48x1xf32>
    %cst_65 = arith.constant 1.000000e+00 : f32
    %167 = vector.broadcast %cst_65 : f32 to vector<48x1xf32>
    %168 = arith.divf %167, %166 : vector<48x1xf32>
    %169 = vector.broadcast %168 : vector<48x1xf32> to vector<48x48xf32>
    %170 = arith.mulf %164, %169 : vector<48x48xf32>
    %cst_66 = arith.constant dense<0.000000e+00> : vector<48x8xf32>
    %171 = tpu.matmul %170, %156, %cst_66 {dimension_numbers = #tpu.dot_dimension_numbers<[1], [0], [0], [1], [0, 0, 1, 1], [], []>} : vector<48x48xf32>, vector<48x8xf32>, vector<48x8xf32> -> vector<48x8xf32>
    %c0_67 = arith.constant 0 : index
    %c16 = arith.constant 16 : index
    %172 = vector.load %arg6[%c0_67, %c16] : memref<48x32xf32, #tpu.memory_space<vmem>>, vector<48x8xf32>
    tpu.vector_store %arg6[%c0_67, %c16], %171 {strides = array<i32>} : memref<48x32xf32, #tpu.memory_space<vmem>>, vector<48x8xf32>,
    %173 = vector.extract_strided_slice %115 {offsets = [0, 24], sizes = [48, 8], strides = [1, 1]} : vector<48x96xf32> to vector<48x8xf32>
    %174 = vector.extract_strided_slice %115 {offsets = [0, 56], sizes = [48, 8], strides = [1, 1]} : vector<48x96xf32> to vector<48x8xf32>
    %175 = vector.extract_strided_slice %115 {offsets = [0, 88], sizes = [48, 8], strides = [1, 1]} : vector<48x96xf32> to vector<48x8xf32>
    %cst_68 = arith.constant dense<0.000000e+00> : vector<48x48xf32>
    %176 = tpu.matmul %173, %174, %cst_68 {dimension_numbers = #tpu.dot_dimension_numbers<[1], [1], [0], [0], [0, 0, 1, 0], [], []>} : vector<48x8xf32>, vector<48x8xf32>, vector<48x48xf32> -> vector<48x48xf32>
    %cst_69 = arith.constant -1.000000e+30 : f32
    %177 = vector.broadcast %cst_69 : f32 to vector<48x48xf32>
    %178 = arith.select %87, %176, %177 : vector<48x48xi1>, vector<48x48xf32>
    %cst_70 = arith.constant dense<0xFF800000> : vector<48xf32>
    %179 = vector.multi_reduction <maximumf>, %178, %cst_70 [1] : vector<48x48xf32> to vector<48xf32>
    %180 = vector.shape_cast %179 : vector<48xf32> to vector<48x1xf32>
    %181 = vector.broadcast %180 : vector<48x1xf32> to vector<48x48xf32>
    %182 = arith.subf %178, %181 : vector<48x48xf32>
    %183 = math.exp %182 : vector<48x48xf32>
    %cst_71 = arith.constant dense<0.000000e+00> : vector<48xf32>
    %184 = vector.multi_reduction <add>, %183, %cst_71 [1] : vector<48x48xf32> to vector<48xf32>
    %185 = vector.shape_cast %184 : vector<48xf32> to vector<48x1xf32>
    %cst_72 = arith.constant 1.000000e+00 : f32
    %186 = vector.broadcast %cst_72 : f32 to vector<48x1xf32>
    %187 = arith.divf %186, %185 : vector<48x1xf32>
    %188 = vector.broadcast %187 : vector<48x1xf32> to vector<48x48xf32>
    %189 = arith.mulf %183, %188 : vector<48x48xf32>
    %cst_73 = arith.constant dense<0.000000e+00> : vector<48x8xf32>
    %190 = tpu.matmul %189, %175, %cst_73 {dimension_numbers = #tpu.dot_dimension_numbers<[1], [0], [0], [1], [0, 0, 1, 1], [], []>} : vector<48x48xf32>, vector<48x8xf32>, vector<48x8xf32> -> vector<48x8xf32>
    %c0_74 = arith.constant 0 : index
    %c24_75 = arith.constant 24 : index
    %191 = vector.load %arg6[%c0_74, %c24_75] : memref<48x32xf32, #tpu.memory_space<vmem>>, vector<48x8xf32>
    tpu.vector_store %arg6[%c0_74, %c24_75], %190 {strides = array<i32>} : memref<48x32xf32, #tpu.memory_space<vmem>>, vector<48x8xf32>,
    %c0_76 = arith.constant 0 : index
    %c32 = arith.constant 32 : index
    %c0_77 = arith.constant 0 : index
    %192 = vector.load %arg3[%c0_76, %c32, %c0_77] : memref<2x168x96xf32, #tpu.memory_space<vmem>>, vector<1x32x32xf32>
    %193 = vector.shape_cast %192 : vector<1x32x32xf32> to vector<32x32xf32>
    %c0_78 = arith.constant 0 : index
    %c162 = arith.constant 162 : index
    %c0_79 = arith.constant 0 : index
    %194 = vector.load %arg3[%c0_78, %c162, %c0_79] : memref<2x168x96xf32, #tpu.memory_space<vmem>>, vector<1x1x32xf32>
    %195 = vector.shape_cast %194 : vector<1x1x32xf32> to vector<1x32xf32>
    %c0_80 = arith.constant 0 : index
    %c0_81 = arith.constant 0 : index
    %196 = vector.load %arg5[%c0_80, %c0_81] : memref<48x32xf32, #tpu.memory_space<vmem>>, vector<48x32xf32>
    %c0_82 = arith.constant 0 : index
    %c0_83 = arith.constant 0 : index
    %197 = vector.load %arg6[%c0_82, %c0_83] : memref<48x32xf32, #tpu.memory_space<vmem>>, vector<48x32xf32>
    %cst_84 = arith.constant dense<0.000000e+00> : vector<48x32xf32>
    %198 = tpu.matmul %197, %193, %cst_84 {dimension_numbers = #tpu.dot_dimension_numbers<[1], [0], [0], [1], [0, 0, 1, 1], [], []>} : vector<48x32xf32>, vector<32x32xf32>, vector<48x32xf32> -> vector<48x32xf32>
    %199 = arith.addf %196, %198 : vector<48x32xf32>
    %200 = vector.broadcast %195 : vector<1x32xf32> to vector<48x32xf32>
    %201 = arith.addf %199, %200 : vector<48x32xf32>
    %c0_85 = arith.constant 0 : index
    %c0_86 = arith.constant 0 : index
    %202 = vector.load %arg5[%c0_85, %c0_86] : memref<48x32xf32, #tpu.memory_space<vmem>>, vector<48x32xf32>
    tpu.vector_store %arg5[%c0_85, %c0_86], %201 {strides = array<i32>} : memref<48x32xf32, #tpu.memory_space<vmem>>, vector<48x32xf32>,
    %c0_87 = arith.constant 0 : index
    %c163 = arith.constant 163 : index
    %c0_88 = arith.constant 0 : index
    %203 = vector.load %arg3[%c0_87, %c163, %c0_88] : memref<2x168x96xf32, #tpu.memory_space<vmem>>, vector<1x1x32xf32>
    %204 = vector.shape_cast %203 : vector<1x1x32xf32> to vector<1x32xf32>
    %c0_89 = arith.constant 0 : index
    %c164 = arith.constant 164 : index
    %c0_90 = arith.constant 0 : index
    %205 = vector.load %arg3[%c0_89, %c164, %c0_90] : memref<2x168x96xf32, #tpu.memory_space<vmem>>, vector<1x1x32xf32>
    %206 = vector.shape_cast %205 : vector<1x1x32xf32> to vector<1x32xf32>
    %c0_91 = arith.constant 0 : index
    %c0_92 = arith.constant 0 : index
    %207 = vector.load %arg5[%c0_91, %c0_92] : memref<48x32xf32, #tpu.memory_space<vmem>>, vector<48x32xf32>
    %cst_93 = arith.constant dense<0.000000e+00> : vector<48xf32>
    %208 = vector.multi_reduction <add>, %207, %cst_93 [1] : vector<48x32xf32> to vector<48xf32>
    %209 = vector.shape_cast %208 : vector<48xf32> to vector<48x1xf32>
    %cst_94 = arith.constant 3.200000e+01 : f32
    %210 = vector.broadcast %cst_94 : f32 to vector<48x1xf32>
    %211 = arith.divf %209, %210 : vector<48x1xf32>
    %212 = vector.broadcast %211 : vector<48x1xf32> to vector<48x32xf32>
    %213 = arith.subf %207, %212 : vector<48x32xf32>
    %214 = arith.mulf %213, %213 : vector<48x32xf32>
    %cst_95 = arith.constant dense<0.000000e+00> : vector<48xf32>
    %215 = vector.multi_reduction <add>, %214, %cst_95 [1] : vector<48x32xf32> to vector<48xf32>
    %216 = vector.shape_cast %215 : vector<48xf32> to vector<48x1xf32>
    %cst_96 = arith.constant 3.200000e+01 : f32
    %217 = vector.broadcast %cst_96 : f32 to vector<48x1xf32>
    %218 = arith.divf %216, %217 : vector<48x1xf32>
    %cst_97 = arith.constant 9.99999974E-6 : f32
    %219 = vector.broadcast %cst_97 : f32 to vector<48x1xf32>
    %220 = arith.addf %218, %219 : vector<48x1xf32>
    %221 = math.rsqrt %220 : vector<48x1xf32>
    %222 = vector.broadcast %221 : vector<48x1xf32> to vector<48x32xf32>
    %223 = arith.mulf %213, %222 : vector<48x32xf32>
    %224 = vector.broadcast %204 : vector<1x32xf32> to vector<48x32xf32>
    %225 = arith.mulf %223, %224 : vector<48x32xf32>
    %226 = vector.broadcast %206 : vector<1x32xf32> to vector<48x32xf32>
    %227 = arith.addf %225, %226 : vector<48x32xf32>
    %c0_98 = arith.constant 0 : index
    %c64_99 = arith.constant 64 : index
    %c0_100 = arith.constant 0 : index
    %228 = vector.load %arg3[%c0_98, %c64_99, %c0_100] : memref<2x168x96xf32, #tpu.memory_space<vmem>>, vector<1x32x64xf32>
    %229 = vector.shape_cast %228 : vector<1x32x64xf32> to vector<32x64xf32>
    %c0_101 = arith.constant 0 : index
    %c165 = arith.constant 165 : index
    %c0_102 = arith.constant 0 : index
    %230 = vector.load %arg3[%c0_101, %c165, %c0_102] : memref<2x168x96xf32, #tpu.memory_space<vmem>>, vector<1x1x64xf32>
    %231 = vector.shape_cast %230 : vector<1x1x64xf32> to vector<1x64xf32>
    %cst_103 = arith.constant dense<0.000000e+00> : vector<48x64xf32>
    %232 = tpu.matmul %227, %229, %cst_103 {dimension_numbers = #tpu.dot_dimension_numbers<[1], [0], [0], [1], [0, 0, 1, 1], [], []>} : vector<48x32xf32>, vector<32x64xf32>, vector<48x64xf32> -> vector<48x64xf32>
    %233 = vector.broadcast %231 : vector<1x64xf32> to vector<48x64xf32>
    %234 = arith.addf %232, %233 : vector<48x64xf32>
    %cst_104 = arith.constant 5.000000e-01 : f32
    %235 = vector.broadcast %cst_104 : f32 to vector<48x64xf32>
    %236 = arith.mulf %235, %234 : vector<48x64xf32>
    %cst_105 = arith.constant 0.707106769 : f32
    %237 = vector.broadcast %cst_105 : f32 to vector<48x64xf32>
    %238 = arith.mulf %234, %237 : vector<48x64xf32>
    %239 = math.erf %238 : vector<48x64xf32>
    %cst_106 = arith.constant 1.000000e+00 : f32
    %240 = vector.broadcast %cst_106 : f32 to vector<48x64xf32>
    %241 = arith.addf %240, %239 : vector<48x64xf32>
    %242 = arith.mulf %236, %241 : vector<48x64xf32>
    %c0_107 = arith.constant 0 : index
    %c96 = arith.constant 96 : index
    %c0_108 = arith.constant 0 : index
    %243 = vector.load %arg3[%c0_107, %c96, %c0_108] : memref<2x168x96xf32, #tpu.memory_space<vmem>>, vector<1x64x32xf32>
    %244 = vector.shape_cast %243 : vector<1x64x32xf32> to vector<64x32xf32>
    %c0_109 = arith.constant 0 : index
    %c166 = arith.constant 166 : index
    %c0_110 = arith.constant 0 : index
    %245 = vector.load %arg3[%c0_109, %c166, %c0_110] : memref<2x168x96xf32, #tpu.memory_space<vmem>>, vector<1x1x32xf32>
    %246 = vector.shape_cast %245 : vector<1x1x32xf32> to vector<1x32xf32>
    %c0_111 = arith.constant 0 : index
    %c0_112 = arith.constant 0 : index
    %247 = vector.load %arg5[%c0_111, %c0_112] : memref<48x32xf32, #tpu.memory_space<vmem>>, vector<48x32xf32>
    %cst_113 = arith.constant dense<0.000000e+00> : vector<48x32xf32>
    %248 = tpu.matmul %242, %244, %cst_113 {dimension_numbers = #tpu.dot_dimension_numbers<[1], [0], [0], [1], [0, 0, 1, 1], [], []>} : vector<48x64xf32>, vector<64x32xf32>, vector<48x32xf32> -> vector<48x32xf32>
    %249 = arith.addf %247, %248 : vector<48x32xf32>
    %250 = vector.broadcast %246 : vector<1x32xf32> to vector<48x32xf32>
    %251 = arith.addf %249, %250 : vector<48x32xf32>
    %c0_114 = arith.constant 0 : index
    %c0_115 = arith.constant 0 : index
    %252 = vector.load %arg5[%c0_114, %c0_115] : memref<48x32xf32, #tpu.memory_space<vmem>>, vector<48x32xf32>
    tpu.vector_store %arg5[%c0_114, %c0_115], %251 {strides = array<i32>} : memref<48x32xf32, #tpu.memory_space<vmem>>, vector<48x32xf32>,
    %c1_116 = arith.constant 1 : index
    %c160_117 = arith.constant 160 : index
    %c0_118 = arith.constant 0 : index
    %253 = vector.load %arg3[%c1_116, %c160_117, %c0_118] : memref<2x168x96xf32, #tpu.memory_space<vmem>>, vector<1x1x32xf32>
    %254 = vector.shape_cast %253 : vector<1x1x32xf32> to vector<1x32xf32>
    %c1_119 = arith.constant 1 : index
    %c161_120 = arith.constant 161 : index
    %c0_121 = arith.constant 0 : index
    %255 = vector.load %arg3[%c1_119, %c161_120, %c0_121] : memref<2x168x96xf32, #tpu.memory_space<vmem>>, vector<1x1x32xf32>
    %256 = vector.shape_cast %255 : vector<1x1x32xf32> to vector<1x32xf32>
    %c0_122 = arith.constant 0 : index
    %c0_123 = arith.constant 0 : index
    %257 = vector.load %arg5[%c0_122, %c0_123] : memref<48x32xf32, #tpu.memory_space<vmem>>, vector<48x32xf32>
    %cst_124 = arith.constant dense<0.000000e+00> : vector<48xf32>
    %258 = vector.multi_reduction <add>, %257, %cst_124 [1] : vector<48x32xf32> to vector<48xf32>
    %259 = vector.shape_cast %258 : vector<48xf32> to vector<48x1xf32>
    %cst_125 = arith.constant 3.200000e+01 : f32
    %260 = vector.broadcast %cst_125 : f32 to vector<48x1xf32>
    %261 = arith.divf %259, %260 : vector<48x1xf32>
    %262 = vector.broadcast %261 : vector<48x1xf32> to vector<48x32xf32>
    %263 = arith.subf %257, %262 : vector<48x32xf32>
    %264 = arith.mulf %263, %263 : vector<48x32xf32>
    %cst_126 = arith.constant dense<0.000000e+00> : vector<48xf32>
    %265 = vector.multi_reduction <add>, %264, %cst_126 [1] : vector<48x32xf32> to vector<48xf32>
    %266 = vector.shape_cast %265 : vector<48xf32> to vector<48x1xf32>
    %cst_127 = arith.constant 3.200000e+01 : f32
    %267 = vector.broadcast %cst_127 : f32 to vector<48x1xf32>
    %268 = arith.divf %266, %267 : vector<48x1xf32>
    %cst_128 = arith.constant 9.99999974E-6 : f32
    %269 = vector.broadcast %cst_128 : f32 to vector<48x1xf32>
    %270 = arith.addf %268, %269 : vector<48x1xf32>
    %271 = math.rsqrt %270 : vector<48x1xf32>
    %272 = vector.broadcast %271 : vector<48x1xf32> to vector<48x32xf32>
    %273 = arith.mulf %263, %272 : vector<48x32xf32>
    %274 = vector.broadcast %254 : vector<1x32xf32> to vector<48x32xf32>
    %275 = arith.mulf %273, %274 : vector<48x32xf32>
    %276 = vector.broadcast %256 : vector<1x32xf32> to vector<48x32xf32>
    %277 = arith.addf %275, %276 : vector<48x32xf32>
    %c1_129 = arith.constant 1 : index
    %c0_130 = arith.constant 0 : index
    %c0_131 = arith.constant 0 : index
    %278 = vector.load %arg3[%c1_129, %c0_130, %c0_131] : memref<2x168x96xf32, #tpu.memory_space<vmem>>, vector<1x32x96xf32>
    %279 = vector.shape_cast %278 : vector<1x32x96xf32> to vector<32x96xf32>
    %cst_132 = arith.constant dense<0.000000e+00> : vector<48x96xf32>
    %280 = tpu.matmul %277, %279, %cst_132 {dimension_numbers = #tpu.dot_dimension_numbers<[1], [0], [0], [1], [0, 0, 1, 1], [], []>} : vector<48x32xf32>, vector<32x96xf32>, vector<48x96xf32> -> vector<48x96xf32>
    %281 = vector.extract_strided_slice %280 {offsets = [0, 0], sizes = [48, 8], strides = [1, 1]} : vector<48x96xf32> to vector<48x8xf32>
    %282 = vector.extract_strided_slice %280 {offsets = [0, 32], sizes = [48, 8], strides = [1, 1]} : vector<48x96xf32> to vector<48x8xf32>
    %283 = vector.extract_strided_slice %280 {offsets = [0, 64], sizes = [48, 8], strides = [1, 1]} : vector<48x96xf32> to vector<48x8xf32>
    %cst_133 = arith.constant dense<0.000000e+00> : vector<48x48xf32>
    %284 = tpu.matmul %281, %282, %cst_133 {dimension_numbers = #tpu.dot_dimension_numbers<[1], [1], [0], [0], [0, 0, 1, 0], [], []>} : vector<48x8xf32>, vector<48x8xf32>, vector<48x48xf32> -> vector<48x48xf32>
    %cst_134 = arith.constant -1.000000e+30 : f32
    %285 = vector.broadcast %cst_134 : f32 to vector<48x48xf32>
    %286 = arith.select %87, %284, %285 : vector<48x48xi1>, vector<48x48xf32>
    %cst_135 = arith.constant dense<0xFF800000> : vector<48xf32>
    %287 = vector.multi_reduction <maximumf>, %286, %cst_135 [1] : vector<48x48xf32> to vector<48xf32>
    %288 = vector.shape_cast %287 : vector<48xf32> to vector<48x1xf32>
    %289 = vector.broadcast %288 : vector<48x1xf32> to vector<48x48xf32>
    %290 = arith.subf %286, %289 : vector<48x48xf32>
    %291 = math.exp %290 : vector<48x48xf32>
    %cst_136 = arith.constant dense<0.000000e+00> : vector<48xf32>
    %292 = vector.multi_reduction <add>, %291, %cst_136 [1] : vector<48x48xf32> to vector<48xf32>
    %293 = vector.shape_cast %292 : vector<48xf32> to vector<48x1xf32>
    %cst_137 = arith.constant 1.000000e+00 : f32
    %294 = vector.broadcast %cst_137 : f32 to vector<48x1xf32>
    %295 = arith.divf %294, %293 : vector<48x1xf32>
    %296 = vector.broadcast %295 : vector<48x1xf32> to vector<48x48xf32>
    %297 = arith.mulf %291, %296 : vector<48x48xf32>
    %cst_138 = arith.constant dense<0.000000e+00> : vector<48x8xf32>
    %298 = tpu.matmul %297, %283, %cst_138 {dimension_numbers = #tpu.dot_dimension_numbers<[1], [0], [0], [1], [0, 0, 1, 1], [], []>} : vector<48x48xf32>, vector<48x8xf32>, vector<48x8xf32> -> vector<48x8xf32>
    %c0_139 = arith.constant 0 : index
    %c0_140 = arith.constant 0 : index
    %299 = vector.load %arg6[%c0_139, %c0_140] : memref<48x32xf32, #tpu.memory_space<vmem>>, vector<48x8xf32>
    tpu.vector_store %arg6[%c0_139, %c0_140], %298 {strides = array<i32>} : memref<48x32xf32, #tpu.memory_space<vmem>>, vector<48x8xf32>,
    %300 = vector.extract_strided_slice %280 {offsets = [0, 8], sizes = [48, 8], strides = [1, 1]} : vector<48x96xf32> to vector<48x8xf32>
    %301 = vector.extract_strided_slice %280 {offsets = [0, 40], sizes = [48, 8], strides = [1, 1]} : vector<48x96xf32> to vector<48x8xf32>
    %302 = vector.extract_strided_slice %280 {offsets = [0, 72], sizes = [48, 8], strides = [1, 1]} : vector<48x96xf32> to vector<48x8xf32>
    %cst_141 = arith.constant dense<0.000000e+00> : vector<48x48xf32>
    %303 = tpu.matmul %300, %301, %cst_141 {dimension_numbers = #tpu.dot_dimension_numbers<[1], [1], [0], [0], [0, 0, 1, 0], [], []>} : vector<48x8xf32>, vector<48x8xf32>, vector<48x48xf32> -> vector<48x48xf32>
    %cst_142 = arith.constant -1.000000e+30 : f32
    %304 = vector.broadcast %cst_142 : f32 to vector<48x48xf32>
    %305 = arith.select %87, %303, %304 : vector<48x48xi1>, vector<48x48xf32>
    %cst_143 = arith.constant dense<0xFF800000> : vector<48xf32>
    %306 = vector.multi_reduction <maximumf>, %305, %cst_143 [1] : vector<48x48xf32> to vector<48xf32>
    %307 = vector.shape_cast %306 : vector<48xf32> to vector<48x1xf32>
    %308 = vector.broadcast %307 : vector<48x1xf32> to vector<48x48xf32>
    %309 = arith.subf %305, %308 : vector<48x48xf32>
    %310 = math.exp %309 : vector<48x48xf32>
    %cst_144 = arith.constant dense<0.000000e+00> : vector<48xf32>
    %311 = vector.multi_reduction <add>, %310, %cst_144 [1] : vector<48x48xf32> to vector<48xf32>
    %312 = vector.shape_cast %311 : vector<48xf32> to vector<48x1xf32>
    %cst_145 = arith.constant 1.000000e+00 : f32
    %313 = vector.broadcast %cst_145 : f32 to vector<48x1xf32>
    %314 = arith.divf %313, %312 : vector<48x1xf32>
    %315 = vector.broadcast %314 : vector<48x1xf32> to vector<48x48xf32>
    %316 = arith.mulf %310, %315 : vector<48x48xf32>
    %cst_146 = arith.constant dense<0.000000e+00> : vector<48x8xf32>
    %317 = tpu.matmul %316, %302, %cst_146 {dimension_numbers = #tpu.dot_dimension_numbers<[1], [0], [0], [1], [0, 0, 1, 1], [], []>} : vector<48x48xf32>, vector<48x8xf32>, vector<48x8xf32> -> vector<48x8xf32>
    %c0_147 = arith.constant 0 : index
    %c8_148 = arith.constant 8 : index
    %318 = vector.load %arg6[%c0_147, %c8_148] : memref<48x32xf32, #tpu.memory_space<vmem>>, vector<48x8xf32>
    tpu.vector_store %arg6[%c0_147, %c8_148], %317 {strides = array<i32>} : memref<48x32xf32, #tpu.memory_space<vmem>>, vector<48x8xf32>,
    %319 = vector.extract_strided_slice %280 {offsets = [0, 16], sizes = [48, 8], strides = [1, 1]} : vector<48x96xf32> to vector<48x8xf32>
    %320 = vector.extract_strided_slice %280 {offsets = [0, 48], sizes = [48, 8], strides = [1, 1]} : vector<48x96xf32> to vector<48x8xf32>
    %321 = vector.extract_strided_slice %280 {offsets = [0, 80], sizes = [48, 8], strides = [1, 1]} : vector<48x96xf32> to vector<48x8xf32>
    %cst_149 = arith.constant dense<0.000000e+00> : vector<48x48xf32>
    %322 = tpu.matmul %319, %320, %cst_149 {dimension_numbers = #tpu.dot_dimension_numbers<[1], [1], [0], [0], [0, 0, 1, 0], [], []>} : vector<48x8xf32>, vector<48x8xf32>, vector<48x48xf32> -> vector<48x48xf32>
    %cst_150 = arith.constant -1.000000e+30 : f32
    %323 = vector.broadcast %cst_150 : f32 to vector<48x48xf32>
    %324 = arith.select %87, %322, %323 : vector<48x48xi1>, vector<48x48xf32>
    %cst_151 = arith.constant dense<0xFF800000> : vector<48xf32>
    %325 = vector.multi_reduction <maximumf>, %324, %cst_151 [1] : vector<48x48xf32> to vector<48xf32>
    %326 = vector.shape_cast %325 : vector<48xf32> to vector<48x1xf32>
    %327 = vector.broadcast %326 : vector<48x1xf32> to vector<48x48xf32>
    %328 = arith.subf %324, %327 : vector<48x48xf32>
    %329 = math.exp %328 : vector<48x48xf32>
    %cst_152 = arith.constant dense<0.000000e+00> : vector<48xf32>
    %330 = vector.multi_reduction <add>, %329, %cst_152 [1] : vector<48x48xf32> to vector<48xf32>
    %331 = vector.shape_cast %330 : vector<48xf32> to vector<48x1xf32>
    %cst_153 = arith.constant 1.000000e+00 : f32
    %332 = vector.broadcast %cst_153 : f32 to vector<48x1xf32>
    %333 = arith.divf %332, %331 : vector<48x1xf32>
    %334 = vector.broadcast %333 : vector<48x1xf32> to vector<48x48xf32>
    %335 = arith.mulf %329, %334 : vector<48x48xf32>
    %cst_154 = arith.constant dense<0.000000e+00> : vector<48x8xf32>
    %336 = tpu.matmul %335, %321, %cst_154 {dimension_numbers = #tpu.dot_dimension_numbers<[1], [0], [0], [1], [0, 0, 1, 1], [], []>} : vector<48x48xf32>, vector<48x8xf32>, vector<48x8xf32> -> vector<48x8xf32>
    %c0_155 = arith.constant 0 : index
    %c16_156 = arith.constant 16 : index
    %337 = vector.load %arg6[%c0_155, %c16_156] : memref<48x32xf32, #tpu.memory_space<vmem>>, vector<48x8xf32>
    tpu.vector_store %arg6[%c0_155, %c16_156], %336 {strides = array<i32>} : memref<48x32xf32, #tpu.memory_space<vmem>>, vector<48x8xf32>,
    %338 = vector.extract_strided_slice %280 {offsets = [0, 24], sizes = [48, 8], strides = [1, 1]} : vector<48x96xf32> to vector<48x8xf32>
    %339 = vector.extract_strided_slice %280 {offsets = [0, 56], sizes = [48, 8], strides = [1, 1]} : vector<48x96xf32> to vector<48x8xf32>
    %340 = vector.extract_strided_slice %280 {offsets = [0, 88], sizes = [48, 8], strides = [1, 1]} : vector<48x96xf32> to vector<48x8xf32>
    %cst_157 = arith.constant dense<0.000000e+00> : vector<48x48xf32>
    %341 = tpu.matmul %338, %339, %cst_157 {dimension_numbers = #tpu.dot_dimension_numbers<[1], [1], [0], [0], [0, 0, 1, 0], [], []>} : vector<48x8xf32>, vector<48x8xf32>, vector<48x48xf32> -> vector<48x48xf32>
    %cst_158 = arith.constant -1.000000e+30 : f32
    %342 = vector.broadcast %cst_158 : f32 to vector<48x48xf32>
    %343 = arith.select %87, %341, %342 : vector<48x48xi1>, vector<48x48xf32>
    %cst_159 = arith.constant dense<0xFF800000> : vector<48xf32>
    %344 = vector.multi_reduction <maximumf>, %343, %cst_159 [1] : vector<48x48xf32> to vector<48xf32>
    %345 = vector.shape_cast %344 : vector<48xf32> to vector<48x1xf32>
    %346 = vector.broadcast %345 : vector<48x1xf32> to vector<48x48xf32>
    %347 = arith.subf %343, %346 : vector<48x48xf32>
    %348 = math.exp %347 : vector<48x48xf32>
    %cst_160 = arith.constant dense<0.000000e+00> : vector<48xf32>
    %349 = vector.multi_reduction <add>, %348, %cst_160 [1] : vector<48x48xf32> to vector<48xf32>
    %350 = vector.shape_cast %349 : vector<48xf32> to vector<48x1xf32>
    %cst_161 = arith.constant 1.000000e+00 : f32
    %351 = vector.broadcast %cst_161 : f32 to vector<48x1xf32>
    %352 = arith.divf %351, %350 : vector<48x1xf32>
    %353 = vector.broadcast %352 : vector<48x1xf32> to vector<48x48xf32>
    %354 = arith.mulf %348, %353 : vector<48x48xf32>
    %cst_162 = arith.constant dense<0.000000e+00> : vector<48x8xf32>
    %355 = tpu.matmul %354, %340, %cst_162 {dimension_numbers = #tpu.dot_dimension_numbers<[1], [0], [0], [1], [0, 0, 1, 1], [], []>} : vector<48x48xf32>, vector<48x8xf32>, vector<48x8xf32> -> vector<48x8xf32>
    %c0_163 = arith.constant 0 : index
    %c24_164 = arith.constant 24 : index
    %356 = vector.load %arg6[%c0_163, %c24_164] : memref<48x32xf32, #tpu.memory_space<vmem>>, vector<48x8xf32>
    tpu.vector_store %arg6[%c0_163, %c24_164], %355 {strides = array<i32>} : memref<48x32xf32, #tpu.memory_space<vmem>>, vector<48x8xf32>,
    %c1_165 = arith.constant 1 : index
    %c32_166 = arith.constant 32 : index
    %c0_167 = arith.constant 0 : index
    %357 = vector.load %arg3[%c1_165, %c32_166, %c0_167] : memref<2x168x96xf32, #tpu.memory_space<vmem>>, vector<1x32x32xf32>
    %358 = vector.shape_cast %357 : vector<1x32x32xf32> to vector<32x32xf32>
    %c1_168 = arith.constant 1 : index
    %c162_169 = arith.constant 162 : index
    %c0_170 = arith.constant 0 : index
    %359 = vector.load %arg3[%c1_168, %c162_169, %c0_170] : memref<2x168x96xf32, #tpu.memory_space<vmem>>, vector<1x1x32xf32>
    %360 = vector.shape_cast %359 : vector<1x1x32xf32> to vector<1x32xf32>
    %c0_171 = arith.constant 0 : index
    %c0_172 = arith.constant 0 : index
    %361 = vector.load %arg5[%c0_171, %c0_172] : memref<48x32xf32, #tpu.memory_space<vmem>>, vector<48x32xf32>
    %c0_173 = arith.constant 0 : index
    %c0_174 = arith.constant 0 : index
    %362 = vector.load %arg6[%c0_173, %c0_174] : memref<48x32xf32, #tpu.memory_space<vmem>>, vector<48x32xf32>
    %cst_175 = arith.constant dense<0.000000e+00> : vector<48x32xf32>
    %363 = tpu.matmul %362, %358, %cst_175 {dimension_numbers = #tpu.dot_dimension_numbers<[1], [0], [0], [1], [0, 0, 1, 1], [], []>} : vector<48x32xf32>, vector<32x32xf32>, vector<48x32xf32> -> vector<48x32xf32>
    %364 = arith.addf %361, %363 : vector<48x32xf32>
    %365 = vector.broadcast %360 : vector<1x32xf32> to vector<48x32xf32>
    %366 = arith.addf %364, %365 : vector<48x32xf32>
    %c0_176 = arith.constant 0 : index
    %c0_177 = arith.constant 0 : index
    %367 = vector.load %arg5[%c0_176, %c0_177] : memref<48x32xf32, #tpu.memory_space<vmem>>, vector<48x32xf32>
    tpu.vector_store %arg5[%c0_176, %c0_177], %366 {strides = array<i32>} : memref<48x32xf32, #tpu.memory_space<vmem>>, vector<48x32xf32>,
    %c1_178 = arith.constant 1 : index
    %c163_179 = arith.constant 163 : index
    %c0_180 = arith.constant 0 : index
    %368 = vector.load %arg3[%c1_178, %c163_179, %c0_180] : memref<2x168x96xf32, #tpu.memory_space<vmem>>, vector<1x1x32xf32>
    %369 = vector.shape_cast %368 : vector<1x1x32xf32> to vector<1x32xf32>
    %c1_181 = arith.constant 1 : index
    %c164_182 = arith.constant 164 : index
    %c0_183 = arith.constant 0 : index
    %370 = vector.load %arg3[%c1_181, %c164_182, %c0_183] : memref<2x168x96xf32, #tpu.memory_space<vmem>>, vector<1x1x32xf32>
    %371 = vector.shape_cast %370 : vector<1x1x32xf32> to vector<1x32xf32>
    %c0_184 = arith.constant 0 : index
    %c0_185 = arith.constant 0 : index
    %372 = vector.load %arg5[%c0_184, %c0_185] : memref<48x32xf32, #tpu.memory_space<vmem>>, vector<48x32xf32>
    %cst_186 = arith.constant dense<0.000000e+00> : vector<48xf32>
    %373 = vector.multi_reduction <add>, %372, %cst_186 [1] : vector<48x32xf32> to vector<48xf32>
    %374 = vector.shape_cast %373 : vector<48xf32> to vector<48x1xf32>
    %cst_187 = arith.constant 3.200000e+01 : f32
    %375 = vector.broadcast %cst_187 : f32 to vector<48x1xf32>
    %376 = arith.divf %374, %375 : vector<48x1xf32>
    %377 = vector.broadcast %376 : vector<48x1xf32> to vector<48x32xf32>
    %378 = arith.subf %372, %377 : vector<48x32xf32>
    %379 = arith.mulf %378, %378 : vector<48x32xf32>
    %cst_188 = arith.constant dense<0.000000e+00> : vector<48xf32>
    %380 = vector.multi_reduction <add>, %379, %cst_188 [1] : vector<48x32xf32> to vector<48xf32>
    %381 = vector.shape_cast %380 : vector<48xf32> to vector<48x1xf32>
    %cst_189 = arith.constant 3.200000e+01 : f32
    %382 = vector.broadcast %cst_189 : f32 to vector<48x1xf32>
    %383 = arith.divf %381, %382 : vector<48x1xf32>
    %cst_190 = arith.constant 9.99999974E-6 : f32
    %384 = vector.broadcast %cst_190 : f32 to vector<48x1xf32>
    %385 = arith.addf %383, %384 : vector<48x1xf32>
    %386 = math.rsqrt %385 : vector<48x1xf32>
    %387 = vector.broadcast %386 : vector<48x1xf32> to vector<48x32xf32>
    %388 = arith.mulf %378, %387 : vector<48x32xf32>
    %389 = vector.broadcast %369 : vector<1x32xf32> to vector<48x32xf32>
    %390 = arith.mulf %388, %389 : vector<48x32xf32>
    %391 = vector.broadcast %371 : vector<1x32xf32> to vector<48x32xf32>
    %392 = arith.addf %390, %391 : vector<48x32xf32>
    %c1_191 = arith.constant 1 : index
    %c64_192 = arith.constant 64 : index
    %c0_193 = arith.constant 0 : index
    %393 = vector.load %arg3[%c1_191, %c64_192, %c0_193] : memref<2x168x96xf32, #tpu.memory_space<vmem>>, vector<1x32x64xf32>
    %394 = vector.shape_cast %393 : vector<1x32x64xf32> to vector<32x64xf32>
    %c1_194 = arith.constant 1 : index
    %c165_195 = arith.constant 165 : index
    %c0_196 = arith.constant 0 : index
    %395 = vector.load %arg3[%c1_194, %c165_195, %c0_196] : memref<2x168x96xf32, #tpu.memory_space<vmem>>, vector<1x1x64xf32>
    %396 = vector.shape_cast %395 : vector<1x1x64xf32> to vector<1x64xf32>
    %cst_197 = arith.constant dense<0.000000e+00> : vector<48x64xf32>
    %397 = tpu.matmul %392, %394, %cst_197 {dimension_numbers = #tpu.dot_dimension_numbers<[1], [0], [0], [1], [0, 0, 1, 1], [], []>} : vector<48x32xf32>, vector<32x64xf32>, vector<48x64xf32> -> vector<48x64xf32>
    %398 = vector.broadcast %396 : vector<1x64xf32> to vector<48x64xf32>
    %399 = arith.addf %397, %398 : vector<48x64xf32>
    %cst_198 = arith.constant 5.000000e-01 : f32
    %400 = vector.broadcast %cst_198 : f32 to vector<48x64xf32>
    %401 = arith.mulf %400, %399 : vector<48x64xf32>
    %cst_199 = arith.constant 0.707106769 : f32
    %402 = vector.broadcast %cst_199 : f32 to vector<48x64xf32>
    %403 = arith.mulf %399, %402 : vector<48x64xf32>
    %404 = math.erf %403 : vector<48x64xf32>
    %cst_200 = arith.constant 1.000000e+00 : f32
    %405 = vector.broadcast %cst_200 : f32 to vector<48x64xf32>
    %406 = arith.addf %405, %404 : vector<48x64xf32>
    %407 = arith.mulf %401, %406 : vector<48x64xf32>
    %c1_201 = arith.constant 1 : index
    %c96_202 = arith.constant 96 : index
    %c0_203 = arith.constant 0 : index
    %408 = vector.load %arg3[%c1_201, %c96_202, %c0_203] : memref<2x168x96xf32, #tpu.memory_space<vmem>>, vector<1x64x32xf32>
    %409 = vector.shape_cast %408 : vector<1x64x32xf32> to vector<64x32xf32>
    %c1_204 = arith.constant 1 : index
    %c166_205 = arith.constant 166 : index
    %c0_206 = arith.constant 0 : index
    %410 = vector.load %arg3[%c1_204, %c166_205, %c0_206] : memref<2x168x96xf32, #tpu.memory_space<vmem>>, vector<1x1x32xf32>
    %411 = vector.shape_cast %410 : vector<1x1x32xf32> to vector<1x32xf32>
    %c0_207 = arith.constant 0 : index
    %c0_208 = arith.constant 0 : index
    %412 = vector.load %arg5[%c0_207, %c0_208] : memref<48x32xf32, #tpu.memory_space<vmem>>, vector<48x32xf32>
    %cst_209 = arith.constant dense<0.000000e+00> : vector<48x32xf32>
    %413 = tpu.matmul %407, %409, %cst_209 {dimension_numbers = #tpu.dot_dimension_numbers<[1], [0], [0], [1], [0, 0, 1, 1], [], []>} : vector<48x64xf32>, vector<64x32xf32>, vector<48x32xf32> -> vector<48x32xf32>
    %414 = arith.addf %412, %413 : vector<48x32xf32>
    %415 = vector.broadcast %411 : vector<1x32xf32> to vector<48x32xf32>
    %416 = arith.addf %414, %415 : vector<48x32xf32>
    %c0_210 = arith.constant 0 : index
    %c0_211 = arith.constant 0 : index
    %417 = vector.load %arg5[%c0_210, %c0_211] : memref<48x32xf32, #tpu.memory_space<vmem>>, vector<48x32xf32>
    tpu.vector_store %arg5[%c0_210, %c0_211], %416 {strides = array<i32>} : memref<48x32xf32, #tpu.memory_space<vmem>>, vector<48x32xf32>,
    %c0_212 = arith.constant 0 : index
    %c0_213 = arith.constant 0 : index
    %418 = vector.load %arg5[%c0_212, %c0_213] : memref<48x32xf32, #tpu.memory_space<vmem>>, vector<1x32xf32>
    %c0_214 = arith.constant 0 : index
    %c0_215 = arith.constant 0 : index
    %419 = vector.load %arg7[%c0_214, %c0_215] : memref<2x32xf32, #tpu.memory_space<vmem>>, vector<1x32xf32>
    tpu.vector_store %arg7[%c0_214, %c0_215], %418 {strides = array<i32>} : memref<2x32xf32, #tpu.memory_space<vmem>>, vector<1x32xf32>,
    %c24_216 = arith.constant 24 : index
    %c0_217 = arith.constant 0 : index
    %420 = vector.load %arg5[%c24_216, %c0_217] : memref<48x32xf32, #tpu.memory_space<vmem>>, vector<1x32xf32>
    %c1_218 = arith.constant 1 : index
    %c0_219 = arith.constant 0 : index
    %421 = vector.load %arg7[%c1_218, %c0_219] : memref<2x32xf32, #tpu.memory_space<vmem>>, vector<1x32xf32>
    tpu.vector_store %arg7[%c1_218, %c0_219], %420 {strides = array<i32>} : memref<2x32xf32, #tpu.memory_space<vmem>>, vector<1x32xf32>,
    %c70 = arith.constant 70 : index
    %c0_220 = arith.constant 0 : index
    %422 = vector.load %arg2[%c70, %c0_220] : memref<128x64xf32, #tpu.memory_space<vmem>>, vector<1x32xf32>
    %c71 = arith.constant 71 : index
    %c0_221 = arith.constant 0 : index
    %423 = vector.load %arg2[%c71, %c0_221] : memref<128x64xf32, #tpu.memory_space<vmem>>, vector<1x32xf32>
    %c0_222 = arith.constant 0 : index
    %c0_223 = arith.constant 0 : index
    %424 = vector.load %arg7[%c0_222, %c0_223] : memref<2x32xf32, #tpu.memory_space<vmem>>, vector<2x32xf32>
    %cst_224 = arith.constant dense<0.000000e+00> : vector<2xf32>
    %425 = vector.multi_reduction <add>, %424, %cst_224 [1] : vector<2x32xf32> to vector<2xf32>
    %426 = vector.shape_cast %425 : vector<2xf32> to vector<2x1xf32>
    %cst_225 = arith.constant 3.200000e+01 : f32
    %427 = vector.broadcast %cst_225 : f32 to vector<2x1xf32>
    %428 = arith.divf %426, %427 : vector<2x1xf32>
    %429 = vector.broadcast %428 : vector<2x1xf32> to vector<2x32xf32>
    %430 = arith.subf %424, %429 : vector<2x32xf32>
    %431 = arith.mulf %430, %430 : vector<2x32xf32>
    %cst_226 = arith.constant dense<0.000000e+00> : vector<2xf32>
    %432 = vector.multi_reduction <add>, %431, %cst_226 [1] : vector<2x32xf32> to vector<2xf32>
    %433 = vector.shape_cast %432 : vector<2xf32> to vector<2x1xf32>
    %cst_227 = arith.constant 3.200000e+01 : f32
    %434 = vector.broadcast %cst_227 : f32 to vector<2x1xf32>
    %435 = arith.divf %433, %434 : vector<2x1xf32>
    %cst_228 = arith.constant 9.99999974E-6 : f32
    %436 = vector.broadcast %cst_228 : f32 to vector<2x1xf32>
    %437 = arith.addf %435, %436 : vector<2x1xf32>
    %438 = math.rsqrt %437 : vector<2x1xf32>
    %439 = vector.broadcast %438 : vector<2x1xf32> to vector<2x32xf32>
    %440 = arith.mulf %430, %439 : vector<2x32xf32>
    %441 = vector.broadcast %422 : vector<1x32xf32> to vector<2x32xf32>
    %442 = arith.mulf %440, %441 : vector<2x32xf32>
    %443 = vector.broadcast %423 : vector<1x32xf32> to vector<2x32xf32>
    %444 = arith.addf %442, %443 : vector<2x32xf32>
    %c88 = arith.constant 88 : index
    %c0_229 = arith.constant 0 : index
    %445 = vector.load %arg2[%c88, %c0_229] : memref<128x64xf32, #tpu.memory_space<vmem>>, vector<32x10xf32>
    %c120 = arith.constant 120 : index
    %c0_230 = arith.constant 0 : index
    %446 = vector.load %arg2[%c120, %c0_230] : memref<128x64xf32, #tpu.memory_space<vmem>>, vector<1x10xf32>
    %cst_231 = arith.constant dense<0.000000e+00> : vector<2x10xf32>
    %447 = tpu.matmul %444, %445, %cst_231 {dimension_numbers = #tpu.dot_dimension_numbers<[1], [0], [0], [1], [0, 0, 1, 1], [], []>} : vector<2x32xf32>, vector<32x10xf32>, vector<2x10xf32> -> vector<2x10xf32>
    %448 = vector.broadcast %446 : vector<1x10xf32> to vector<2x10xf32>
    %449 = arith.addf %447, %448 : vector<2x10xf32>
    %c0_232 = arith.constant 0 : index
    %c0_233 = arith.constant 0 : index
    %450 = vector.load %arg4[%c0_232, %c0_233] : memref<2x10xf32, #tpu.memory_space<vmem>>, vector<2x10xf32>
    tpu.vector_store %arg4[%c0_232, %c0_233], %449 {strides = array<i32>} : memref<2x10xf32, #tpu.memory_space<vmem>>, vector<2x10xf32>,
    return
  }
  func.func @transform_0(%arg0: i32) -> (i32, i32) {
    %c0_i32 = arith.constant 0 : i32
    %c0_i32_0 = arith.constant 0 : i32
    %c0_i32_1 = arith.constant 0 : i32
    return %c0_i32, %c0_i32_0 : i32, i32
  }
  func.func @transform_1(%arg0: i32) -> (i32, i32) {
    %c0_i32 = arith.constant 0 : i32
    %c0_i32_0 = arith.constant 0 : i32
    %c0_i32_1 = arith.constant 0 : i32
    return %c0_i32, %c0_i32_0 : i32, i32
  }
  func.func @transform_2(%arg0: i32) -> (i32, i32, i32) {
    %c0_i32 = arith.constant 0 : i32
    %c0_i32_0 = arith.constant 0 : i32
    %c0_i32_1 = arith.constant 0 : i32
    %c0_i32_2 = arith.constant 0 : i32
    return %c0_i32, %c0_i32_0, %c0_i32_1 : i32, i32, i32
  }
  func.func @transform_3(%arg0: i32) -> (i32, i32) {
    %c0_i32 = arith.constant 0 : i32
    %c0_i32_0 = arith.constant 0 : i32
    %c0_i32_1 = arith.constant 0 : i32
    return %c0_i32, %c0_i32_0 : i32, i32
  }
}

</mosaic_0001>

<llo_original>
// kernel: vit_forward.1
$region0: #{vit_forward.1}
  #allocation0 [shape = 'u32[]', space=smem, size = 0x4, offset = 0x4, fixed_abs, tag = 'smem constant byte address 0x4 - core index']
  #allocation1 [shape = 'u32[144,128]{1,0:T(1,128)}', space=vmem, size = 0x12000, scoped, tag = 'internal scratch']
  #allocation2 [shape = 'f32[48,32]{1,0:T(8,128)}', space=vmem, size = 0x6000, scoped, tag = 'scratch operand']
  #allocation3 [shape = 'f32[48,32]{1,0:T(8,128)}', space=vmem, size = 0x6000, scoped, tag = 'scratch operand']
  #allocation4 [shape = 'f32[2,32]{1,0:T(2,128)}', space=vmem, size = 0x400, scoped, tag = 'scratch operand']
  %s0 = inlined_call_operand.vmem [shape: f32[32,64], index: 0, kind: input, shape index: {}]
  %s1 = inlined_call_operand.vmem [shape: f32[128,64], index: 1, kind: input, shape index: {}]
  %s2 = inlined_call_operand.vmem [shape: f32[2,168,96], index: 2, kind: input, shape index: {}]
  %s3 = inlined_call_operand.hbm [shape: f32[2,10], index: 3, kind: output, shape index: {}]
  %s4 = sld [smem:[#allocation0]]
  $region22: #{vit_forward.1} parent=0
    _
  %s6 = ssub.s32 1, %s4
  %s7 = scalar_select 0, %s6, %s4
  $region1: #{vit_forward.1} parent=0
    #allocation5 [shape = 'u8[1024]{0}', space=vmem, size = 0x400, scoped, tag = 'output window, operand 0, single buffered']
    #allocation6 [shape = 's32[1]{0}', space=sflag, size = 0x4, scoped, tag = 'scoped memory for vit_forward.1']
    %8 = vsyncpa [#allocation6], 0
    // Predicated region
    $region2: #{vit_forward.1} parent=1 // pred_check
      _
    $region3: #{vit_forward.1} parent=1 // pred_check_branch
      %10 = sbr.rel (0) target = $region5
    $region4: #{vit_forward.1} parent=1 // pred_region
      _
    $region5: #{vit_forward.1} parent=1 // pred_fallthru
      _
    // Predicated region
    $region6: #{vit_forward.1} parent=1 // pred_check
      _
    $region7: #{vit_forward.1} parent=1 // pred_check_branch
      %12 = sbr.rel (0) target = $region9
    $region8: #{vit_forward.1} parent=1 // pred_region
      _
    $region9: #{vit_forward.1} parent=1 // pred_fallthru
      _
    // Predicated region
    $region10: #{vit_forward.1} parent=1 // pred_check
      _
    $region11: #{vit_forward.1} parent=1 // pred_check_branch
      %14 = sbr.rel (0) target = $region13
    $region12: #{vit_forward.1} parent=1 // pred_region
      _
    $region13: #{vit_forward.1} parent=1 // pred_fallthru
      _
    %v15 = vld [vmem:[%s1 + $0x40] sm:$0x1]
    %v16 = vld [vmem:[%s1 + $0x41] sm:$0x1]
    %v17 = vld [vmem:[%s0] sm:$0xff]
    %v18 = vld [vmem:[%s0 + $0x8] sm:$0xff]
    %v19 = vld [vmem:[%s0 + $0x10] sm:$0xff]
    %v20 = vld [vmem:[%s0 + $0x18] sm:$0xff]
    %vm21 = vcmask 523264
    %v22 = vsel %vm21, %v17, 0.0
    %23 = vadd.xlane.f32.xlu0 %v22
    %v24 = vpop.xlane.xlu0 %23
    %v25 = vsel %vm21, %v18, 0.0
    %26 = vadd.xlane.f32.xlu0 %v25
    %v27 = vpop.xlane.xlu0 %26
    %v28 = vsel %vm21, %v19, 0.0
    %29 = vadd.xlane.f32.xlu0 %v28
    %v30 = vpop.xlane.xlu0 %29
    %v31 = vsel %vm21, %v20, 0.0
    %32 = vadd.xlane.f32.xlu0 %v31
    %v33 = vpop.xlane.xlu0 %32
    %v34 = vrcp.pop 64.0
    %v35 = vmul.f32 %v24, %v34
    %v36 = vmul.f32 %v27, %v34
    %v37 = vmul.f32 %v30, %v34
    %v38 = vmul.f32 %v33, %v34
    %v39 = vsub.f32 %v17, %v35
    %v40 = vsub.f32 %v18, %v36
    %v41 = vsub.f32 %v19, %v37
    %v42 = vsub.f32 %v20, %v38
    %v43 = vmul.f32 %v39, %v39
    %v44 = vmul.f32 %v40, %v40
    %v45 = vmul.f32 %v41, %v41
    %v46 = vmul.f32 %v42, %v42
    %v47 = vsel %vm21, %v43, 0.0
    %48 = vadd.xlane.f32.xlu0 %v47
    %v49 = vpop.xlane.xlu0 %48
    %v50 = vsel %vm21, %v44, 0.0
    %51 = vadd.xlane.f32.xlu0 %v50
    %v52 = vpop.xlane.xlu0 %51
    %v53 = vsel %vm21, %v45, 0.0
    %54 = vadd.xlane.f32.xlu0 %v53
    %v55 = vpop.xlane.xlu0 %54
    %v56 = vsel %vm21, %v46, 0.0
    %57 = vadd.xlane.f32.xlu0 %v56
    %v58 = vpop.xlane.xlu0 %57
    %v59 = vmul.f32 %v49, %v34
    %v60 = vmul.f32 %v52, %v34
    %v61 = vmul.f32 %v55, %v34
    %v62 = vmul.f32 %v58, %v34
    %v63 = vadd.f32 %v59, 1e-05
    %v64 = vadd.f32 %v60, 1e-05
    %v65 = vadd.f32 %v61, 1e-05
    %v66 = vadd.f32 %v62, 1e-05
    %v67 = vrsqrt.pop %v63
    %v68 = vrsqrt.pop %v64
    %v69 = vrsqrt.pop %v65
    %v70 = vrsqrt.pop %v66
    %v71 = vmul.f32 %v39, %v67
    %v72 = vmul.f32 %v40, %v68
    %v73 = vmul.f32 %v41, %v69
    %v74 = vmul.f32 %v42, %v70
    %v75 = vlaneseq
    %v76 = vshrl.u32 %v75, 7
    %v77 = vsub.s32 0, %v76
    %v78 = vrot.slane %v15, %v77
    %v79 = vmul.f32 %v71, %v78
    %v80 = vmul.f32 %v72, %v78
    %v81 = vmul.f32 %v73, %v78
    %v82 = vmul.f32 %v74, %v78
    %v83 = vlaneseq
    %v84 = vshrl.u32 %v83, 7
    %v85 = vsub.s32 0, %v84
    %v86 = vrot.slane %v16, %v85
    %v87 = vadd.f32 %v79, %v86
    %v88 = vadd.f32 %v80, %v86
    %v89 = vadd.f32 %v81, %v86
    %v90 = vadd.f32 %v82, %v86
    %v91 = vld [vmem:[%s1] sm:$0xff]
    %v92 = vld [vmem:[%s1 + $0x8] sm:$0xff]
    %v93 = vld [vmem:[%s1 + $0x10] sm:$0xff]
    %v94 = vld [vmem:[%s1 + $0x18] sm:$0xff]
    %v95 = vld [vmem:[%s1 + $0x20] sm:$0xff]
    %v96 = vld [vmem:[%s1 + $0x28] sm:$0xff]
    %v97 = vld [vmem:[%s1 + $0x30] sm:$0xff]
    %v98 = vld [vmem:[%s1 + $0x38] sm:$0xff]
    %v99 = vld [vmem:[%s1 + $0x42] sm:$0x1]
    %v100 = vlaneseq
    %v101 = vshrl.u32 %v100, 7
    %v102 = vsub.s32 0, %v101
    %v103 = vrot.slane %v99, %v102
    %v105 = vsel %vm21, %v87, 0
    %v108 = vsel %vm21, %v88, 0
    %v111 = vsel %vm21, %v89, 0
    %v114 = vsel %vm21, %v90, 0
    %116 = vmatprep.subr.mxu0 0.0
    %117 = vmatpush1.msra.mxu0 %v91
    %118 = vmatprep.subr.mxu0 0.0
    %119 = vmatpush1.msra.mxu0 %v92
    %120 = vmatprep.subr.mxu0 0.0
    %121 = vmatpush1.msra.mxu0 %v93
    %122 = vmatprep.subr.mxu0 0.0
    %123 = vmatpush1.msra.mxu0 %v94
    %124 = vmatprep.subr.mxu0 0.0
    %125 = vmatpush1.msra.mxu0 %v95
    %126 = vmatprep.subr.mxu0 0.0
    %127 = vmatpush1.msra.mxu0 %v96
    %128 = vmatprep.subr.mxu0 0.0
    %129 = vmatpush1.msra.mxu0 %v97
    %130 = vmatprep.subr.mxu0 0.0
    %131 = vmatpush1.msra.mxu0 %v98
    %132 = vmatprep.subr.mxu0 0.0
    %133 = vmatpush1.msra.mxu0 0.0
    %134 = vmatprep.subr.mxu0 0.0
    %135 = vmatpush1.msra.mxu0 0.0
    %136 = vmatprep.subr.mxu0 0.0
    %137 = vmatpush1.msra.mxu0 0.0
    %138 = vmatprep.subr.mxu0 0.0
    %139 = vmatpush1.msra.mxu0 0.0
    %140 = vmatprep.subr.mxu0 0.0
    %141 = vmatpush1.msra.mxu0 0.0
    %142 = vmatprep.subr.mxu0 0.0
    %143 = vmatpush1.msra.mxu0 0.0
    %144 = vmatprep.subr.mxu0 0.0
    %145 = vmatpush1.msra.mxu0 0.0
    %146 = vmatprep.subr.mxu0 0.0
    %147 = vmatpush1.msra.mxu0 0.0
    %148 = vmatprep.subr.mxu0 0.0
    %149 = vmatpush1.msra.mxu0 0.0
    %150 = vmatprep.subr.mxu0 0.0
    %151 = vmatpush1.msra.mxu0 0.0
    %152 = vmatprep.subr.mxu0 0.0
    %153 = vmatpush1.msra.mxu0 0.0
    %154 = vmatprep.subr.mxu0 0.0
    %155 = vmatpush1.msra.mxu0 0.0
    %156 = vmatprep.subr.mxu0 0.0
    %157 = vmatpush1.msra.mxu0 0.0
    %158 = vmatprep.subr.mxu0 0.0
    %159 = vmatpush1.msra.mxu0 0.0
    %160 = vmatprep.subr.mxu0 0.0
    %161 = vmatpush1.msra.mxu0 0.0
    %162 = vmatprep.subr.mxu0 0.0
    %163 = vmatpush1.msra.mxu0 0.0
    %164 = vmatprep.subr.mxu0 0.0
    %165 = vmatpush1.msra.mxu0 0.0
    %166 = vmatprep.subr.mxu0 0.0
    %167 = vmatpush1.msra.mxu0 0.0
    %168 = vmatprep.subr.mxu0 0.0
    %169 = vmatpush1.msra.mxu0 0.0
    %170 = vmatprep.subr.mxu0 0.0
    %171 = vmatpush1.msra.mxu0 0.0
    %172 = vmatprep.subr.mxu0 0.0
    %173 = vmatpush1.msra.mxu0 0.0
    %174 = vmatprep.subr.mxu0 0.0
    %175 = vmatpush1.msra.mxu0 0.0
    %176 = vmatprep.subr.mxu0 0.0
    %177 = vmatpush1.msra.mxu0 0.0
    %178 = vmatprep.subr.mxu0 0.0
    %179 = vmatpush1.msra.mxu0 0.0
    %180 = vmatprep.mubr.f32.mxu0 0.0
    %181 = vmatmul.mubr.f32.gmra.mrb[0].mxu0 %v105
    %v182 = vpop.f32.mrb[0].mxu0
    %v183 = vadd.f32 %v103, %v182
    %v184 = vpop.f32.mrb[0].mxu0
    %185 = vmatprep.mubr.f32.mxu0 0.0
    %186 = vmatmul.mubr.f32.gmra.mrb[0].mxu0 %v108
    %v187 = vpop.f32.mrb[0].mxu0
    %v188 = vadd.f32 %v103, %v187
    %v189 = vpop.f32.mrb[0].mxu0
    %190 = vmatprep.mubr.f32.mxu0 0.0
    %191 = vmatmul.mubr.f32.gmra.mrb[0].mxu0 %v111
    %v192 = vpop.f32.mrb[0].mxu0
    %v193 = vadd.f32 %v103, %v192
    %v194 = vpop.f32.mrb[0].mxu0
    %195 = vmatprep.mubr.f32.mxu0 0.0
    %196 = vmatmul.mubr.f32.gmra.mrb[0].mxu0 %v114
    %v197 = vpop.f32.mrb[0].mxu0
    %v198 = vadd.f32 %v103, %v197
    %v199 = vpop.f32.mrb[0].mxu0
    %200 = vdwg.mxu0
    %v201 = vld [vmem:[%s1 + $0x43] sm:$0x1]
    %v202 = vld [vmem:[%s1 + $0x44] sm:$0x1]
    %vm203 = vcmask 261120
    %v204 = vsel %vm203, %v183, 0.0
    %205 = vadd.xlane.f32.xlu0 %v204
    %v206 = vpop.xlane.xlu0 %205
    %v207 = vsel %vm203, %v188, 0.0
    %208 = vadd.xlane.f32.xlu0 %v207
    %v209 = vpop.xlane.xlu0 %208
    %v210 = vsel %vm203, %v193, 0.0
    %211 = vadd.xlane.f32.xlu0 %v210
    %v212 = vpop.xlane.xlu0 %211
    %v213 = vsel %vm203, %v198, 0.0
    %214 = vadd.xlane.f32.xlu0 %v213
    %v215 = vpop.xlane.xlu0 %214
    %v216 = vrcp.pop 32.0
    %v217 = vmul.f32 %v206, %v216
    %v218 = vmul.f32 %v209, %v216
    %v219 = vmul.f32 %v212, %v216
    %v220 = vmul.f32 %v215, %v216
    %v221 = vsub.f32 %v183, %v217
    %v222 = vsub.f32 %v188, %v218
    %v223 = vsub.f32 %v193, %v219
    %v224 = vsub.f32 %v198, %v220
    %v225 = vmul.f32 %v221, %v221
    %v226 = vmul.f32 %v222, %v222
    %v227 = vmul.f32 %v223, %v223
    %v228 = vmul.f32 %v224, %v224
    %v229 = vsel %vm203, %v225, 0.0
    %230 = vadd.xlane.f32.xlu0 %v229
    %v231 = vpop.xlane.xlu0 %230
    %v232 = vsel %vm203, %v226, 0.0
    %233 = vadd.xlane.f32.xlu0 %v232
    %v234 = vpop.xlane.xlu0 %233
    %v235 = vsel %vm203, %v227, 0.0
    %236 = vadd.xlane.f32.xlu0 %v235
    %v237 = vpop.xlane.xlu0 %236
    %v238 = vsel %vm203, %v228, 0.0
    %239 = vadd.xlane.f32.xlu0 %v238
    %v240 = vpop.xlane.xlu0 %239
    %v241 = vmul.f32 %v231, %v216
    %v242 = vmul.f32 %v234, %v216
    %v243 = vmul.f32 %v237, %v216
    %v244 = vmul.f32 %v240, %v216
    %v245 = vadd.f32 %v241, 1e-05
    %v246 = vadd.f32 %v242, 1e-05
    %v247 = vadd.f32 %v243, 1e-05
    %v248 = vadd.f32 %v244, 1e-05
    %v249 = vrsqrt.pop %v245
    %v250 = vrsqrt.pop %v246
    %v251 = vrsqrt.pop %v247
    %v252 = vrsqrt.pop %v248
    %v253 = vmul.f32 %v221, %v249
    %v254 = vmul.f32 %v222, %v250
    %v255 = vmul.f32 %v223, %v251
    %v256 = vmul.f32 %v224, %v252
    %v257 = vlaneseq
    %v258 = vshrl.u32 %v257, 7
    %v259 = vsub.s32 0, %v258
    %v260 = vrot.slane %v201, %v259
    %v261 = vmul.f32 %v253, %v260
    %v262 = vmul.f32 %v254, %v260
    %v263 = vmul.f32 %v255, %v260
    %v264 = vmul.f32 %v256, %v260
    %v265 = vlaneseq
    %v266 = vshrl.u32 %v265, 7
    %v267 = vsub.s32 0, %v266
    %v268 = vrot.slane %v202, %v267
    %v269 = vadd.f32 %v261, %v268
    %v270 = vadd.f32 %v262, %v268
    %v271 = vadd.f32 %v263, %v268
    %v272 = vadd.f32 %v264, %v268
    %v273 = vld [vmem:[%s1 + $0x45] sm:$0x1]
    %v274 = vld [vmem:[%s1 + $0x48] sm:$0xff]
    %v275 = vld [vmem:[%s1 + $0x50] sm:$0xff]
    %vm276 = vcmask 253952
    %277 = vst.msk [vmem:[#allocation2] sm:$0x1] %vm276, %v273
    %v278 = vadd.f32 %v269, %v274
    %v279 = vadd.f32 %v270, %v275
    %280 = vst.msk [vmem:[#allocation2 + $0x1] sm:$0xff] %vm203, %v278
    %281 = vst.msk [vmem:[#allocation2 + $0x9] sm:$0xff] %vm203, %v279
    %vm282 = vcmask 260096
    %283 = vst.msk [vmem:[#allocation2 + $0x11] sm:$0x7f] %vm282, 0.0
    %284 = vst.msk [vmem:[#allocation2 + $0x18] sm:$0x1] %vm276, %v273
    %v285 = vadd.f32 %v271, %v274
    %v286 = vadd.f32 %v272, %v275
    %287 = vst.msk [vmem:[#allocation2 + $0x19] sm:$0xff] %vm203, %v285
    %288 = vst.msk [vmem:[#allocation2 + $0x21] sm:$0xff] %vm203, %v286
    %289 = vst.msk [vmem:[#allocation2 + $0x29] sm:$0x7f] %vm282, 0.0
    %v290 = vlaneseq
    %v291 = vshrl.u32 %v290, 7
    %v292 = vadd.s32 %v291, 8
    %v293 = vadd.s32 %v291, 16
    %v294 = vadd.s32 %v291, 24
    %v295 = vadd.s32 %v291, 32
    %v296 = vadd.s32 %v291, 40
    %v297 = vlaneseq
    %v298 = vand.u32 %v297, 127
    %vm299 = vcmp.ge.s32.totalorder %v291, 0
    %vm300 = vcmp.ge.s32.totalorder %v292, 0
    %vm301 = vcmp.ge.s32.totalorder %v293, 0
    %vm302 = vcmp.ge.s32.totalorder %v294, 0
    %vm303 = vcmp.ge.s32.totalorder %v295, 0
    %vm304 = vcmp.ge.s32.totalorder %v296, 0
    %vm305 = vcmp.lt.s32.totalorder %v291, 24
    %vm306 = vcmp.lt.s32.totalorder %v292, 24
    %vm307 = vcmp.lt.s32.totalorder %v293, 24
    %vm308 = vcmp.lt.s32.totalorder %v294, 24
    %vm309 = vcmp.lt.s32.totalorder %v295, 24
    %vm310 = vcmp.lt.s32.totalorder %v296, 24
    %vm311 = vmand %vm299, %vm305
    %vm312 = vmand %vm300, %vm306
    %vm313 = vmand %vm301, %vm307
    %vm314 = vmand %vm302, %vm308
    %vm315 = vmand %vm303, %vm309
    %vm316 = vmand %vm304, %vm310
    %vm317 = vcmp.ge.s32.totalorder %v298, 0
    %vm318 = vmand %vm311, %vm317
    %vm319 = vmand %vm312, %vm317
    %vm320 = vmand %vm313, %vm317
    %vm321 = vmand %vm314, %vm317
    %vm322 = vmand %vm315, %vm317
    %vm323 = vmand %vm316, %vm317
    %vm324 = vcmp.lt.s32.totalorder %v298, 17
    %vm325 = vmand %vm318, %vm324
    %vm326 = vmand %vm319, %vm324
    %vm327 = vmand %vm320, %vm324
    %vm328 = vmand %vm321, %vm324
    %vm329 = vmand %vm322, %vm324
    %vm330 = vmand %vm323, %vm324
    %vm331 = vcmp.ge.s32.totalorder %v291, 24
    %vm332 = vcmp.ge.s32.totalorder %v292, 24
    %vm333 = vcmp.ge.s32.totalorder %v293, 24
    %vm334 = vcmp.ge.s32.totalorder %v294, 24
    %vm335 = vcmp.ge.s32.totalorder %v295, 24
    %vm336 = vcmp.ge.s32.totalorder %v296, 24
    %vm337 = vcmp.lt.s32.totalorder %v291, 48
    %vm338 = vcmp.lt.s32.totalorder %v292, 48
    %vm339 = vcmp.lt.s32.totalorder %v293, 48
    %vm340 = vcmp.lt.s32.totalorder %v294, 48
    %vm341 = vcmp.lt.s32.totalorder %v295, 48
    %vm342 = vcmp.lt.s32.totalorder %v296, 48
    %vm343 = vmand %vm331, %vm337
    %vm344 = vmand %vm332, %vm338
    %vm345 = vmand %vm333, %vm339
    %vm346 = vmand %vm334, %vm340
    %vm347 = vmand %vm335, %vm341
    %vm348 = vmand %vm336, %vm342
    %vm349 = vcmp.ge.s32.totalorder %v298, 24
    %vm350 = vmand %vm343, %vm349
    %vm351 = vmand %vm344, %vm349
    %vm352 = vmand %vm345, %vm349
    %vm353 = vmand %vm346, %vm349
    %vm354 = vmand %vm347, %vm349
    %vm355 = vmand %vm348, %vm349
    %vm356 = vcmp.lt.s32.totalorder %v298, 41
    %vm357 = vmand %vm350, %vm356
    %vm358 = vmand %vm351, %vm356
    %vm359 = vmand %vm352, %vm356
    %vm360 = vmand %vm353, %vm356
    %vm361 = vmand %vm354, %vm356
    %vm362 = vmand %vm355, %vm356
    %vm363 = vmor %vm325, %vm357
    %vm364 = vmor %vm326, %vm358
    %vm365 = vmor %vm327, %vm359
    %vm366 = vmor %vm328, %vm360
    %vm367 = vmor %vm329, %vm361
    %vm368 = vmor %vm330, %vm362
    %v369 = vld [vmem:[%s2 + $0xa0] sm:$0x1]
    %v370 = vld [vmem:[%s2 + $0xa1] sm:$0x1]
    %v371 = vld [vmem:[#allocation2] sm:$0xff]
    %v372 = vld [vmem:[#allocation2 + $0x8] sm:$0xff]
    %v373 = vld [vmem:[#allocation2 + $0x10] sm:$0xff]
    %v374 = vld [vmem:[#allocation2 + $0x18] sm:$0xff]
    %v375 = vld [vmem:[#allocation2 + $0x20] sm:$0xff]
    %v376 = vld [vmem:[#allocation2 + $0x28] sm:$0xff]
    %v377 = vsel %vm203, %v371, 0.0
    %378 = vadd.xlane.f32.xlu0 %v377
    %v379 = vpop.xlane.xlu0 %378
    %v380 = vsel %vm203, %v372, 0.0
    %381 = vadd.xlane.f32.xlu0 %v380
    %v382 = vpop.xlane.xlu0 %381
    %v383 = vsel %vm203, %v373, 0.0
    %384 = vadd.xlane.f32.xlu0 %v383
    %v385 = vpop.xlane.xlu0 %384
    %v386 = vsel %vm203, %v374, 0.0
    %387 = vadd.xlane.f32.xlu0 %v386
    %v388 = vpop.xlane.xlu0 %387
    %v389 = vsel %vm203, %v375, 0.0
    %390 = vadd.xlane.f32.xlu0 %v389
    %v391 = vpop.xlane.xlu0 %390
    %v392 = vsel %vm203, %v376, 0.0
    %393 = vadd.xlane.f32.xlu0 %v392
    %v394 = vpop.xlane.xlu0 %393
    %v395 = vmul.f32 %v379, %v216
    %v396 = vmul.f32 %v382, %v216
    %v397 = vmul.f32 %v385, %v216
    %v398 = vmul.f32 %v388, %v216
    %v399 = vmul.f32 %v391, %v216
    %v400 = vmul.f32 %v394, %v216
    %v401 = vsub.f32 %v371, %v395
    %v402 = vsub.f32 %v372, %v396
    %v403 = vsub.f32 %v373, %v397
    %v404 = vsub.f32 %v374, %v398
    %v405 = vsub.f32 %v375, %v399
    %v406 = vsub.f32 %v376, %v400
    %v407 = vmul.f32 %v401, %v401
    %v408 = vmul.f32 %v402, %v402
    %v409 = vmul.f32 %v403, %v403
    %v410 = vmul.f32 %v404, %v404
    %v411 = vmul.f32 %v405, %v405
    %v412 = vmul.f32 %v406, %v406
    %v413 = vsel %vm203, %v407, 0.0
    %414 = vadd.xlane.f32.xlu0 %v413
    %v415 = vpop.xlane.xlu0 %414
    %v416 = vsel %vm203, %v408, 0.0
    %417 = vadd.xlane.f32.xlu0 %v416
    %v418 = vpop.xlane.xlu0 %417
    %v419 = vsel %vm203, %v409, 0.0
    %420 = vadd.xlane.f32.xlu0 %v419
    %v421 = vpop.xlane.xlu0 %420
    %v422 = vsel %vm203, %v410, 0.0
    %423 = vadd.xlane.f32.xlu0 %v422
    %v424 = vpop.xlane.xlu0 %423
    %v425 = vsel %vm203, %v411, 0.0
    %426 = vadd.xlane.f32.xlu0 %v425
    %v427 = vpop.xlane.xlu0 %426
    %v428 = vsel %vm203, %v412, 0.0
    %429 = vadd.xlane.f32.xlu0 %v428
    %v430 = vpop.xlane.xlu0 %429
    %v431 = vmul.f32 %v415, %v216
    %v432 = vmul.f32 %v418, %v216
    %v433 = vmul.f32 %v421, %v216
    %v434 = vmul.f32 %v424, %v216
    %v435 = vmul.f32 %v427, %v216
    %v436 = vmul.f32 %v430, %v216
    %v437 = vadd.f32 %v431, 1e-05
    %v438 = vadd.f32 %v432, 1e-05
    %v439 = vadd.f32 %v433, 1e-05
    %v440 = vadd.f32 %v434, 1e-05
    %v441 = vadd.f32 %v435, 1e-05
    %v442 = vadd.f32 %v436, 1e-05
    %v443 = vrsqrt.pop %v437
    %v444 = vrsqrt.pop %v438
    %v445 = vrsqrt.pop %v439
    %v446 = vrsqrt.pop %v440
    %v447 = vrsqrt.pop %v441
    %v448 = vrsqrt.pop %v442
    %v449 = vmul.f32 %v401, %v443
    %v450 = vmul.f32 %v402, %v444
    %v451 = vmul.f32 %v403, %v445
    %v452 = vmul.f32 %v404, %v446
    %v453 = vmul.f32 %v405, %v447
    %v454 = vmul.f32 %v406, %v448
    %v455 = vlaneseq
    %v456 = vshrl.u32 %v455, 7
    %v457 = vsub.s32 0, %v456
    %v458 = vrot.slane %v369, %v457
    %v459 = vmul.f32 %v449, %v458
    %v460 = vmul.f32 %v450, %v458
    %v461 = vmul.f32 %v451, %v458
    %v462 = vmul.f32 %v452, %v458
    %v463 = vmul.f32 %v453, %v458
    %v464 = vmul.f32 %v454, %v458
    %v465 = vlaneseq
    %v466 = vshrl.u32 %v465, 7
    %v467 = vsub.s32 0, %v466
    %v468 = vrot.slane %v370, %v467
    %v469 = vadd.f32 %v459, %v468
    %v470 = vadd.f32 %v460, %v468
    %v471 = vadd.f32 %v461, %v468
    %v472 = vadd.f32 %v462, %v468
    %v473 = vadd.f32 %v463, %v468
    %v474 = vadd.f32 %v464, %v468
    %v475 = vld [vmem:[%s2] sm:$0xff]
    %v476 = vld [vmem:[%s2 + $0x8] sm:$0xff]
    %v477 = vld [vmem:[%s2 + $0x10] sm:$0xff]
    %v478 = vld [vmem:[%s2 + $0x18] sm:$0xff]
    %v480 = vsel %vm203, %v469, 0
    %v483 = vsel %vm203, %v470, 0
    %v486 = vsel %vm203, %v471, 0
    %v489 = vsel %vm203, %v472, 0
    %v492 = vsel %vm203, %v473, 0
    %v495 = vsel %vm203, %v474, 0
    %497 = vmatprep.subr.mxu0 0.0
    %498 = vmatpush1.msra.mxu0 %v475
    %499 = vmatprep.subr.mxu0 0.0
    %500 = vmatpush1.msra.mxu0 %v476
    %501 = vmatprep.subr.mxu0 0.0
    %502 = vmatpush1.msra.mxu0 %v477
    %503 = vmatprep.subr.mxu0 0.0
    %504 = vmatpush1.msra.mxu0 %v478
    %505 = vmatprep.subr.mxu0 0.0
    %506 = vmatpush1.msra.mxu0 0.0
    %507 = vmatprep.subr.mxu0 0.0
    %508 = vmatpush1.msra.mxu0 0.0
    %509 = vmatprep.subr.mxu0 0.0
    %510 = vmatpush1.msra.mxu0 0.0
    %511 = vmatprep.subr.mxu0 0.0
    %512 = vmatpush1.msra.mxu0 0.0
    %513 = vmatprep.subr.mxu0 0.0
    %514 = vmatpush1.msra.mxu0 0.0
    %515 = vmatprep.subr.mxu0 0.0
    %516 = vmatpush1.msra.mxu0 0.0
    %517 = vmatprep.subr.mxu0 0.0
    %518 = vmatpush1.msra.mxu0 0.0
    %519 = vmatprep.subr.mxu0 0.0
    %520 = vmatpush1.msra.mxu0 0.0
    %521 = vmatprep.subr.mxu0 0.0
    %522 = vmatpush1.msra.mxu0 0.0
    %523 = vmatprep.subr.mxu0 0.0
    %524 = vmatpush1.msra.mxu0 0.0
    %525 = vmatprep.subr.mxu0 0.0
    %526 = vmatpush1.msra.mxu0 0.0
    %527 = vmatprep.subr.mxu0 0.0
    %528 = vmatpush1.msra.mxu0 0.0
    %529 = vmatprep.subr.mxu0 0.0
    %530 = vmatpush1.msra.mxu0 0.0
    %531 = vmatprep.subr.mxu0 0.0
    %532 = vmatpush1.msra.mxu0 0.0
    %533 = vmatprep.subr.mxu0 0.0
    %534 = vmatpush1.msra.mxu0 0.0
    %535 = vmatprep.subr.mxu0 0.0
    %536 = vmatpush1.msra.mxu0 0.0
    %537 = vmatprep.subr.mxu0 0.0
    %538 = vmatpush1.msra.mxu0 0.0
    %539 = vmatprep.subr.mxu0 0.0
    %540 = vmatpush1.msra.mxu0 0.0
    %541 = vmatprep.subr.mxu0 0.0
    %542 = vmatpush1.msra.mxu0 0.0
    %543 = vmatprep.subr.mxu0 0.0
    %544 = vmatpush1.msra.mxu0 0.0
    %545 = vmatprep.subr.mxu0 0.0
    %546 = vmatpush1.msra.mxu0 0.0
    %547 = vmatprep.subr.mxu0 0.0
    %548 = vmatpush1.msra.mxu0 0.0
    %549 = vmatprep.subr.mxu0 0.0
    %550 = vmatpush1.msra.mxu0 0.0
    %551 = vmatprep.subr.mxu0 0.0
    %552 = vmatpush1.msra.mxu0 0.0
    %553 = vmatprep.subr.mxu0 0.0
    %554 = vmatpush1.msra.mxu0 0.0
    %555 = vmatprep.subr.mxu0 0.0
    %556 = vmatpush1.msra.mxu0 0.0
    %557 = vmatprep.subr.mxu0 0.0
    %558 = vmatpush1.msra.mxu0 0.0
    %559 = vmatprep.subr.mxu0 0.0
    %560 = vmatpush1.msra.mxu0 0.0
    %561 = vmatprep.mubr.f32.mxu0 0.0
    %562 = vmatmul.mubr.f32.gmra.mrb[0].mxu0 %v480
    %v563 = vpop.f32.mrb[0].mxu0
    %v564 = vadd.f32 0.0, %v563
    %v565 = vpop.f32.mrb[0].mxu0
    %566 = vmatprep.mubr.f32.mxu0 0.0
    %567 = vmatmul.mubr.f32.gmra.mrb[0].mxu0 %v483
    %v568 = vpop.f32.mrb[0].mxu0
    %v569 = vadd.f32 0.0, %v568
    %v570 = vpop.f32.mrb[0].mxu0
    %571 = vmatprep.mubr.f32.mxu0 0.0
    %572 = vmatmul.mubr.f32.gmra.mrb[0].mxu0 %v486
    %v573 = vpop.f32.mrb[0].mxu0
    %v574 = vadd.f32 0.0, %v573
    %v575 = vpop.f32.mrb[0].mxu0
    %576 = vmatprep.mubr.f32.mxu0 0.0
    %577 = vmatmul.mubr.f32.gmra.mrb[0].mxu0 %v489
    %v578 = vpop.f32.mrb[0].mxu0
    %v579 = vadd.f32 0.0, %v578
    %v580 = vpop.f32.mrb[0].mxu0
    %581 = vmatprep.mubr.f32.mxu0 0.0
    %582 = vmatmul.mubr.f32.gmra.mrb[0].mxu0 %v492
    %v583 = vpop.f32.mrb[0].mxu0
    %v584 = vadd.f32 0.0, %v583
    %v585 = vpop.f32.mrb[0].mxu0
    %586 = vmatprep.mubr.f32.mxu0 0.0
    %587 = vmatmul.mubr.f32.gmra.mrb[0].mxu0 %v495
    %v588 = vpop.f32.mrb[0].mxu0
    %v589 = vadd.f32 0.0, %v588
    %v590 = vpop.f32.mrb[0].mxu0
    %591 = vdwg.mxu0
    %598 = vrot.lane.b32.xlu0 %v564, 96
    %v599 = vpop.permute.xlu0 %598
    %600 = vrot.lane.b32.xlu0 %v569, 96
    %v601 = vpop.permute.xlu0 %600
    %602 = vrot.lane.b32.xlu0 %v574, 96
    %v603 = vpop.permute.xlu0 %602
    %604 = vrot.lane.b32.xlu0 %v579, 96
    %v605 = vpop.permute.xlu0 %604
    %606 = vrot.lane.b32.xlu0 %v584, 96
    %v607 = vpop.permute.xlu0 %606
    %608 = vrot.lane.b32.xlu0 %v589, 96
    %v609 = vpop.permute.xlu0 %608
    %vm610 = vcmask 64512
    %v611 = vsel %vm610, %v564, 0
    %v613 = vsel %vm610, %v569, 0
    %v615 = vsel %vm610, %v574, 0
    %v617 = vsel %vm610, %v579, 0
    %v619 = vsel %vm610, %v584, 0
    %v621 = vsel %vm610, %v589, 0
    %v623 = vsel %vm610, %v599, 0
    %v625 = vsel %vm610, %v601, 0
    %v627 = vsel %vm610, %v603, 0
    %v629 = vsel %vm610, %v605, 0
    %v631 = vsel %vm610, %v607, 0
    %v633 = vsel %vm610, %v609, 0
    %635 = vmatprep.subr.mxu0 0.0
    %636 = vmatpush1.xpose.msra.mxu0 %v623
    %637 = vmatprep.subr.mxu0 0.0
    %638 = vmatpush1.xpose.msra.mxu0 %v625
    %639 = vmatprep.subr.mxu0 0.0
    %640 = vmatpush1.xpose.msra.mxu0 %v627
    %641 = vmatprep.subr.mxu0 0.0
    %642 = vmatpush1.xpose.msra.mxu0 %v629
    %643 = vmatprep.subr.mxu0 0.0
    %644 = vmatpush1.xpose.msra.mxu0 %v631
    %645 = vmatprep.subr.mxu0 0.0
    %646 = vmatpush1.xpose.msra.mxu0 %v633
    %647 = vmatprep.subr.mxu0 0.0
    %648 = vmatpush1.xpose.msra.mxu0 0.0
    %649 = vmatprep.subr.mxu0 0.0
    %650 = vmatpush1.xpose.msra.mxu0 0.0
    %651 = vmatprep.subr.mxu0 0.0
    %652 = vmatpush1.xpose.msra.mxu0 0.0
    %653 = vmatprep.subr.mxu0 0.0
    %654 = vmatpush1.xpose.msra.mxu0 0.0
    %655 = vmatprep.subr.mxu0 0.0
    %656 = vmatpush1.xpose.msra.mxu0 0.0
    %657 = vmatprep.subr.mxu0 0.0
    %658 = vmatpush1.xpose.msra.mxu0 0.0
    %659 = vmatprep.subr.mxu0 0.0
    %660 = vmatpush1.xpose.msra.mxu0 0.0
    %661 = vmatprep.subr.mxu0 0.0
    %662 = vmatpush1.xpose.msra.mxu0 0.0
    %663 = vmatprep.subr.mxu0 0.0
    %664 = vmatpush1.xpose.msra.mxu0 0.0
    %665 = vmatprep.subr.mxu0 0.0
    %666 = vmatpush1.xpose.msra.mxu0 0.0
    %667 = vmatprep.subr.mxu0 0.0
    %668 = vmatpush1.xpose.msra.mxu0 0.0
    %669 = vmatprep.subr.mxu0 0.0
    %670 = vmatpush1.xpose.msra.mxu0 0.0
    %671 = vmatprep.subr.mxu0 0.0
    %672 = vmatpush1.xpose.msra.mxu0 0.0
    %673 = vmatprep.subr.mxu0 0.0
    %674 = vmatpush1.xpose.msra.mxu0 0.0
    %675 = vmatprep.subr.mxu0 0.0
    %676 = vmatpush1.xpose.msra.mxu0 0.0
    %677 = vmatprep.subr.mxu0 0.0
    %678 = vmatpush1.xpose.msra.mxu0 0.0
    %679 = vmatprep.subr.mxu0 0.0
    %680 = vmatpush1.xpose.msra.mxu0 0.0
    %681 = vmatprep.subr.mxu0 0.0
    %682 = vmatpush1.xpose.msra.mxu0 0.0
    %683 = vmatprep.subr.mxu0 0.0
    %684 = vmatpush1.xpose.msra.mxu0 0.0
    %685 = vmatprep.subr.mxu0 0.0
    %686 = vmatpush1.xpose.msra.mxu0 0.0
    %687 = vmatprep.subr.mxu0 0.0
    %688 = vmatpush1.xpose.msra.mxu0 0.0
    %689 = vmatprep.subr.mxu0 0.0
    %690 = vmatpush1.xpose.msra.mxu0 0.0
    %691 = vmatprep.subr.mxu0 0.0
    %692 = vmatpush1.xpose.msra.mxu0 0.0
    %693 = vmatprep.subr.mxu0 0.0
    %694 = vmatpush1.xpose.msra.mxu0 0.0
    %695 = vmatprep.subr.mxu0 0.0
    %696 = vmatpush1.xpose.msra.mxu0 0.0
    %697 = vmatprep.subr.mxu0 0.0
    %698 = vmatpush1.xpose.msra.mxu0 0.0
    %699 = vmatprep.mubr.f32.mxu0 0.0
    %700 = vmatmul.mubr.f32.gmra.mrb[0].mxu0 %v611
    %v701 = vpop.f32.mrb[0].mxu0
    %v702 = vadd.f32 0.0, %v701
    %v703 = vpop.f32.mrb[0].mxu0
    %704 = vmatprep.mubr.f32.mxu0 0.0
    %705 = vmatmul.mubr.f32.gmra.mrb[0].mxu0 %v613
    %v706 = vpop.f32.mrb[0].mxu0
    %v707 = vadd.f32 0.0, %v706
    %v708 = vpop.f32.mrb[0].mxu0
    %709 = vmatprep.mubr.f32.mxu0 0.0
    %710 = vmatmul.mubr.f32.gmra.mrb[0].mxu0 %v615
    %v711 = vpop.f32.mrb[0].mxu0
    %v712 = vadd.f32 0.0, %v711
    %v713 = vpop.f32.mrb[0].mxu0
    %714 = vmatprep.mubr.f32.mxu0 0.0
    %715 = vmatmul.mubr.f32.gmra.mrb[0].mxu0 %v617
    %v716 = vpop.f32.mrb[0].mxu0
    %v717 = vadd.f32 0.0, %v716
    %v718 = vpop.f32.mrb[0].mxu0
    %719 = vmatprep.mubr.f32.mxu0 0.0
    %720 = vmatmul.mubr.f32.gmra.mrb[0].mxu0 %v619
    %v721 = vpop.f32.mrb[0].mxu0
    %v722 = vadd.f32 0.0, %v721
    %v723 = vpop.f32.mrb[0].mxu0
    %724 = vmatprep.mubr.f32.mxu0 0.0
    %725 = vmatmul.mubr.f32.gmra.mrb[0].mxu0 %v621
    %v726 = vpop.f32.mrb[0].mxu0
    %v727 = vadd.f32 0.0, %v726
    %v728 = vpop.f32.mrb[0].mxu0
    %729 = vdwg.mxu0
    %v730 = vsel %vm363, %v702, -1e+30
    %v731 = vsel %vm364, %v707, -1e+30
    %v732 = vsel %vm365, %v712, -1e+30
    %v733 = vsel %vm366, %v717, -1e+30
    %v734 = vsel %vm367, %v722, -1e+30
    %v735 = vsel %vm368, %v727, -1e+30
    %vm736 = vcmask 392192
    %v737 = vsel %vm736, %v730, -inf
    %738 = vmax.xlane.f32.xlu0 %v737
    %v739 = vpop.xlane.xlu0 %738
    %v740 = vsel %vm736, %v731, -inf
    %741 = vmax.xlane.f32.xlu0 %v740
    %v742 = vpop.xlane.xlu0 %741
    %v743 = vsel %vm736, %v732, -inf
    %744 = vmax.xlane.f32.xlu0 %v743
    %v745 = vpop.xlane.xlu0 %744
    %v746 = vsel %vm736, %v733, -inf
    %747 = vmax.xlane.f32.xlu0 %v746
    %v748 = vpop.xlane.xlu0 %747
    %v749 = vsel %vm736, %v734, -inf
    %750 = vmax.xlane.f32.xlu0 %v749
    %v751 = vpop.xlane.xlu0 %750
    %v752 = vsel %vm736, %v735, -inf
    %753 = vmax.xlane.f32.xlu0 %v752
    %v754 = vpop.xlane.xlu0 %753
    %v755 = vsub.f32 %v730, %v739
    %v756 = vsub.f32 %v731, %v742
    %v757 = vsub.f32 %v732, %v745
    %v758 = vsub.f32 %v733, %v748
    %v759 = vsub.f32 %v734, %v751
    %v760 = vsub.f32 %v735, %v754
    %v761 = vmul.f32 %v755, 1.442695
    %v762 = vpow.pop %v761
    %v763 = vmul.f32 %v756, 1.442695
    %v764 = vpow.pop %v763
    %v765 = vmul.f32 %v757, 1.442695
    %v766 = vpow.pop %v765
    %v767 = vmul.f32 %v758, 1.442695
    %v768 = vpow.pop %v767
    %v769 = vmul.f32 %v759, 1.442695
    %v770 = vpow.pop %v769
    %v771 = vmul.f32 %v760, 1.442695
    %v772 = vpow.pop %v771
    %v773 = vsel %vm736, %v762, 0.0
    %774 = vadd.xlane.f32.xlu0 %v773
    %v775 = vpop.xlane.xlu0 %774
    %v776 = vsel %vm736, %v764, 0.0
    %777 = vadd.xlane.f32.xlu0 %v776
    %v778 = vpop.xlane.xlu0 %777
    %v779 = vsel %vm736, %v766, 0.0
    %780 = vadd.xlane.f32.xlu0 %v779
    %v781 = vpop.xlane.xlu0 %780
    %v782 = vsel %vm736, %v768, 0.0
    %783 = vadd.xlane.f32.xlu0 %v782
    %v784 = vpop.xlane.xlu0 %783
    %v785 = vsel %vm736, %v770, 0.0
    %786 = vadd.xlane.f32.xlu0 %v785
    %v787 = vpop.xlane.xlu0 %786
    %v788 = vsel %vm736, %v772, 0.0
    %789 = vadd.xlane.f32.xlu0 %v788
    %v790 = vpop.xlane.xlu0 %789
    %v791 = vrcp.pop %v775
    %v792 = vmul.f32 1.0, %v791
    %v793 = vrcp.pop %v778
    %v794 = vmul.f32 1.0, %v793
    %v795 = vrcp.pop %v781
    %v796 = vmul.f32 1.0, %v795
    %v797 = vrcp.pop %v784
    %v798 = vmul.f32 1.0, %v797
    %v799 = vrcp.pop %v787
    %v800 = vmul.f32 1.0, %v799
    %v801 = vrcp.pop %v790
    %v802 = vmul.f32 1.0, %v801
    %v803 = vmul.f32 %v762, %v792
    %v804 = vmul.f32 %v764, %v794
    %v805 = vmul.f32 %v766, %v796
    %v806 = vmul.f32 %v768, %v798
    %v807 = vmul.f32 %v770, %v800
    %v808 = vmul.f32 %v772, %v802
    %809 = vrot.lane.b32.xlu0 %v564, 64
    %v810 = vpop.permute.xlu0 %809
    %811 = vrot.lane.b32.xlu0 %v569, 64
    %v812 = vpop.permute.xlu0 %811
    %813 = vrot.lane.b32.xlu0 %v574, 64
    %v814 = vpop.permute.xlu0 %813
    %815 = vrot.lane.b32.xlu0 %v579, 64
    %v816 = vpop.permute.xlu0 %815
    %817 = vrot.lane.b32.xlu0 %v584, 64
    %v818 = vpop.permute.xlu0 %817
    %819 = vrot.lane.b32.xlu0 %v589, 64
    %v820 = vpop.permute.xlu0 %819
    %v828 = vsel %vm736, %v803, 0
    %v831 = vsel %vm736, %v804, 0
    %v834 = vsel %vm736, %v805, 0
    %v837 = vsel %vm736, %v806, 0
    %v840 = vsel %vm736, %v807, 0
    %v843 = vsel %vm736, %v808, 0
    %845 = vmatprep.subr.mxu0 0.0
    %846 = vmatpush1.msra.mxu0 %v810
    %847 = vmatprep.subr.mxu0 0.0
    %848 = vmatpush1.msra.mxu0 %v812
    %849 = vmatprep.subr.mxu0 0.0
    %850 = vmatpush1.msra.mxu0 %v814
    %851 = vmatprep.subr.mxu0 0.0
    %852 = vmatpush1.msra.mxu0 %v816
    %853 = vmatprep.subr.mxu0 0.0
    %854 = vmatpush1.msra.mxu0 %v818
    %855 = vmatprep.subr.mxu0 0.0
    %856 = vmatpush1.msra.mxu0 %v820
    %857 = vmatprep.subr.mxu0 0.0
    %858 = vmatpush1.msra.mxu0 0.0
    %859 = vmatprep.subr.mxu0 0.0
    %860 = vmatpush1.msra.mxu0 0.0
    %861 = vmatprep.subr.mxu0 0.0
    %862 = vmatpush1.msra.mxu0 0.0
    %863 = vmatprep.subr.mxu0 0.0
    %864 = vmatpush1.msra.mxu0 0.0
    %865 = vmatprep.subr.mxu0 0.0
    %866 = vmatpush1.msra.mxu0 0.0
    %867 = vmatprep.subr.mxu0 0.0
    %868 = vmatpush1.msra.mxu0 0.0
    %869 = vmatprep.subr.mxu0 0.0
    %870 = vmatpush1.msra.mxu0 0.0
    %871 = vmatprep.subr.mxu0 0.0
    %872 = vmatpush1.msra.mxu0 0.0
    %873 = vmatprep.subr.mxu0 0.0
    %874 = vmatpush1.msra.mxu0 0.0
    %875 = vmatprep.subr.mxu0 0.0
    %876 = vmatpush1.msra.mxu0 0.0
    %877 = vmatprep.subr.mxu0 0.0
    %878 = vmatpush1.msra.mxu0 0.0
    %879 = vmatprep.subr.mxu0 0.0
    %880 = vmatpush1.msra.mxu0 0.0
    %881 = vmatprep.subr.mxu0 0.0
    %882 = vmatpush1.msra.mxu0 0.0
    %883 = vmatprep.subr.mxu0 0.0
    %884 = vmatpush1.msra.mxu0 0.0
    %885 = vmatprep.subr.mxu0 0.0
    %886 = vmatpush1.msra.mxu0 0.0
    %887 = vmatprep.subr.mxu0 0.0
    %888 = vmatpush1.msra.mxu0 0.0
    %889 = vmatprep.subr.mxu0 0.0
    %890 = vmatpush1.msra.mxu0 0.0
    %891 = vmatprep.subr.mxu0 0.0
    %892 = vmatpush1.msra.mxu0 0.0
    %893 = vmatprep.subr.mxu0 0.0
    %894 = vmatpush1.msra.mxu0 0.0
    %895 = vmatprep.subr.mxu0 0.0
    %896 = vmatpush1.msra.mxu0 0.0
    %897 = vmatprep.subr.mxu0 0.0
    %898 = vmatpush1.msra.mxu0 0.0
    %899 = vmatprep.subr.mxu0 0.0
    %900 = vmatpush1.msra.mxu0 0.0
    %901 = vmatprep.subr.mxu0 0.0
    %902 = vmatpush1.msra.mxu0 0.0
    %903 = vmatprep.subr.mxu0 0.0
    %904 = vmatpush1.msra.mxu0 0.0
    %905 = vmatprep.subr.mxu0 0.0
    %906 = vmatpush1.msra.mxu0 0.0
    %907 = vmatprep.subr.mxu0 0.0
    %908 = vmatpush1.msra.mxu0 0.0
    %909 = vmatprep.mubr.f32.mxu0 0.0
    %910 = vmatmul.mubr.f32.gmra.mrb[0].mxu0 %v828
    %v911 = vpop.f32.mrb[0].mxu0
    %v912 = vadd.f32 0.0, %v911
    %v913 = vpop.f32.mrb[0].mxu0
    %914 = vmatprep.mubr.f32.mxu0 0.0
    %915 = vmatmul.mubr.f32.gmra.mrb[0].mxu0 %v831
    %v916 = vpop.f32.mrb[0].mxu0
    %v917 = vadd.f32 0.0, %v916
    %v918 = vpop.f32.mrb[0].mxu0
    %919 = vmatprep.mubr.f32.mxu0 0.0
    %920 = vmatmul.mubr.f32.gmra.mrb[0].mxu0 %v834
    %v921 = vpop.f32.mrb[0].mxu0
    %v922 = vadd.f32 0.0, %v921
    %v923 = vpop.f32.mrb[0].mxu0
    %924 = vmatprep.mubr.f32.mxu0 0.0
    %925 = vmatmul.mubr.f32.gmra.mrb[0].mxu0 %v837
    %v926 = vpop.f32.mrb[0].mxu0
    %v927 = vadd.f32 0.0, %v926
    %v928 = vpop.f32.mrb[0].mxu0
    %929 = vmatprep.mubr.f32.mxu0 0.0
    %930 = vmatmul.mubr.f32.gmra.mrb[0].mxu0 %v840
    %v931 = vpop.f32.mrb[0].mxu0
    %v932 = vadd.f32 0.0, %v931
    %v933 = vpop.f32.mrb[0].mxu0
    %934 = vmatprep.mubr.f32.mxu0 0.0
    %935 = vmatmul.mubr.f32.gmra.mrb[0].mxu0 %v843
    %v936 = vpop.f32.mrb[0].mxu0
    %v937 = vadd.f32 0.0, %v936
    %v938 = vpop.f32.mrb[0].mxu0
    %939 = vdwg.mxu0
    %940 = vst.msk [vmem:[#allocation3] sm:$0xff] %vm610, %v912
    %941 = vst.msk [vmem:[#allocation3 + $0x8] sm:$0xff] %vm610, %v917
    %942 = vst.msk [vmem:[#allocation3 + $0x10] sm:$0xff] %vm610, %v922
    %943 = vst.msk [vmem:[#allocation3 + $0x18] sm:$0xff] %vm610, %v927
    %944 = vst.msk [vmem:[#allocation3 + $0x20] sm:$0xff] %vm610, %v932
    %945 = vst.msk [vmem:[#allocation3 + $0x28] sm:$0xff] %vm610, %v937
    %946 = vrot.lane.b32.xlu0 %v564, 120
    %v947 = vpop.permute.xlu0 %946
    %948 = vrot.lane.b32.xlu0 %v569, 120
    %v949 = vpop.permute.xlu0 %948
    %950 = vrot.lane.b32.xlu0 %v574, 120
    %v951 = vpop.permute.xlu0 %950
    %952 = vrot.lane.b32.xlu0 %v579, 120
    %v953 = vpop.permute.xlu0 %952
    %954 = vrot.lane.b32.xlu0 %v584, 120
    %v955 = vpop.permute.xlu0 %954
    %956 = vrot.lane.b32.xlu0 %v589, 120
    %v957 = vpop.permute.xlu0 %956
    %958 = vrot.lane.b32.xlu0 %v564, 88
    %v959 = vpop.permute.xlu0 %958
    %960 = vrot.lane.b32.xlu0 %v569, 88
    %v961 = vpop.permute.xlu0 %960
    %962 = vrot.lane.b32.xlu0 %v574, 88
    %v963 = vpop.permute.xlu0 %962
    %964 = vrot.lane.b32.xlu0 %v579, 88
    %v965 = vpop.permute.xlu0 %964
    %966 = vrot.lane.b32.xlu0 %v584, 88
    %v967 = vpop.permute.xlu0 %966
    %968 = vrot.lane.b32.xlu0 %v589, 88
    %v969 = vpop.permute.xlu0 %968
    %v970 = vsel %vm610, %v947, 0
    %v972 = vsel %vm610, %v949, 0
    %v974 = vsel %vm610, %v951, 0
    %v976 = vsel %vm610, %v953, 0
    %v978 = vsel %vm610, %v955, 0
    %v980 = vsel %vm610, %v957, 0
    %v982 = vsel %vm610, %v959, 0
    %v984 = vsel %vm610, %v961, 0
    %v986 = vsel %vm610, %v963, 0
    %v988 = vsel %vm610, %v965, 0
    %v990 = vsel %vm610, %v967, 0
    %v992 = vsel %vm610, %v969, 0
    %994 = vmatprep.subr.mxu0 0.0
    %995 = vmatpush1.xpose.msra.mxu0 %v982
    %996 = vmatprep.subr.mxu0 0.0
    %997 = vmatpush1.xpose.msra.mxu0 %v984
    %998 = vmatprep.subr.mxu0 0.0
    %999 = vmatpush1.xpose.msra.mxu0 %v986
    %1000 = vmatprep.subr.mxu0 0.0
    %1001 = vmatpush1.xpose.msra.mxu0 %v988
    %1002 = vmatprep.subr.mxu0 0.0
    %1003 = vmatpush1.xpose.msra.mxu0 %v990
    %1004 = vmatprep.subr.mxu0 0.0
    %1005 = vmatpush1.xpose.msra.mxu0 %v992
    %1006 = vmatprep.subr.mxu0 0.0
    %1007 = vmatpush1.xpose.msra.mxu0 0.0
    %1008 = vmatprep.subr.mxu0 0.0
    %1009 = vmatpush1.xpose.msra.mxu0 0.0
    %1010 = vmatprep.subr.mxu0 0.0
    %1011 = vmatpush1.xpose.msra.mxu0 0.0
    %1012 = vmatprep.subr.mxu0 0.0
    %1013 = vmatpush1.xpose.msra.mxu0 0.0
    %1014 = vmatprep.subr.mxu0 0.0
    %1015 = vmatpush1.xpose.msra.mxu0 0.0
    %1016 = vmatprep.subr.mxu0 0.0
    %1017 = vmatpush1.xpose.msra.mxu0 0.0
    %1018 = vmatprep.subr.mxu0 0.0
    %1019 = vmatpush1.xpose.msra.mxu0 0.0
    %1020 = vmatprep.subr.mxu0 0.0
    %1021 = vmatpush1.xpose.msra.mxu0 0.0
    %1022 = vmatprep.subr.mxu0 0.0
    %1023 = vmatpush1.xpose.msra.mxu0 0.0
    %1024 = vmatprep.subr.mxu0 0.0
    %1025 = vmatpush1.xpose.msra.mxu0 0.0
    %1026 = vmatprep.subr.mxu0 0.0
    %1027 = vmatpush1.xpose.msra.mxu0 0.0
    %1028 = vmatprep.subr.mxu0 0.0
    %1029 = vmatpush1.xpose.msra.mxu0 0.0
    %1030 = vmatprep.subr.mxu0 0.0
    %1031 = vmatpush1.xpose.msra.mxu0 0.0
    %1032 = vmatprep.subr.mxu0 0.0
    %1033 = vmatpush1.xpose.msra.mxu0 0.0
    %1034 = vmatprep.subr.mxu0 0.0
    %1035 = vmatpush1.xpose.msra.mxu0 0.0
    %1036 = vmatprep.subr.mxu0 0.0
    %1037 = vmatpush1.xpose.msra.mxu0 0.0
    %1038 = vmatprep.subr.mxu0 0.0
    %1039 = vmatpush1.xpose.msra.mxu0 0.0
    %1040 = vmatprep.subr.mxu0 0.0
    %1041 = vmatpush1.xpose.msra.mxu0 0.0
    %1042 = vmatprep.subr.mxu0 0.0
    %1043 = vmatpush1.xpose.msra.mxu0 0.0
    %1044 = vmatprep.subr.mxu0 0.0
    %1045 = vmatpush1.xpose.msra.mxu0 0.0
    %1046 = vmatprep.subr.mxu0 0.0
    %1047 = vmatpush1.xpose.msra.mxu0 0.0
    %1048 = vmatprep.subr.mxu0 0.0
    %1049 = vmatpush1.xpose.msra.mxu0 0.0
    %1050 = vmatprep.subr.mxu0 0.0
    %1051 = vmatpush1.xpose.msra.mxu0 0.0
    %1052 = vmatprep.subr.mxu0 0.0
    %1053 = vmatpush1.xpose.msra.mxu0 0.0
    %1054 = vmatprep.subr.mxu0 0.0
    %1055 = vmatpush1.xpose.msra.mxu0 0.0
    %1056 = vmatprep.subr.mxu0 0.0
    %1057 = vmatpush1.xpose.msra.mxu0 0.0
    %1058 = vmatprep.mubr.f32.mxu0 0.0
    %1059 = vmatmul.mubr.f32.gmra.mrb[0].mxu0 %v970
    %v1060 = vpop.f32.mrb[0].mxu0
    %v1061 = vadd.f32 0.0, %v1060
    %v1062 = vpop.f32.mrb[0].mxu0
    %1063 = vmatprep.mubr.f32.mxu0 0.0
    %1064 = vmatmul.mubr.f32.gmra.mrb[0].mxu0 %v972
    %v1065 = vpop.f32.mrb[0].mxu0
    %v1066 = vadd.f32 0.0, %v1065
    %v1067 = vpop.f32.mrb[0].mxu0
    %1068 = vmatprep.mubr.f32.mxu0 0.0
    %1069 = vmatmul.mubr.f32.gmra.mrb[0].mxu0 %v974
    %v1070 = vpop.f32.mrb[0].mxu0
    %v1071 = vadd.f32 0.0, %v1070
    %v1072 = vpop.f32.mrb[0].mxu0
    %1073 = vmatprep.mubr.f32.mxu0 0.0
    %1074 = vmatmul.mubr.f32.gmra.mrb[0].mxu0 %v976
    %v1075 = vpop.f32.mrb[0].mxu0
    %v1076 = vadd.f32 0.0, %v1075
    %v1077 = vpop.f32.mrb[0].mxu0
    %1078 = vmatprep.mubr.f32.mxu0 0.0
    %1079 = vmatmul.mubr.f32.gmra.mrb[0].mxu0 %v978
    %v1080 = vpop.f32.mrb[0].mxu0
    %v1081 = vadd.f32 0.0, %v1080
    %v1082 = vpop.f32.mrb[0].mxu0
    %1083 = vmatprep.mubr.f32.mxu0 0.0
    %1084 = vmatmul.mubr.f32.gmra.mrb[0].mxu0 %v980
    %v1085 = vpop.f32.mrb[0].mxu0
    %v1086 = vadd.f32 0.0, %v1085
    %v1087 = vpop.f32.mrb[0].mxu0
    %1088 = vdwg.mxu0
    %v1089 = vsel %vm363, %v1061, -1e+30
    %v1090 = vsel %vm364, %v1066, -1e+30
    %v1091 = vsel %vm365, %v1071, -1e+30
    %v1092 = vsel %vm366, %v1076, -1e+30
    %v1093 = vsel %vm367, %v1081, -1e+30
    %v1094 = vsel %vm368, %v1086, -1e+30
    %v1095 = vsel %vm736, %v1089, -inf
    %1096 = vmax.xlane.f32.xlu0 %v1095
    %v1097 = vpop.xlane.xlu0 %1096
    %v1098 = vsel %vm736, %v1090, -inf
    %1099 = vmax.xlane.f32.xlu0 %v1098
    %v1100 = vpop.xlane.xlu0 %1099
    %v1101 = vsel %vm736, %v1091, -inf
    %1102 = vmax.xlane.f32.xlu0 %v1101
    %v1103 = vpop.xlane.xlu0 %1102
    %v1104 = vsel %vm736, %v1092, -inf
    %1105 = vmax.xlane.f32.xlu0 %v1104
    %v1106 = vpop.xlane.xlu0 %1105
    %v1107 = vsel %vm736, %v1093, -inf
    %1108 = vmax.xlane.f32.xlu0 %v1107
    %v1109 = vpop.xlane.xlu0 %1108
    %v1110 = vsel %vm736, %v1094, -inf
    %1111 = vmax.xlane.f32.xlu0 %v1110
    %v1112 = vpop.xlane.xlu0 %1111
    %v1113 = vsub.f32 %v1089, %v1097
    %v1114 = vsub.f32 %v1090, %v1100
    %v1115 = vsub.f32 %v1091, %v1103
    %v1116 = vsub.f32 %v1092, %v1106
    %v1117 = vsub.f32 %v1093, %v1109
    %v1118 = vsub.f32 %v1094, %v1112
    %v1119 = vmul.f32 %v1113, 1.442695
    %v1120 = vpow.pop %v1119
    %v1121 = vmul.f32 %v1114, 1.442695
    %v1122 = vpow.pop %v1121
    %v1123 = vmul.f32 %v1115, 1.442695
    %v1124 = vpow.pop %v1123
    %v1125 = vmul.f32 %v1116, 1.442695
    %v1126 = vpow.pop %v1125
    %v1127 = vmul.f32 %v1117, 1.442695
    %v1128 = vpow.pop %v1127
    %v1129 = vmul.f32 %v1118, 1.442695
    %v1130 = vpow.pop %v1129
    %v1131 = vsel %vm736, %v1120, 0.0
    %1132 = vadd.xlane.f32.xlu0 %v1131
    %v1133 = vpop.xlane.xlu0 %1132
    %v1134 = vsel %vm736, %v1122, 0.0
    %1135 = vadd.xlane.f32.xlu0 %v1134
    %v1136 = vpop.xlane.xlu0 %1135
    %v1137 = vsel %vm736, %v1124, 0.0
    %1138 = vadd.xlane.f32.xlu0 %v1137
    %v1139 = vpop.xlane.xlu0 %1138
    %v1140 = vsel %vm736, %v1126, 0.0
    %1141 = vadd.xlane.f32.xlu0 %v1140
    %v1142 = vpop.xlane.xlu0 %1141
    %v1143 = vsel %vm736, %v1128, 0.0
    %1144 = vadd.xlane.f32.xlu0 %v1143
    %v1145 = vpop.xlane.xlu0 %1144
    %v1146 = vsel %vm736, %v1130, 0.0
    %1147 = vadd.xlane.f32.xlu0 %v1146
    %v1148 = vpop.xlane.xlu0 %1147
    %v1149 = vrcp.pop %v1133
    %v1150 = vmul.f32 1.0, %v1149
    %v1151 = vrcp.pop %v1136
    %v1152 = vmul.f32 1.0, %v1151
    %v1153 = vrcp.pop %v1139
    %v1154 = vmul.f32 1.0, %v1153
    %v1155 = vrcp.pop %v1142
    %v1156 = vmul.f32 1.0, %v1155
    %v1157 = vrcp.pop %v1145
    %v1158 = vmul.f32 1.0, %v1157
    %v1159 = vrcp.pop %v1148
    %v1160 = vmul.f32 1.0, %v1159
    %v1161 = vmul.f32 %v1120, %v1150
    %v1162 = vmul.f32 %v1122, %v1152
    %v1163 = vmul.f32 %v1124, %v1154
    %v1164 = vmul.f32 %v1126, %v1156
    %v1165 = vmul.f32 %v1128, %v1158
    %v1166 = vmul.f32 %v1130, %v1160
    %1167 = vrot.lane.b32.xlu0 %v564, 56
    %v1168 = vpop.permute.xlu0 %1167
    %1169 = vrot.lane.b32.xlu0 %v569, 56
    %v1170 = vpop.permute.xlu0 %1169
    %1171 = vrot.lane.b32.xlu0 %v574, 56
    %v1172 = vpop.permute.xlu0 %1171
    %1173 = vrot.lane.b32.xlu0 %v579, 56
    %v1174 = vpop.permute.xlu0 %1173
    %1175 = vrot.lane.b32.xlu0 %v584, 56
    %v1176 = vpop.permute.xlu0 %1175
    %1177 = vrot.lane.b32.xlu0 %v589, 56
    %v1178 = vpop.permute.xlu0 %1177
    %v1186 = vsel %vm736, %v1161, 0
    %v1189 = vsel %vm736, %v1162, 0
    %v1192 = vsel %vm736, %v1163, 0
    %v1195 = vsel %vm736, %v1164, 0
    %v1198 = vsel %vm736, %v1165, 0
    %v1201 = vsel %vm736, %v1166, 0
    %1203 = vmatprep.subr.mxu0 0.0
    %1204 = vmatpush1.msra.mxu0 %v1168
    %1205 = vmatprep.subr.mxu0 0.0
    %1206 = vmatpush1.msra.mxu0 %v1170
    %1207 = vmatprep.subr.mxu0 0.0
    %1208 = vmatpush1.msra.mxu0 %v1172
    %1209 = vmatprep.subr.mxu0 0.0
    %1210 = vmatpush1.msra.mxu0 %v1174
    %1211 = vmatprep.subr.mxu0 0.0
    %1212 = vmatpush1.msra.mxu0 %v1176
    %1213 = vmatprep.subr.mxu0 0.0
    %1214 = vmatpush1.msra.mxu0 %v1178
    %1215 = vmatprep.subr.mxu0 0.0
    %1216 = vmatpush1.msra.mxu0 0.0
    %1217 = vmatprep.subr.mxu0 0.0
    %1218 = vmatpush1.msra.mxu0 0.0
    %1219 = vmatprep.subr.mxu0 0.0
    %1220 = vmatpush1.msra.mxu0 0.0
    %1221 = vmatprep.subr.mxu0 0.0
    %1222 = vmatpush1.msra.mxu0 0.0
    %1223 = vmatprep.subr.mxu0 0.0
    %1224 = vmatpush1.msra.mxu0 0.0
    %1225 = vmatprep.subr.mxu0 0.0
    %1226 = vmatpush1.msra.mxu0 0.0
    %1227 = vmatprep.subr.mxu0 0.0
    %1228 = vmatpush1.msra.mxu0 0.0
    %1229 = vmatprep.subr.mxu0 0.0
    %1230 = vmatpush1.msra.mxu0 0.0
    %1231 = vmatprep.subr.mxu0 0.0
    %1232 = vmatpush1.msra.mxu0 0.0
    %1233 = vmatprep.subr.mxu0 0.0
    %1234 = vmatpush1.msra.mxu0 0.0
    %1235 = vmatprep.subr.mxu0 0.0
    %1236 = vmatpush1.msra.mxu0 0.0
    %1237 = vmatprep.subr.mxu0 0.0
    %1238 = vmatpush1.msra.mxu0 0.0
    %1239 = vmatprep.subr.mxu0 0.0
    %1240 = vmatpush1.msra.mxu0 0.0
    %1241 = vmatprep.subr.mxu0 0.0
    %1242 = vmatpush1.msra.mxu0 0.0
    %1243 = vmatprep.subr.mxu0 0.0
    %1244 = vmatpush1.msra.mxu0 0.0
    %1245 = vmatprep.subr.mxu0 0.0
    %1246 = vmatpush1.msra.mxu0 0.0
    %1247 = vmatprep.subr.mxu0 0.0
    %1248 = vmatpush1.msra.mxu0 0.0
    %1249 = vmatprep.subr.mxu0 0.0
    %1250 = vmatpush1.msra.mxu0 0.0
    %1251 = vmatprep.subr.mxu0 0.0
    %1252 = vmatpush1.msra.mxu0 0.0
    %1253 = vmatprep.subr.mxu0 0.0
    %1254 = vmatpush1.msra.mxu0 0.0
    %1255 = vmatprep.subr.mxu0 0.0
    %1256 = vmatpush1.msra.mxu0 0.0
    %1257 = vmatprep.subr.mxu0 0.0
    %1258 = vmatpush1.msra.mxu0 0.0
    %1259 = vmatprep.subr.mxu0 0.0
    %1260 = vmatpush1.msra.mxu0 0.0
    %1261 = vmatprep.subr.mxu0 0.0
    %1262 = vmatpush1.msra.mxu0 0.0
    %1263 = vmatprep.subr.mxu0 0.0
    %1264 = vmatpush1.msra.mxu0 0.0
    %1265 = vmatprep.subr.mxu0 0.0
    %1266 = vmatpush1.msra.mxu0 0.0
    %1267 = vmatprep.mubr.f32.mxu0 0.0
    %1268 = vmatmul.mubr.f32.gmra.mrb[0].mxu0 %v1186
    %v1269 = vpop.f32.mrb[0].mxu0
    %v1270 = vadd.f32 0.0, %v1269
    %v1271 = vpop.f32.mrb[0].mxu0
    %1272 = vmatprep.mubr.f32.mxu0 0.0
    %1273 = vmatmul.mubr.f32.gmra.mrb[0].mxu0 %v1189
    %v1274 = vpop.f32.mrb[0].mxu0
    %v1275 = vadd.f32 0.0, %v1274
    %v1276 = vpop.f32.mrb[0].mxu0
    %1277 = vmatprep.mubr.f32.mxu0 0.0
    %1278 = vmatmul.mubr.f32.gmra.mrb[0].mxu0 %v1192
    %v1279 = vpop.f32.mrb[0].mxu0
    %v1280 = vadd.f32 0.0, %v1279
    %v1281 = vpop.f32.mrb[0].mxu0
    %1282 = vmatprep.mubr.f32.mxu0 0.0
    %1283 = vmatmul.mubr.f32.gmra.mrb[0].mxu0 %v1195
    %v1284 = vpop.f32.mrb[0].mxu0
    %v1285 = vadd.f32 0.0, %v1284
    %v1286 = vpop.f32.mrb[0].mxu0
    %1287 = vmatprep.mubr.f32.mxu0 0.0
    %1288 = vmatmul.mubr.f32.gmra.mrb[0].mxu0 %v1198
    %v1289 = vpop.f32.mrb[0].mxu0
    %v1290 = vadd.f32 0.0, %v1289
    %v1291 = vpop.f32.mrb[0].mxu0
    %1292 = vmatprep.mubr.f32.mxu0 0.0
    %1293 = vmatmul.mubr.f32.gmra.mrb[0].mxu0 %v1201
    %v1294 = vpop.f32.mrb[0].mxu0
    %v1295 = vadd.f32 0.0, %v1294
    %v1296 = vpop.f32.mrb[0].mxu0
    %1297 = vdwg.mxu0
    %1304 = vrot.lane.b32.xlu0 %v1270, 8
    %v1305 = vpop.permute.xlu0 %1304
    %1306 = vrot.lane.b32.xlu0 %v1275, 8
    %v1307 = vpop.permute.xlu0 %1306
    %1308 = vrot.lane.b32.xlu0 %v1280, 8
    %v1309 = vpop.permute.xlu0 %1308
    %1310 = vrot.lane.b32.xlu0 %v1285, 8
    %v1311 = vpop.permute.xlu0 %1310
    %1312 = vrot.lane.b32.xlu0 %v1290, 8
    %v1313 = vpop.permute.xlu0 %1312
    %1314 = vrot.lane.b32.xlu0 %v1295, 8
    %v1315 = vpop.permute.xlu0 %1314
    %vm1322 = vcmask 130112
    %1323 = vst.msk [vmem:[#allocation3] sm:$0xff] %vm1322, %v1305
    %1324 = vst.msk [vmem:[#allocation3 + $0x8] sm:$0xff] %vm1322, %v1307
    %1325 = vst.msk [vmem:[#allocation3 + $0x10] sm:$0xff] %vm1322, %v1309
    %1326 = vst.msk [vmem:[#allocation3 + $0x18] sm:$0xff] %vm1322, %v1311
    %1327 = vst.msk [vmem:[#allocation3 + $0x20] sm:$0xff] %vm1322, %v1313
    %1328 = vst.msk [vmem:[#allocation3 + $0x28] sm:$0xff] %vm1322, %v1315
    %1329 = vrot.lane.b32.xlu0 %v564, 112
    %v1330 = vpop.permute.xlu0 %1329
    %1331 = vrot.lane.b32.xlu0 %v569, 112
    %v1332 = vpop.permute.xlu0 %1331
    %1333 = vrot.lane.b32.xlu0 %v574, 112
    %v1334 = vpop.permute.xlu0 %1333
    %1335 = vrot.lane.b32.xlu0 %v579, 112
    %v1336 = vpop.permute.xlu0 %1335
    %1337 = vrot.lane.b32.xlu0 %v584, 112
    %v1338 = vpop.permute.xlu0 %1337
    %1339 = vrot.lane.b32.xlu0 %v589, 112
    %v1340 = vpop.permute.xlu0 %1339
    %1341 = vrot.lane.b32.xlu0 %v564, 80
    %v1342 = vpop.permute.xlu0 %1341
    %1343 = vrot.lane.b32.xlu0 %v569, 80
    %v1344 = vpop.permute.xlu0 %1343
    %1345 = vrot.lane.b32.xlu0 %v574, 80
    %v1346 = vpop.permute.xlu0 %1345
    %1347 = vrot.lane.b32.xlu0 %v579, 80
    %v1348 = vpop.permute.xlu0 %1347
    %1349 = vrot.lane.b32.xlu0 %v584, 80
    %v1350 = vpop.permute.xlu0 %1349
    %1351 = vrot.lane.b32.xlu0 %v589, 80
    %v1352 = vpop.permute.xlu0 %1351
    %v1353 = vsel %vm610, %v1330, 0
    %v1355 = vsel %vm610, %v1332, 0
    %v1357 = vsel %vm610, %v1334, 0
    %v1359 = vsel %vm610, %v1336, 0
    %v1361 = vsel %vm610, %v1338, 0
    %v1363 = vsel %vm610, %v1340, 0
    %v1365 = vsel %vm610, %v1342, 0
    %v1367 = vsel %vm610, %v1344, 0
    %v1369 = vsel %vm610, %v1346, 0
    %v1371 = vsel %vm610, %v1348, 0
    %v1373 = vsel %vm610, %v1350, 0
    %v1375 = vsel %vm610, %v1352, 0
    %1377 = vmatprep.subr.mxu0 0.0
    %1378 = vmatpush1.xpose.msra.mxu0 %v1365
    %1379 = vmatprep.subr.mxu0 0.0
    %1380 = vmatpush1.xpose.msra.mxu0 %v1367
    %1381 = vmatprep.subr.mxu0 0.0
    %1382 = vmatpush1.xpose.msra.mxu0 %v1369
    %1383 = vmatprep.subr.mxu0 0.0
    %1384 = vmatpush1.xpose.msra.mxu0 %v1371
    %1385 = vmatprep.subr.mxu0 0.0
    %1386 = vmatpush1.xpose.msra.mxu0 %v1373
    %1387 = vmatprep.subr.mxu0 0.0
    %1388 = vmatpush1.xpose.msra.mxu0 %v1375
    %1389 = vmatprep.subr.mxu0 0.0
    %1390 = vmatpush1.xpose.msra.mxu0 0.0
    %1391 = vmatprep.subr.mxu0 0.0
    %1392 = vmatpush1.xpose.msra.mxu0 0.0
    %1393 = vmatprep.subr.mxu0 0.0
    %1394 = vmatpush1.xpose.msra.mxu0 0.0
    %1395 = vmatprep.subr.mxu0 0.0
    %1396 = vmatpush1.xpose.msra.mxu0 0.0
    %1397 = vmatprep.subr.mxu0 0.0
    %1398 = vmatpush1.xpose.msra.mxu0 0.0
    %1399 = vmatprep.subr.mxu0 0.0
    %1400 = vmatpush1.xpose.msra.mxu0 0.0
    %1401 = vmatprep.subr.mxu0 0.0
    %1402 = vmatpush1.xpose.msra.mxu0 0.0
    %1403 = vmatprep.subr.mxu0 0.0
    %1404 = vmatpush1.xpose.msra.mxu0 0.0
    %1405 = vmatprep.subr.mxu0 0.0
    %1406 = vmatpush1.xpose.msra.mxu0 0.0
    %1407 = vmatprep.subr.mxu0 0.0
    %1408 = vmatpush1.xpose.msra.mxu0 0.0
    %1409 = vmatprep.subr.mxu0 0.0
    %1410 = vmatpush1.xpose.msra.mxu0 0.0
    %1411 = vmatprep.subr.mxu0 0.0
    %1412 = vmatpush1.xpose.msra.mxu0 0.0
    %1413 = vmatprep.subr.mxu0 0.0
    %1414 = vmatpush1.xpose.msra.mxu0 0.0
    %1415 = vmatprep.subr.mxu0 0.0
    %1416 = vmatpush1.xpose.msra.mxu0 0.0
    %1417 = vmatprep.subr.mxu0 0.0
    %1418 = vmatpush1.xpose.msra.mxu0 0.0
    %1419 = vmatprep.subr.mxu0 0.0
    %1420 = vmatpush1.xpose.msra.mxu0 0.0
    %1421 = vmatprep.subr.mxu0 0.0
    %1422 = vmatpush1.xpose.msra.mxu0 0.0
    %1423 = vmatprep.subr.mxu0 0.0
    %1424 = vmatpush1.xpose.msra.mxu0 0.0
    %1425 = vmatprep.subr.mxu0 0.0
    %1426 = vmatpush1.xpose.msra.mxu0 0.0
    %1427 = vmatprep.subr.mxu0 0.0
    %1428 = vmatpush1.xpose.msra.mxu0 0.0
    %1429 = vmatprep.subr.mxu0 0.0
    %1430 = vmatpush1.xpose.msra.mxu0 0.0
    %1431 = vmatprep.subr.mxu0 0.0
    %1432 = vmatpush1.xpose.msra.mxu0 0.0
    %1433 = vmatprep.subr.mxu0 0.0
    %1434 = vmatpush1.xpose.msra.mxu0 0.0
    %1435 = vmatprep.subr.mxu0 0.0
    %1436 = vmatpush1.xpose.msra.mxu0 0.0
    %1437 = vmatprep.subr.mxu0 0.0
    %1438 = vmatpush1.xpose.msra.mxu0 0.0
    %1439 = vmatprep.subr.mxu0 0.0
    %1440 = vmatpush1.xpose.msra.mxu0 0.0
    %1441 = vmatprep.mubr.f32.mxu0 0.0
    %1442 = vmatmul.mubr.f32.gmra.mrb[0].mxu0 %v1353
    %v1443 = vpop.f32.mrb[0].mxu0
    %v1444 = vadd.f32 0.0, %v1443
    %v1445 = vpop.f32.mrb[0].mxu0
    %1446 = vmatprep.mubr.f32.mxu0 0.0
    %1447 = vmatmul.mubr.f32.gmra.mrb[0].mxu0 %v1355
    %v1448 = vpop.f32.mrb[0].mxu0
    %v1449 = vadd.f32 0.0, %v1448
    %v1450 = vpop.f32.mrb[0].mxu0
    %1451 = vmatprep.mubr.f32.mxu0 0.0
    %1452 = vmatmul.mubr.f32.gmra.mrb[0].mxu0 %v1357
    %v1453 = vpop.f32.mrb[0].mxu0
    %v1454 = vadd.f32 0.0, %v1453
    %v1455 = vpop.f32.mrb[0].mxu0
    %1456 = vmatprep.mubr.f32.mxu0 0.0
    %1457 = vmatmul.mubr.f32.gmra.mrb[0].mxu0 %v1359
    %v1458 = vpop.f32.mrb[0].mxu0
    %v1459 = vadd.f32 0.0, %v1458
    %v1460 = vpop.f32.mrb[0].mxu0
    %1461 = vmatprep.mubr.f32.mxu0 0.0
    %1462 = vmatmul.mubr.f32.gmra.mrb[0].mxu0 %v1361
    %v1463 = vpop.f32.mrb[0].mxu0
    %v1464 = vadd.f32 0.0, %v1463
    %v1465 = vpop.f32.mrb[0].mxu0
    %1466 = vmatprep.mubr.f32.mxu0 0.0
    %1467 = vmatmul.mubr.f32.gmra.mrb[0].mxu0 %v1363
    %v1468 = vpop.f32.mrb[0].mxu0
    %v1469 = vadd.f32 0.0, %v1468
    %v1470 = vpop.f32.mrb[0].mxu0
    %1471 = vdwg.mxu0
    %v1472 = vsel %vm363, %v1444, -1e+30
    %v1473 = vsel %vm364, %v1449, -1e+30
    %v1474 = vsel %vm365, %v1454, -1e+30
    %v1475 = vsel %vm366, %v1459, -1e+30
    %v1476 = vsel %vm367, %v1464, -1e+30
    %v1477 = vsel %vm368, %v1469, -1e+30
    %v1478 = vsel %vm736, %v1472, -inf
    %1479 = vmax.xlane.f32.xlu0 %v1478
    %v1480 = vpop.xlane.xlu0 %1479
    %v1481 = vsel %vm736, %v1473, -inf
    %1482 = vmax.xlane.f32.xlu0 %v1481
    %v1483 = vpop.xlane.xlu0 %1482
    %v1484 = vsel %vm736, %v1474, -inf
    %1485 = vmax.xlane.f32.xlu0 %v1484
    %v1486 = vpop.xlane.xlu0 %1485
    %v1487 = vsel %vm736, %v1475, -inf
    %1488 = vmax.xlane.f32.xlu0 %v1487
    %v1489 = vpop.xlane.xlu0 %1488
    %v1490 = vsel %vm736, %v1476, -inf
    %1491 = vmax.xlane.f32.xlu0 %v1490
    %v1492 = vpop.xlane.xlu0 %1491
    %v1493 = vsel %vm736, %v1477, -inf
    %1494 = vmax.xlane.f32.xlu0 %v1493
    %v1495 = vpop.xlane.xlu0 %1494
    %v1496 = vsub.f32 %v1472, %v1480
    %v1497 = vsub.f32 %v1473, %v1483
    %v1498 = vsub.f32 %v1474, %v1486
    %v1499 = vsub.f32 %v1475, %v1489
    %v1500 = vsub.f32 %v1476, %v1492
    %v1501 = vsub.f32 %v1477, %v1495
    %v1502 = vmul.f32 %v1496, 1.442695
    %v1503 = vpow.pop %v1502
    %v1504 = vmul.f32 %v1497, 1.442695
    %v1505 = vpow.pop %v1504
    %v1506 = vmul.f32 %v1498, 1.442695
    %v1507 = vpow.pop %v1506
    %v1508 = vmul.f32 %v1499, 1.442695
    %v1509 = vpow.pop %v1508
    %v1510 = vmul.f32 %v1500, 1.442695
    %v1511 = vpow.pop %v1510
    %v1512 = vmul.f32 %v1501, 1.442695
    %v1513 = vpow.pop %v1512
    %v1514 = vsel %vm736, %v1503, 0.0
    %1515 = vadd.xlane.f32.xlu0 %v1514
    %v1516 = vpop.xlane.xlu0 %1515
    %v1517 = vsel %vm736, %v1505, 0.0
    %1518 = vadd.xlane.f32.xlu0 %v1517
    %v1519 = vpop.xlane.xlu0 %1518
    %v1520 = vsel %vm736, %v1507, 0.0
    %1521 = vadd.xlane.f32.xlu0 %v1520
    %v1522 = vpop.xlane.xlu0 %1521
    %v1523 = vsel %vm736, %v1509, 0.0
    %1524 = vadd.xlane.f32.xlu0 %v1523
    %v1525 = vpop.xlane.xlu0 %1524
    %v1526 = vsel %vm736, %v1511, 0.0
    %1527 = vadd.xlane.f32.xlu0 %v1526
    %v1528 = vpop.xlane.xlu0 %1527
    %v1529 = vsel %vm736, %v1513, 0.0
    %1530 = vadd.xlane.f32.xlu0 %v1529
    %v1531 = vpop.xlane.xlu0 %1530
    %v1532 = vrcp.pop %v1516
    %v1533 = vmul.f32 1.0, %v1532
    %v1534 = vrcp.pop %v1519
    %v1535 = vmul.f32 1.0, %v1534
    %v1536 = vrcp.pop %v1522
    %v1537 = vmul.f32 1.0, %v1536
    %v1538 = vrcp.pop %v1525
    %v1539 = vmul.f32 1.0, %v1538
    %v1540 = vrcp.pop %v1528
    %v1541 = vmul.f32 1.0, %v1540
    %v1542 = vrcp.pop %v1531
    %v1543 = vmul.f32 1.0, %v1542
    %v1544 = vmul.f32 %v1503, %v1533
    %v1545 = vmul.f32 %v1505, %v1535
    %v1546 = vmul.f32 %v1507, %v1537
    %v1547 = vmul.f32 %v1509, %v1539
    %v1548 = vmul.f32 %v1511, %v1541
    %v1549 = vmul.f32 %v1513, %v1543
    %1550 = vrot.lane.b32.xlu0 %v564, 48
    %v1551 = vpop.permute.xlu0 %1550
    %1552 = vrot.lane.b32.xlu0 %v569, 48
    %v1553 = vpop.permute.xlu0 %1552
    %1554 = vrot.lane.b32.xlu0 %v574, 48
    %v1555 = vpop.permute.xlu0 %1554
    %1556 = vrot.lane.b32.xlu0 %v579, 48
    %v1557 = vpop.permute.xlu0 %1556
    %1558 = vrot.lane.b32.xlu0 %v584, 48
    %v1559 = vpop.permute.xlu0 %1558
    %1560 = vrot.lane.b32.xlu0 %v589, 48
    %v1561 = vpop.permute.xlu0 %1560
    %v1569 = vsel %vm736, %v1544, 0
    %v1572 = vsel %vm736, %v1545, 0
    %v1575 = vsel %vm736, %v1546, 0
    %v1578 = vsel %vm736, %v1547, 0
    %v1581 = vsel %vm736, %v1548, 0
    %v1584 = vsel %vm736, %v1549, 0
    %1586 = vmatprep.subr.mxu0 0.0
    %1587 = vmatpush1.msra.mxu0 %v1551
    %1588 = vmatprep.subr.mxu0 0.0
    %1589 = vmatpush1.msra.mxu0 %v1553
    %1590 = vmatprep.subr.mxu0 0.0
    %1591 = vmatpush1.msra.mxu0 %v1555
    %1592 = vmatprep.subr.mxu0 0.0
    %1593 = vmatpush1.msra.mxu0 %v1557
    %1594 = vmatprep.subr.mxu0 0.0
    %1595 = vmatpush1.msra.mxu0 %v1559
    %1596 = vmatprep.subr.mxu0 0.0
    %1597 = vmatpush1.msra.mxu0 %v1561
    %1598 = vmatprep.subr.mxu0 0.0
    %1599 = vmatpush1.msra.mxu0 0.0
    %1600 = vmatprep.subr.mxu0 0.0
    %1601 = vmatpush1.msra.mxu0 0.0
    %1602 = vmatprep.subr.mxu0 0.0
    %1603 = vmatpush1.msra.mxu0 0.0
    %1604 = vmatprep.subr.mxu0 0.0
    %1605 = vmatpush1.msra.mxu0 0.0
    %1606 = vmatprep.subr.mxu0 0.0
    %1607 = vmatpush1.msra.mxu0 0.0
    %1608 = vmatprep.subr.mxu0 0.0
    %1609 = vmatpush1.msra.mxu0 0.0
    %1610 = vmatprep.subr.mxu0 0.0
    %1611 = vmatpush1.msra.mxu0 0.0
    %1612 = vmatprep.subr.mxu0 0.0
    %1613 = vmatpush1.msra.mxu0 0.0
    %1614 = vmatprep.subr.mxu0 0.0
    %1615 = vmatpush1.msra.mxu0 0.0
    %1616 = vmatprep.subr.mxu0 0.0
    %1617 = vmatpush1.msra.mxu0 0.0
    %1618 = vmatprep.subr.mxu0 0.0
    %1619 = vmatpush1.msra.mxu0 0.0
    %1620 = vmatprep.subr.mxu0 0.0
    %1621 = vmatpush1.msra.mxu0 0.0
    %1622 = vmatprep.subr.mxu0 0.0
    %1623 = vmatpush1.msra.mxu0 0.0
    %1624 = vmatprep.subr.mxu0 0.0
    %1625 = vmatpush1.msra.mxu0 0.0
    %1626 = vmatprep.subr.mxu0 0.0
    %1627 = vmatpush1.msra.mxu0 0.0
    %1628 = vmatprep.subr.mxu0 0.0
    %1629 = vmatpush1.msra.mxu0 0.0
    %1630 = vmatprep.subr.mxu0 0.0
    %1631 = vmatpush1.msra.mxu0 0.0
    %1632 = vmatprep.subr.mxu0 0.0
    %1633 = vmatpush1.msra.mxu0 0.0
    %1634 = vmatprep.subr.mxu0 0.0
    %1635 = vmatpush1.msra.mxu0 0.0
    %1636 = vmatprep.subr.mxu0 0.0
    %1637 = vmatpush1.msra.mxu0 0.0
    %1638 = vmatprep.subr.mxu0 0.0
    %1639 = vmatpush1.msra.mxu0 0.0
    %1640 = vmatprep.subr.mxu0 0.0
    %1641 = vmatpush1.msra.mxu0 0.0
    %1642 = vmatprep.subr.mxu0 0.0
    %1643 = vmatpush1.msra.mxu0 0.0
    %1644 = vmatprep.subr.mxu0 0.0
    %1645 = vmatpush1.msra.mxu0 0.0
    %1646 = vmatprep.subr.mxu0 0.0
    %1647 = vmatpush1.msra.mxu0 0.0
    %1648 = vmatprep.subr.mxu0 0.0
    %1649 = vmatpush1.msra.mxu0 0.0
    %1650 = vmatprep.mubr.f32.mxu0 0.0
    %1651 = vmatmul.mubr.f32.gmra.mrb[0].mxu0 %v1569
    %v1652 = vpop.f32.mrb[0].mxu0
    %v1653 = vadd.f32 0.0, %v1652
    %v1654 = vpop.f32.mrb[0].mxu0
    %1655 = vmatprep.mubr.f32.mxu0 0.0
    %1656 = vmatmul.mubr.f32.gmra.mrb[0].mxu0 %v1572
    %v1657 = vpop.f32.mrb[0].mxu0
    %v1658 = vadd.f32 0.0, %v1657
    %v1659 = vpop.f32.mrb[0].mxu0
    %1660 = vmatprep.mubr.f32.mxu0 0.0
    %1661 = vmatmul.mubr.f32.gmra.mrb[0].mxu0 %v1575
    %v1662 = vpop.f32.mrb[0].mxu0
    %v1663 = vadd.f32 0.0, %v1662
    %v1664 = vpop.f32.mrb[0].mxu0
    %1665 = vmatprep.mubr.f32.mxu0 0.0
    %1666 = vmatmul.mubr.f32.gmra.mrb[0].mxu0 %v1578
    %v1667 = vpop.f32.mrb[0].mxu0
    %v1668 = vadd.f32 0.0, %v1667
    %v1669 = vpop.f32.mrb[0].mxu0
    %1670 = vmatprep.mubr.f32.mxu0 0.0
    %1671 = vmatmul.mubr.f32.gmra.mrb[0].mxu0 %v1581
    %v1672 = vpop.f32.mrb[0].mxu0
    %v1673 = vadd.f32 0.0, %v1672
    %v1674 = vpop.f32.mrb[0].mxu0
    %1675 = vmatprep.mubr.f32.mxu0 0.0
    %1676 = vmatmul.mubr.f32.gmra.mrb[0].mxu0 %v1584
    %v1677 = vpop.f32.mrb[0].mxu0
    %v1678 = vadd.f32 0.0, %v1677
    %v1679 = vpop.f32.mrb[0].mxu0
    %1680 = vdwg.mxu0
    %1687 = vrot.lane.b32.xlu0 %v1653, 16
    %v1688 = vpop.permute.xlu0 %1687
    %1689 = vrot.lane.b32.xlu0 %v1658, 16
    %v1690 = vpop.permute.xlu0 %1689
    %1691 = vrot.lane.b32.xlu0 %v1663, 16
    %v1692 = vpop.permute.xlu0 %1691
    %1693 = vrot.lane.b32.xlu0 %v1668, 16
    %v1694 = vpop.permute.xlu0 %1693
    %1695 = vrot.lane.b32.xlu0 %v1673, 16
    %v1696 = vpop.permute.xlu0 %1695
    %1697 = vrot.lane.b32.xlu0 %v1678, 16
    %v1698 = vpop.permute.xlu0 %1697
    %vm1705 = vcmask 195712
    %1706 = vst.msk [vmem:[#allocation3] sm:$0xff] %vm1705, %v1688
    %1707 = vst.msk [vmem:[#allocation3 + $0x8] sm:$0xff] %vm1705, %v1690
    %1708 = vst.msk [vmem:[#allocation3 + $0x10] sm:$0xff] %vm1705, %v1692
    %1709 = vst.msk [vmem:[#allocation3 + $0x18] sm:$0xff] %vm1705, %v1694
    %1710 = vst.msk [vmem:[#allocation3 + $0x20] sm:$0xff] %vm1705, %v1696
    %1711 = vst.msk [vmem:[#allocation3 + $0x28] sm:$0xff] %vm1705, %v1698
    %1712 = vrot.lane.b32.xlu0 %v564, 104
    %v1713 = vpop.permute.xlu0 %1712
    %1714 = vrot.lane.b32.xlu0 %v569, 104
    %v1715 = vpop.permute.xlu0 %1714
    %1716 = vrot.lane.b32.xlu0 %v574, 104
    %v1717 = vpop.permute.xlu0 %1716
    %1718 = vrot.lane.b32.xlu0 %v579, 104
    %v1719 = vpop.permute.xlu0 %1718
    %1720 = vrot.lane.b32.xlu0 %v584, 104
    %v1721 = vpop.permute.xlu0 %1720
    %1722 = vrot.lane.b32.xlu0 %v589, 104
    %v1723 = vpop.permute.xlu0 %1722
    %1724 = vrot.lane.b32.xlu0 %v564, 72
    %v1725 = vpop.permute.xlu0 %1724
    %1726 = vrot.lane.b32.xlu0 %v569, 72
    %v1727 = vpop.permute.xlu0 %1726
    %1728 = vrot.lane.b32.xlu0 %v574, 72
    %v1729 = vpop.permute.xlu0 %1728
    %1730 = vrot.lane.b32.xlu0 %v579, 72
    %v1731 = vpop.permute.xlu0 %1730
    %1732 = vrot.lane.b32.xlu0 %v584, 72
    %v1733 = vpop.permute.xlu0 %1732
    %1734 = vrot.lane.b32.xlu0 %v589, 72
    %v1735 = vpop.permute.xlu0 %1734
    %v1736 = vsel %vm610, %v1713, 0
    %v1738 = vsel %vm610, %v1715, 0
    %v1740 = vsel %vm610, %v1717, 0
    %v1742 = vsel %vm610, %v1719, 0
    %v1744 = vsel %vm610, %v1721, 0
    %v1746 = vsel %vm610, %v1723, 0
    %v1748 = vsel %vm610, %v1725, 0
    %v1750 = vsel %vm610, %v1727, 0
    %v1752 = vsel %vm610, %v1729, 0
    %v1754 = vsel %vm610, %v1731, 0
    %v1756 = vsel %vm610, %v1733, 0
    %v1758 = vsel %vm610, %v1735, 0
    %1760 = vmatprep.subr.mxu0 0.0
    %1761 = vmatpush1.xpose.msra.mxu0 %v1748
    %1762 = vmatprep.subr.mxu0 0.0
    %1763 = vmatpush1.xpose.msra.mxu0 %v1750
    %1764 = vmatprep.subr.mxu0 0.0
    %1765 = vmatpush1.xpose.msra.mxu0 %v1752
    %1766 = vmatprep.subr.mxu0 0.0
    %1767 = vmatpush1.xpose.msra.mxu0 %v1754
    %1768 = vmatprep.subr.mxu0 0.0
    %1769 = vmatpush1.xpose.msra.mxu0 %v1756
    %1770 = vmatprep.subr.mxu0 0.0
    %1771 = vmatpush1.xpose.msra.mxu0 %v1758
    %1772 = vmatprep.subr.mxu0 0.0
    %1773 = vmatpush1.xpose.msra.mxu0 0.0
    %1774 = vmatprep.subr.mxu0 0.0
    %1775 = vmatpush1.xpose.msra.mxu0 0.0
    %1776 = vmatprep.subr.mxu0 0.0
    %1777 = vmatpush1.xpose.msra.mxu0 0.0
    %1778 = vmatprep.subr.mxu0 0.0
    %1779 = vmatpush1.xpose.msra.mxu0 0.0
    %1780 = vmatprep.subr.mxu0 0.0
    %1781 = vmatpush1.xpose.msra.mxu0 0.0
    %1782 = vmatprep.subr.mxu0 0.0
    %1783 = vmatpush1.xpose.msra.mxu0 0.0
    %1784 = vmatprep.subr.mxu0 0.0
    %1785 = vmatpush1.xpose.msra.mxu0 0.0
    %1786 = vmatprep.subr.mxu0 0.0
    %1787 = vmatpush1.xpose.msra.mxu0 0.0
    %1788 = vmatprep.subr.mxu0 0.0
    %1789 = vmatpush1.xpose.msra.mxu0 0.0
    %1790 = vmatprep.subr.mxu0 0.0
    %1791 = vmatpush1.xpose.msra.mxu0 0.0
    %1792 = vmatprep.subr.mxu0 0.0
    %1793 = vmatpush1.xpose.msra.mxu0 0.0
    %1794 = vmatprep.subr.mxu0 0.0
    %1795 = vmatpush1.xpose.msra.mxu0 0.0
    %1796 = vmatprep.subr.mxu0 0.0
    %1797 = vmatpush1.xpose.msra.mxu0 0.0
    %1798 = vmatprep.subr.mxu0 0.0
    %1799 = vmatpush1.xpose.msra.mxu0 0.0
    %1800 = vmatprep.subr.mxu0 0.0
    %1801 = vmatpush1.xpose.msra.mxu0 0.0
    %1802 = vmatprep.subr.mxu0 0.0
    %1803 = vmatpush1.xpose.msra.mxu0 0.0
    %1804 = vmatprep.subr.mxu0 0.0
    %1805 = vmatpush1.xpose.msra.mxu0 0.0
    %1806 = vmatprep.subr.mxu0 0.0
    %1807 = vmatpush1.xpose.msra.mxu0 0.0
    %1808 = vmatprep.subr.mxu0 0.0
    %1809 = vmatpush1.xpose.msra.mxu0 0.0
    %1810 = vmatprep.subr.mxu0 0.0
    %1811 = vmatpush1.xpose.msra.mxu0 0.0
    %1812 = vmatprep.subr.mxu0 0.0
    %1813 = vmatpush1.xpose.msra.mxu0 0.0
    %1814 = vmatprep.subr.mxu0 0.0
    %1815 = vmatpush1.xpose.msra.mxu0 0.0
    %1816 = vmatprep.subr.mxu0 0.0
    %1817 = vmatpush1.xpose.msra.mxu0 0.0
    %1818 = vmatprep.subr.mxu0 0.0
    %1819 = vmatpush1.xpose.msra.mxu0 0.0
    %1820 = vmatprep.subr.mxu0 0.0
    %1821 = vmatpush1.xpose.msra.mxu0 0.0
    %1822 = vmatprep.subr.mxu0 0.0
    %1823 = vmatpush1.xpose.msra.mxu0 0.0
    %1824 = vmatprep.mubr.f32.mxu0 0.0
    %1825 = vmatmul.mubr.f32.gmra.mrb[0].mxu0 %v1736
    %v1826 = vpop.f32.mrb[0].mxu0
    %v1827 = vadd.f32 0.0, %v1826
    %v1828 = vpop.f32.mrb[0].mxu0
    %1829 = vmatprep.mubr.f32.mxu0 0.0
    %1830 = vmatmul.mubr.f32.gmra.mrb[0].mxu0 %v1738
    %v1831 = vpop.f32.mrb[0].mxu0
    %v1832 = vadd.f32 0.0, %v1831
    %v1833 = vpop.f32.mrb[0].mxu0
    %1834 = vmatprep.mubr.f32.mxu0 0.0
    %1835 = vmatmul.mubr.f32.gmra.mrb[0].mxu0 %v1740
    %v1836 = vpop.f32.mrb[0].mxu0
    %v1837 = vadd.f32 0.0, %v1836
    %v1838 = vpop.f32.mrb[0].mxu0
    %1839 = vmatprep.mubr.f32.mxu0 0.0
    %1840 = vmatmul.mubr.f32.gmra.mrb[0].mxu0 %v1742
    %v1841 = vpop.f32.mrb[0].mxu0
    %v1842 = vadd.f32 0.0, %v1841
    %v1843 = vpop.f32.mrb[0].mxu0
    %1844 = vmatprep.mubr.f32.mxu0 0.0
    %1845 = vmatmul.mubr.f32.gmra.mrb[0].mxu0 %v1744
    %v1846 = vpop.f32.mrb[0].mxu0
    %v1847 = vadd.f32 0.0, %v1846
    %v1848 = vpop.f32.mrb[0].mxu0
    %1849 = vmatprep.mubr.f32.mxu0 0.0
    %1850 = vmatmul.mubr.f32.gmra.mrb[0].mxu0 %v1746
    %v1851 = vpop.f32.mrb[0].mxu0
    %v1852 = vadd.f32 0.0, %v1851
    %v1853 = vpop.f32.mrb[0].mxu0
    %1854 = vdwg.mxu0
    %v1855 = vsel %vm363, %v1827, -1e+30
    %v1856 = vsel %vm364, %v1832, -1e+30
    %v1857 = vsel %vm365, %v1837, -1e+30
    %v1858 = vsel %vm366, %v1842, -1e+30
    %v1859 = vsel %vm367, %v1847, -1e+30
    %v1860 = vsel %vm368, %v1852, -1e+30
    %v1861 = vsel %vm736, %v1855, -inf
    %1862 = vmax.xlane.f32.xlu0 %v1861
    %v1863 = vpop.xlane.xlu0 %1862
    %v1864 = vsel %vm736, %v1856, -inf
    %1865 = vmax.xlane.f32.xlu0 %v1864
    %v1866 = vpop.xlane.xlu0 %1865
    %v1867 = vsel %vm736, %v1857, -inf
    %1868 = vmax.xlane.f32.xlu0 %v1867
    %v1869 = vpop.xlane.xlu0 %1868
    %v1870 = vsel %vm736, %v1858, -inf
    %1871 = vmax.xlane.f32.xlu0 %v1870
    %v1872 = vpop.xlane.xlu0 %1871
    %v1873 = vsel %vm736, %v1859, -inf
    %1874 = vmax.xlane.f32.xlu0 %v1873
    %v1875 = vpop.xlane.xlu0 %1874
    %v1876 = vsel %vm736, %v1860, -inf
    %1877 = vmax.xlane.f32.xlu0 %v1876
    %v1878 = vpop.xlane.xlu0 %1877
    %v1879 = vsub.f32 %v1855, %v1863
    %v1880 = vsub.f32 %v1856, %v1866
    %v1881 = vsub.f32 %v1857, %v1869
    %v1882 = vsub.f32 %v1858, %v1872
    %v1883 = vsub.f32 %v1859, %v1875
    %v1884 = vsub.f32 %v1860, %v1878
    %v1885 = vmul.f32 %v1879, 1.442695
    %v1886 = vpow.pop %v1885
    %v1887 = vmul.f32 %v1880, 1.442695
    %v1888 = vpow.pop %v1887
    %v1889 = vmul.f32 %v1881, 1.442695
    %v1890 = vpow.pop %v1889
    %v1891 = vmul.f32 %v1882, 1.442695
    %v1892 = vpow.pop %v1891
    %v1893 = vmul.f32 %v1883, 1.442695
    %v1894 = vpow.pop %v1893
    %v1895 = vmul.f32 %v1884, 1.442695
    %v1896 = vpow.pop %v1895
    %v1897 = vsel %vm736, %v1886, 0.0
    %1898 = vadd.xlane.f32.xlu0 %v1897
    %v1899 = vpop.xlane.xlu0 %1898
    %v1900 = vsel %vm736, %v1888, 0.0
    %1901 = vadd.xlane.f32.xlu0 %v1900
    %v1902 = vpop.xlane.xlu0 %1901
    %v1903 = vsel %vm736, %v1890, 0.0
    %1904 = vadd.xlane.f32.xlu0 %v1903
    %v1905 = vpop.xlane.xlu0 %1904
    %v1906 = vsel %vm736, %v1892, 0.0
    %1907 = vadd.xlane.f32.xlu0 %v1906
    %v1908 = vpop.xlane.xlu0 %1907
    %v1909 = vsel %vm736, %v1894, 0.0
    %1910 = vadd.xlane.f32.xlu0 %v1909
    %v1911 = vpop.xlane.xlu0 %1910
    %v1912 = vsel %vm736, %v1896, 0.0
    %1913 = vadd.xlane.f32.xlu0 %v1912
    %v1914 = vpop.xlane.xlu0 %1913
    %v1915 = vrcp.pop %v1899
    %v1916 = vmul.f32 1.0, %v1915
    %v1917 = vrcp.pop %v1902
    %v1918 = vmul.f32 1.0, %v1917
    %v1919 = vrcp.pop %v1905
    %v1920 = vmul.f32 1.0, %v1919
    %v1921 = vrcp.pop %v1908
    %v1922 = vmul.f32 1.0, %v1921
    %v1923 = vrcp.pop %v1911
    %v1924 = vmul.f32 1.0, %v1923
    %v1925 = vrcp.pop %v1914
    %v1926 = vmul.f32 1.0, %v1925
    %v1927 = vmul.f32 %v1886, %v1916
    %v1928 = vmul.f32 %v1888, %v1918
    %v1929 = vmul.f32 %v1890, %v1920
    %v1930 = vmul.f32 %v1892, %v1922
    %v1931 = vmul.f32 %v1894, %v1924
    %v1932 = vmul.f32 %v1896, %v1926
    %1933 = vrot.lane.b32.xlu0 %v564, 40
    %v1934 = vpop.permute.xlu0 %1933
    %1935 = vrot.lane.b32.xlu0 %v569, 40
    %v1936 = vpop.permute.xlu0 %1935
    %1937 = vrot.lane.b32.xlu0 %v574, 40
    %v1938 = vpop.permute.xlu0 %1937
    %1939 = vrot.lane.b32.xlu0 %v579, 40
    %v1940 = vpop.permute.xlu0 %1939
    %1941 = vrot.lane.b32.xlu0 %v584, 40
    %v1942 = vpop.permute.xlu0 %1941
    %1943 = vrot.lane.b32.xlu0 %v589, 40
    %v1944 = vpop.permute.xlu0 %1943
    %v1952 = vsel %vm736, %v1927, 0
    %v1955 = vsel %vm736, %v1928, 0
    %v1958 = vsel %vm736, %v1929, 0
    %v1961 = vsel %vm736, %v1930, 0
    %v1964 = vsel %vm736, %v1931, 0
    %v1967 = vsel %vm736, %v1932, 0
    %1969 = vmatprep.subr.mxu0 0.0
    %1970 = vmatpush1.msra.mxu0 %v1934
    %1971 = vmatprep.subr.mxu0 0.0
    %1972 = vmatpush1.msra.mxu0 %v1936
    %1973 = vmatprep.subr.mxu0 0.0
    %1974 = vmatpush1.msra.mxu0 %v1938
    %1975 = vmatprep.subr.mxu0 0.0
    %1976 = vmatpush1.msra.mxu0 %v1940
    %1977 = vmatprep.subr.mxu0 0.0
    %1978 = vmatpush1.msra.mxu0 %v1942
    %1979 = vmatprep.subr.mxu0 0.0
    %1980 = vmatpush1.msra.mxu0 %v1944
    %1981 = vmatprep.subr.mxu0 0.0
    %1982 = vmatpush1.msra.mxu0 0.0
    %1983 = vmatprep.subr.mxu0 0.0
    %1984 = vmatpush1.msra.mxu0 0.0
    %1985 = vmatprep.subr.mxu0 0.0
    %1986 = vmatpush1.msra.mxu0 0.0
    %1987 = vmatprep.subr.mxu0 0.0
    %1988 = vmatpush1.msra.mxu0 0.0
    %1989 = vmatprep.subr.mxu0 0.0
    %1990 = vmatpush1.msra.mxu0 0.0
    %1991 = vmatprep.subr.mxu0 0.0
    %1992 = vmatpush1.msra.mxu0 0.0
    %1993 = vmatprep.subr.mxu0 0.0
    %1994 = vmatpush1.msra.mxu0 0.0
    %1995 = vmatprep.subr.mxu0 0.0
    %1996 = vmatpush1.msra.mxu0 0.0
    %1997 = vmatprep.subr.mxu0 0.0
    %1998 = vmatpush1.msra.mxu0 0.0
    %1999 = vmatprep.subr.mxu0 0.0
    %2000 = vmatpush1.msra.mxu0 0.0
    %2001 = vmatprep.subr.mxu0 0.0
    %2002 = vmatpush1.msra.mxu0 0.0
    %2003 = vmatprep.subr.mxu0 0.0
    %2004 = vmatpush1.msra.mxu0 0.0
    %2005 = vmatprep.subr.mxu0 0.0
    %2006 = vmatpush1.msra.mxu0 0.0
    %2007 = vmatprep.subr.mxu0 0.0
    %2008 = vmatpush1.msra.mxu0 0.0
    %2009 = vmatprep.subr.mxu0 0.0
    %2010 = vmatpush1.msra.mxu0 0.0
    %2011 = vmatprep.subr.mxu0 0.0
    %2012 = vmatpush1.msra.mxu0 0.0
    %2013 = vmatprep.subr.mxu0 0.0
    %2014 = vmatpush1.msra.mxu0 0.0
    %2015 = vmatprep.subr.mxu0 0.0
    %2016 = vmatpush1.msra.mxu0 0.0
    %2017 = vmatprep.subr.mxu0 0.0
    %2018 = vmatpush1.msra.mxu0 0.0
    %2019 = vmatprep.subr.mxu0 0.0
    %2020 = vmatpush1.msra.mxu0 0.0
    %2021 = vmatprep.subr.mxu0 0.0
    %2022 = vmatpush1.msra.mxu0 0.0
    %2023 = vmatprep.subr.mxu0 0.0
    %2024 = vmatpush1.msra.mxu0 0.0
    %2025 = vmatprep.subr.mxu0 0.0
    %2026 = vmatpush1.msra.mxu0 0.0
    %2027 = vmatprep.subr.mxu0 0.0
    %2028 = vmatpush1.msra.mxu0 0.0
    %2029 = vmatprep.subr.mxu0 0.0
    %2030 = vmatpush1.msra.mxu0 0.0
    %2031 = vmatprep.subr.mxu0 0.0
    %2032 = vmatpush1.msra.mxu0 0.0
    %2033 = vmatprep.mubr.f32.mxu0 0.0
    %2034 = vmatmul.mubr.f32.gmra.mrb[0].mxu0 %v1952
    %v2035 = vpop.f32.mrb[0].mxu0
    %v2036 = vadd.f32 0.0, %v2035
    %v2037 = vpop.f32.mrb[0].mxu0
    %2038 = vmatprep.mubr.f32.mxu0 0.0
    %2039 = vmatmul.mubr.f32.gmra.mrb[0].mxu0 %v1955
    %v2040 = vpop.f32.mrb[0].mxu0
    %v2041 = vadd.f32 0.0, %v2040
    %v2042 = vpop.f32.mrb[0].mxu0
    %2043 = vmatprep.mubr.f32.mxu0 0.0
    %2044 = vmatmul.mubr.f32.gmra.mrb[0].mxu0 %v1958
    %v2045 = vpop.f32.mrb[0].mxu0
    %v2046 = vadd.f32 0.0, %v2045
    %v2047 = vpop.f32.mrb[0].mxu0
    %2048 = vmatprep.mubr.f32.mxu0 0.0
    %2049 = vmatmul.mubr.f32.gmra.mrb[0].mxu0 %v1961
    %v2050 = vpop.f32.mrb[0].mxu0
    %v2051 = vadd.f32 0.0, %v2050
    %v2052 = vpop.f32.mrb[0].mxu0
    %2053 = vmatprep.mubr.f32.mxu0 0.0
    %2054 = vmatmul.mubr.f32.gmra.mrb[0].mxu0 %v1964
    %v2055 = vpop.f32.mrb[0].mxu0
    %v2056 = vadd.f32 0.0, %v2055
    %v2057 = vpop.f32.mrb[0].mxu0
    %2058 = vmatprep.mubr.f32.mxu0 0.0
    %2059 = vmatmul.mubr.f32.gmra.mrb[0].mxu0 %v1967
    %v2060 = vpop.f32.mrb[0].mxu0
    %v2061 = vadd.f32 0.0, %v2060
    %v2062 = vpop.f32.mrb[0].mxu0
    %2063 = vdwg.mxu0
    %2070 = vrot.lane.b32.xlu0 %v2036, 24
    %v2071 = vpop.permute.xlu0 %2070
    %2072 = vrot.lane.b32.xlu0 %v2041, 24
    %v2073 = vpop.permute.xlu0 %2072
    %2074 = vrot.lane.b32.xlu0 %v2046, 24
    %v2075 = vpop.permute.xlu0 %2074
    %2076 = vrot.lane.b32.xlu0 %v2051, 24
    %v2077 = vpop.permute.xlu0 %2076
    %2078 = vrot.lane.b32.xlu0 %v2056, 24
    %v2079 = vpop.permute.xlu0 %2078
    %2080 = vrot.lane.b32.xlu0 %v2061, 24
    %v2081 = vpop.permute.xlu0 %2080
    %vm2088 = vcmask 261312
    %2089 = vst.msk [vmem:[#allocation3] sm:$0xff] %vm2088, %v2071
    %2090 = vst.msk [vmem:[#allocation3 + $0x8] sm:$0xff] %vm2088, %v2073
    %2091 = vst.msk [vmem:[#allocation3 + $0x10] sm:$0xff] %vm2088, %v2075
    %2092 = vst.msk [vmem:[#allocation3 + $0x18] sm:$0xff] %vm2088, %v2077
    %2093 = vst.msk [vmem:[#allocation3 + $0x20] sm:$0xff] %vm2088, %v2079
    %2094 = vst.msk [vmem:[#allocation3 + $0x28] sm:$0xff] %vm2088, %v2081
    %v2095 = vld [vmem:[%s2 + $0x20] sm:$0xff]
    %v2096 = vld [vmem:[%s2 + $0x28] sm:$0xff]
    %v2097 = vld [vmem:[%s2 + $0x30] sm:$0xff]
    %v2098 = vld [vmem:[%s2 + $0x38] sm:$0xff]
    %v2099 = vld [vmem:[%s2 + $0xa2] sm:$0x1]
    %v2100 = vld [vmem:[#allocation2] sm:$0xff]
    %v2101 = vld [vmem:[#allocation2 + $0x8] sm:$0xff]
    %v2102 = vld [vmem:[#allocation2 + $0x10] sm:$0xff]
    %v2103 = vld [vmem:[#allocation2 + $0x18] sm:$0xff]
    %v2104 = vld [vmem:[#allocation2 + $0x20] sm:$0xff]
    %v2105 = vld [vmem:[#allocation2 + $0x28] sm:$0xff]
    %v2106 = vld [vmem:[#allocation3] sm:$0xff]
    %v2107 = vld [vmem:[#allocation3 + $0x8] sm:$0xff]
    %v2108 = vld [vmem:[#allocation3 + $0x10] sm:$0xff]
    %v2109 = vld [vmem:[#allocation3 + $0x18] sm:$0xff]
    %v2110 = vld [vmem:[#allocation3 + $0x20] sm:$0xff]
    %v2111 = vld [vmem:[#allocation3 + $0x28] sm:$0xff]
    %v2113 = vsel %vm203, %v2106, 0
    %v2116 = vsel %vm203, %v2107, 0
    %v2119 = vsel %vm203, %v2108, 0
    %v2122 = vsel %vm203, %v2109, 0
    %v2125 = vsel %vm203, %v2110, 0
    %v2128 = vsel %vm203, %v2111, 0
    %2130 = vmatprep.subr.mxu0 0.0
    %2131 = vmatpush1.msra.mxu0 %v2095
    %2132 = vmatprep.subr.mxu0 0.0
    %2133 = vmatpush1.msra.mxu0 %v2096
    %2134 = vmatprep.subr.mxu0 0.0
    %2135 = vmatpush1.msra.mxu0 %v2097
    %2136 = vmatprep.subr.mxu0 0.0
    %2137 = vmatpush1.msra.mxu0 %v2098
    %2138 = vmatprep.subr.mxu0 0.0
    %2139 = vmatpush1.msra.mxu0 0.0
    %2140 = vmatprep.subr.mxu0 0.0
    %2141 = vmatpush1.msra.mxu0 0.0
    %2142 = vmatprep.subr.mxu0 0.0
    %2143 = vmatpush1.msra.mxu0 0.0
    %2144 = vmatprep.subr.mxu0 0.0
    %2145 = vmatpush1.msra.mxu0 0.0
    %2146 = vmatprep.subr.mxu0 0.0
    %2147 = vmatpush1.msra.mxu0 0.0
    %2148 = vmatprep.subr.mxu0 0.0
    %2149 = vmatpush1.msra.mxu0 0.0
    %2150 = vmatprep.subr.mxu0 0.0
    %2151 = vmatpush1.msra.mxu0 0.0
    %2152 = vmatprep.subr.mxu0 0.0
    %2153 = vmatpush1.msra.mxu0 0.0
    %2154 = vmatprep.subr.mxu0 0.0
    %2155 = vmatpush1.msra.mxu0 0.0
    %2156 = vmatprep.subr.mxu0 0.0
    %2157 = vmatpush1.msra.mxu0 0.0
    %2158 = vmatprep.subr.mxu0 0.0
    %2159 = vmatpush1.msra.mxu0 0.0
    %2160 = vmatprep.subr.mxu0 0.0
    %2161 = vmatpush1.msra.mxu0 0.0
    %2162 = vmatprep.subr.mxu0 0.0
    %2163 = vmatpush1.msra.mxu0 0.0
    %2164 = vmatprep.subr.mxu0 0.0
    %2165 = vmatpush1.msra.mxu0 0.0
    %2166 = vmatprep.subr.mxu0 0.0
    %2167 = vmatpush1.msra.mxu0 0.0
    %2168 = vmatprep.subr.mxu0 0.0
    %2169 = vmatpush1.msra.mxu0 0.0
    %2170 = vmatprep.subr.mxu0 0.0
    %2171 = vmatpush1.msra.mxu0 0.0
    %2172 = vmatprep.subr.mxu0 0.0
    %2173 = vmatpush1.msra.mxu0 0.0
    %2174 = vmatprep.subr.mxu0 0.0
    %2175 = vmatpush1.msra.mxu0 0.0
    %2176 = vmatprep.subr.mxu0 0.0
    %2177 = vmatpush1.msra.mxu0 0.0
    %2178 = vmatprep.subr.mxu0 0.0
    %2179 = vmatpush1.msra.mxu0 0.0
    %2180 = vmatprep.subr.mxu0 0.0
    %2181 = vmatpush1.msra.mxu0 0.0
    %2182 = vmatprep.subr.mxu0 0.0
    %2183 = vmatpush1.msra.mxu0 0.0
    %2184 = vmatprep.subr.mxu0 0.0
    %2185 = vmatpush1.msra.mxu0 0.0
    %2186 = vmatprep.subr.mxu0 0.0
    %2187 = vmatpush1.msra.mxu0 0.0
    %2188 = vmatprep.subr.mxu0 0.0
    %2189 = vmatpush1.msra.mxu0 0.0
    %2190 = vmatprep.subr.mxu0 0.0
    %2191 = vmatpush1.msra.mxu0 0.0
    %2192 = vmatprep.subr.mxu0 0.0
    %2193 = vmatpush1.msra.mxu0 0.0
    %2194 = vmatprep.mubr.f32.mxu0 0.0
    %2195 = vmatmul.mubr.f32.gmra.mrb[0].mxu0 %v2113
    %v2196 = vpop.f32.mrb[0].mxu0
    %v2197 = vadd.f32 0.0, %v2196
    %v2198 = vpop.f32.mrb[0].mxu0
    %2199 = vmatprep.mubr.f32.mxu0 0.0
    %2200 = vmatmul.mubr.f32.gmra.mrb[0].mxu0 %v2116
    %v2201 = vpop.f32.mrb[0].mxu0
    %v2202 = vadd.f32 0.0, %v2201
    %v2203 = vpop.f32.mrb[0].mxu0
    %2204 = vmatprep.mubr.f32.mxu0 0.0
    %2205 = vmatmul.mubr.f32.gmra.mrb[0].mxu0 %v2119
    %v2206 = vpop.f32.mrb[0].mxu0
    %v2207 = vadd.f32 0.0, %v2206
    %v2208 = vpop.f32.mrb[0].mxu0
    %2209 = vmatprep.mubr.f32.mxu0 0.0
    %2210 = vmatmul.mubr.f32.gmra.mrb[0].mxu0 %v2122
    %v2211 = vpop.f32.mrb[0].mxu0
    %v2212 = vadd.f32 0.0, %v2211
    %v2213 = vpop.f32.mrb[0].mxu0
    %2214 = vmatprep.mubr.f32.mxu0 0.0
    %2215 = vmatmul.mubr.f32.gmra.mrb[0].mxu0 %v2125
    %v2216 = vpop.f32.mrb[0].mxu0
    %v2217 = vadd.f32 0.0, %v2216
    %v2218 = vpop.f32.mrb[0].mxu0
    %2219 = vmatprep.mubr.f32.mxu0 0.0
    %2220 = vmatmul.mubr.f32.gmra.mrb[0].mxu0 %v2128
    %v2221 = vpop.f32.mrb[0].mxu0
    %v2222 = vadd.f32 0.0, %v2221
    %v2223 = vpop.f32.mrb[0].mxu0
    %2224 = vdwg.mxu0
    %v2225 = vadd.f32 %v2100, %v2197
    %v2226 = vadd.f32 %v2101, %v2202
    %v2227 = vadd.f32 %v2102, %v2207
    %v2228 = vadd.f32 %v2103, %v2212
    %v2229 = vadd.f32 %v2104, %v2217
    %v2230 = vadd.f32 %v2105, %v2222
    %v2231 = vlaneseq
    %v2232 = vshrl.u32 %v2231, 7
    %v2233 = vsub.s32 0, %v2232
    %v2234 = vrot.slane %v2099, %v2233
    %v2235 = vadd.f32 %v2225, %v2234
    %v2236 = vadd.f32 %v2226, %v2234
    %v2237 = vadd.f32 %v2227, %v2234
    %v2238 = vadd.f32 %v2228, %v2234
    %v2239 = vadd.f32 %v2229, %v2234
    %v2240 = vadd.f32 %v2230, %v2234
    %2241 = vst.msk [vmem:[#allocation2] sm:$0xff] %vm203, %v2235
    %2242 = vst.msk [vmem:[#allocation2 + $0x8] sm:$0xff] %vm203, %v2236
    %2243 = vst.msk [vmem:[#allocation2 + $0x10] sm:$0xff] %vm203, %v2237
    %2244 = vst.msk [vmem:[#allocation2 + $0x18] sm:$0xff] %vm203, %v2238
    %2245 = vst.msk [vmem:[#allocation2 + $0x20] sm:$0xff] %vm203, %v2239
    %2246 = vst.msk [vmem:[#allocation2 + $0x28] sm:$0xff] %vm203, %v2240
    %v2247 = vld [vmem:[%s2 + $0xa3] sm:$0x1]
    %v2248 = vld [vmem:[%s2 + $0xa4] sm:$0x1]
    %v2249 = vld [vmem:[#allocation2] sm:$0xff]
    %v2250 = vld [vmem:[#allocation2 + $0x8] sm:$0xff]
    %v2251 = vld [vmem:[#allocation2 + $0x10] sm:$0xff]
    %v2252 = vld [vmem:[#allocation2 + $0x18] sm:$0xff]
    %v2253 = vld [vmem:[#allocation2 + $0x20] sm:$0xff]
    %v2254 = vld [vmem:[#allocation2 + $0x28] sm:$0xff]
    %v2255 = vsel %vm203, %v2249, 0.0
    %2256 = vadd.xlane.f32.xlu0 %v2255
    %v2257 = vpop.xlane.xlu0 %2256
    %v2258 = vsel %vm203, %v2250, 0.0
    %2259 = vadd.xlane.f32.xlu0 %v2258
    %v2260 = vpop.xlane.xlu0 %2259
    %v2261 = vsel %vm203, %v2251, 0.0
    %2262 = vadd.xlane.f32.xlu0 %v2261
    %v2263 = vpop.xlane.xlu0 %2262
    %v2264 = vsel %vm203, %v2252, 0.0
    %2265 = vadd.xlane.f32.xlu0 %v2264
    %v2266 = vpop.xlane.xlu0 %2265
    %v2267 = vsel %vm203, %v2253, 0.0
    %2268 = vadd.xlane.f32.xlu0 %v2267
    %v2269 = vpop.xlane.xlu0 %2268
    %v2270 = vsel %vm203, %v2254, 0.0
    %2271 = vadd.xlane.f32.xlu0 %v2270
    %v2272 = vpop.xlane.xlu0 %2271
    %v2273 = vmul.f32 %v2257, %v216
    %v2274 = vmul.f32 %v2260, %v216
    %v2275 = vmul.f32 %v2263, %v216
    %v2276 = vmul.f32 %v2266, %v216
    %v2277 = vmul.f32 %v2269, %v216
    %v2278 = vmul.f32 %v2272, %v216
    %v2279 = vsub.f32 %v2249, %v2273
    %v2280 = vsub.f32 %v2250, %v2274
    %v2281 = vsub.f32 %v2251, %v2275
    %v2282 = vsub.f32 %v2252, %v2276
    %v2283 = vsub.f32 %v2253, %v2277
    %v2284 = vsub.f32 %v2254, %v2278
    %v2285 = vmul.f32 %v2279, %v2279
    %v2286 = vmul.f32 %v2280, %v2280
    %v2287 = vmul.f32 %v2281, %v2281
    %v2288 = vmul.f32 %v2282, %v2282
    %v2289 = vmul.f32 %v2283, %v2283
    %v2290 = vmul.f32 %v2284, %v2284
    %v2291 = vsel %vm203, %v2285, 0.0
    %2292 = vadd.xlane.f32.xlu0 %v2291
    %v2293 = vpop.xlane.xlu0 %2292
    %v2294 = vsel %vm203, %v2286, 0.0
    %2295 = vadd.xlane.f32.xlu0 %v2294
    %v2296 = vpop.xlane.xlu0 %2295
    %v2297 = vsel %vm203, %v2287, 0.0
    %2298 = vadd.xlane.f32.xlu0 %v2297
    %v2299 = vpop.xlane.xlu0 %2298
    %v2300 = vsel %vm203, %v2288, 0.0
    %2301 = vadd.xlane.f32.xlu0 %v2300
    %v2302 = vpop.xlane.xlu0 %2301
    %v2303 = vsel %vm203, %v2289, 0.0
    %2304 = vadd.xlane.f32.xlu0 %v2303
    %v2305 = vpop.xlane.xlu0 %2304
    %v2306 = vsel %vm203, %v2290, 0.0
    %2307 = vadd.xlane.f32.xlu0 %v2306
    %v2308 = vpop.xlane.xlu0 %2307
    %v2309 = vmul.f32 %v2293, %v216
    %v2310 = vmul.f32 %v2296, %v216
    %v2311 = vmul.f32 %v2299, %v216
    %v2312 = vmul.f32 %v2302, %v216
    %v2313 = vmul.f32 %v2305, %v216
    %v2314 = vmul.f32 %v2308, %v216
    %v2315 = vadd.f32 %v2309, 1e-05
    %v2316 = vadd.f32 %v2310, 1e-05
    %v2317 = vadd.f32 %v2311, 1e-05
    %v2318 = vadd.f32 %v2312, 1e-05
    %v2319 = vadd.f32 %v2313, 1e-05
    %v2320 = vadd.f32 %v2314, 1e-05
    %v2321 = vrsqrt.pop %v2315
    %v2322 = vrsqrt.pop %v2316
    %v2323 = vrsqrt.pop %v2317
    %v2324 = vrsqrt.pop %v2318
    %v2325 = vrsqrt.pop %v2319
    %v2326 = vrsqrt.pop %v2320
    %v2327 = vmul.f32 %v2279, %v2321
    %v2328 = vmul.f32 %v2280, %v2322
    %v2329 = vmul.f32 %v2281, %v2323
    %v2330 = vmul.f32 %v2282, %v2324
    %v2331 = vmul.f32 %v2283, %v2325
    %v2332 = vmul.f32 %v2284, %v2326
    %v2333 = vlaneseq
    %v2334 = vshrl.u32 %v2333, 7
    %v2335 = vsub.s32 0, %v2334
    %v2336 = vrot.slane %v2247, %v2335
    %v2337 = vmul.f32 %v2327, %v2336
    %v2338 = vmul.f32 %v2328, %v2336
    %v2339 = vmul.f32 %v2329, %v2336
    %v2340 = vmul.f32 %v2330, %v2336
    %v2341 = vmul.f32 %v2331, %v2336
    %v2342 = vmul.f32 %v2332, %v2336
    %v2343 = vlaneseq
    %v2344 = vshrl.u32 %v2343, 7
    %v2345 = vsub.s32 0, %v2344
    %v2346 = vrot.slane %v2248, %v2345
    %v2347 = vadd.f32 %v2337, %v2346
    %v2348 = vadd.f32 %v2338, %v2346
    %v2349 = vadd.f32 %v2339, %v2346
    %v2350 = vadd.f32 %v2340, %v2346
    %v2351 = vadd.f32 %v2341, %v2346
    %v2352 = vadd.f32 %v2342, %v2346
    %v2353 = vld [vmem:[%s2 + $0x40] sm:$0xff]
    %v2354 = vld [vmem:[%s2 + $0x48] sm:$0xff]
    %v2355 = vld [vmem:[%s2 + $0x50] sm:$0xff]
    %v2356 = vld [vmem:[%s2 + $0x58] sm:$0xff]
    %v2357 = vld [vmem:[%s2 + $0xa5] sm:$0x1]
    %v2358 = vlaneseq
    %v2359 = vshrl.u32 %v2358, 7
    %v2360 = vsub.s32 0, %v2359
    %v2361 = vrot.slane %v2357, %v2360
    %v2363 = vsel %vm203, %v2347, 0
    %v2366 = vsel %vm203, %v2348, 0
    %v2369 = vsel %vm203, %v2349, 0
    %v2372 = vsel %vm203, %v2350, 0
    %v2375 = vsel %vm203, %v2351, 0
    %v2378 = vsel %vm203, %v2352, 0
    %2380 = vmatprep.subr.mxu0 0.0
    %2381 = vmatpush1.msra.mxu0 %v2353
    %2382 = vmatprep.subr.mxu0 0.0
    %2383 = vmatpush1.msra.mxu0 %v2354
    %2384 = vmatprep.subr.mxu0 0.0
    %2385 = vmatpush1.msra.mxu0 %v2355
    %2386 = vmatprep.subr.mxu0 0.0
    %2387 = vmatpush1.msra.mxu0 %v2356
    %2388 = vmatprep.subr.mxu0 0.0
    %2389 = vmatpush1.msra.mxu0 0.0
    %2390 = vmatprep.subr.mxu0 0.0
    %2391 = vmatpush1.msra.mxu0 0.0
    %2392 = vmatprep.subr.mxu0 0.0
    %2393 = vmatpush1.msra.mxu0 0.0
    %2394 = vmatprep.subr.mxu0 0.0
    %2395 = vmatpush1.msra.mxu0 0.0
    %2396 = vmatprep.subr.mxu0 0.0
    %2397 = vmatpush1.msra.mxu0 0.0
    %2398 = vmatprep.subr.mxu0 0.0
    %2399 = vmatpush1.msra.mxu0 0.0
    %2400 = vmatprep.subr.mxu0 0.0
    %2401 = vmatpush1.msra.mxu0 0.0
    %2402 = vmatprep.subr.mxu0 0.0
    %2403 = vmatpush1.msra.mxu0 0.0
    %2404 = vmatprep.subr.mxu0 0.0
    %2405 = vmatpush1.msra.mxu0 0.0
    %2406 = vmatprep.subr.mxu0 0.0
    %2407 = vmatpush1.msra.mxu0 0.0
    %2408 = vmatprep.subr.mxu0 0.0
    %2409 = vmatpush1.msra.mxu0 0.0
    %2410 = vmatprep.subr.mxu0 0.0
    %2411 = vmatpush1.msra.mxu0 0.0
    %2412 = vmatprep.subr.mxu0 0.0
    %2413 = vmatpush1.msra.mxu0 0.0
    %2414 = vmatprep.subr.mxu0 0.0
    %2415 = vmatpush1.msra.mxu0 0.0
    %2416 = vmatprep.subr.mxu0 0.0
    %2417 = vmatpush1.msra.mxu0 0.0
    %2418 = vmatprep.subr.mxu0 0.0
    %2419 = vmatpush1.msra.mxu0 0.0
    %2420 = vmatprep.subr.mxu0 0.0
    %2421 = vmatpush1.msra.mxu0 0.0
    %2422 = vmatprep.subr.mxu0 0.0
    %2423 = vmatpush1.msra.mxu0 0.0
    %2424 = vmatprep.subr.mxu0 0.0
    %2425 = vmatpush1.msra.mxu0 0.0
    %2426 = vmatprep.subr.mxu0 0.0
    %2427 = vmatpush1.msra.mxu0 0.0
    %2428 = vmatprep.subr.mxu0 0.0
    %2429 = vmatpush1.msra.mxu0 0.0
    %2430 = vmatprep.subr.mxu0 0.0
    %2431 = vmatpush1.msra.mxu0 0.0
    %2432 = vmatprep.subr.mxu0 0.0
    %2433 = vmatpush1.msra.mxu0 0.0
    %2434 = vmatprep.subr.mxu0 0.0
    %2435 = vmatpush1.msra.mxu0 0.0
    %2436 = vmatprep.subr.mxu0 0.0
    %2437 = vmatpush1.msra.mxu0 0.0
    %2438 = vmatprep.subr.mxu0 0.0
    %2439 = vmatpush1.msra.mxu0 0.0
    %2440 = vmatprep.subr.mxu0 0.0
    %2441 = vmatpush1.msra.mxu0 0.0
    %2442 = vmatprep.subr.mxu0 0.0
    %2443 = vmatpush1.msra.mxu0 0.0
    %2444 = vmatprep.mubr.f32.mxu0 0.0
    %2445 = vmatmul.mubr.f32.gmra.mrb[0].mxu0 %v2363
    %v2446 = vpop.f32.mrb[0].mxu0
    %v2447 = vadd.f32 %v2361, %v2446
    %v2448 = vpop.f32.mrb[0].mxu0
    %2449 = vmatprep.mubr.f32.mxu0 0.0
    %2450 = vmatmul.mubr.f32.gmra.mrb[0].mxu0 %v2366
    %v2451 = vpop.f32.mrb[0].mxu0
    %v2452 = vadd.f32 %v2361, %v2451
    %v2453 = vpop.f32.mrb[0].mxu0
    %2454 = vmatprep.mubr.f32.mxu0 0.0
    %2455 = vmatmul.mubr.f32.gmra.mrb[0].mxu0 %v2369
    %v2456 = vpop.f32.mrb[0].mxu0
    %v2457 = vadd.f32 %v2361, %v2456
    %v2458 = vpop.f32.mrb[0].mxu0
    %2459 = vmatprep.mubr.f32.mxu0 0.0
    %2460 = vmatmul.mubr.f32.gmra.mrb[0].mxu0 %v2372
    %v2461 = vpop.f32.mrb[0].mxu0
    %v2462 = vadd.f32 %v2361, %v2461
    %v2463 = vpop.f32.mrb[0].mxu0
    %2464 = vmatprep.mubr.f32.mxu0 0.0
    %2465 = vmatmul.mubr.f32.gmra.mrb[0].mxu0 %v2375
    %v2466 = vpop.f32.mrb[0].mxu0
    %v2467 = vadd.f32 %v2361, %v2466
    %v2468 = vpop.f32.mrb[0].mxu0
    %2469 = vmatprep.mubr.f32.mxu0 0.0
    %2470 = vmatmul.mubr.f32.gmra.mrb[0].mxu0 %v2378
    %v2471 = vpop.f32.mrb[0].mxu0
    %v2472 = vadd.f32 %v2361, %v2471
    %v2473 = vpop.f32.mrb[0].mxu0
    %2474 = vdwg.mxu0
    %v2475 = vmul.f32 %v2447, 0.5
    %v2476 = vmul.f32 %v2452, 0.5
    %v2477 = vmul.f32 %v2457, 0.5
    %v2478 = vmul.f32 %v2462, 0.5
    %v2479 = vmul.f32 %v2467, 0.5
    %v2480 = vmul.f32 %v2472, 0.5
    %v2481 = vmul.f32 %v2447, 0.70710677
    %v2482 = vmul.f32 %v2452, 0.70710677
    %v2483 = vmul.f32 %v2457, 0.70710677
    %v2484 = vmul.f32 %v2462, 0.70710677
    %v2485 = vmul.f32 %v2467, 0.70710677
    %v2486 = vmul.f32 %v2472, 0.70710677
    %v2487 = verf.f32.pop %v2481
    %v2488 = verf.f32.pop %v2482
    %v2489 = verf.f32.pop %v2483
    %v2490 = verf.f32.pop %v2484
    %v2491 = verf.f32.pop %v2485
    %v2492 = verf.f32.pop %v2486
    %v2493 = vadd.f32 %v2487, 1.0
    %v2494 = vadd.f32 %v2488, 1.0
    %v2495 = vadd.f32 %v2489, 1.0
    %v2496 = vadd.f32 %v2490, 1.0
    %v2497 = vadd.f32 %v2491, 1.0
    %v2498 = vadd.f32 %v2492, 1.0
    %v2499 = vmul.f32 %v2475, %v2493
    %v2500 = vmul.f32 %v2476, %v2494
    %v2501 = vmul.f32 %v2477, %v2495
    %v2502 = vmul.f32 %v2478, %v2496
    %v2503 = vmul.f32 %v2479, %v2497
    %v2504 = vmul.f32 %v2480, %v2498
    %v2505 = vld [vmem:[%s2 + $0x60] sm:$0xff]
    %v2506 = vld [vmem:[%s2 + $0x68] sm:$0xff]
    %v2507 = vld [vmem:[%s2 + $0x70] sm:$0xff]
    %v2508 = vld [vmem:[%s2 + $0x78] sm:$0xff]
    %v2509 = vld [vmem:[%s2 + $0x80] sm:$0xff]
    %v2510 = vld [vmem:[%s2 + $0x88] sm:$0xff]
    %v2511 = vld [vmem:[%s2 + $0x90] sm:$0xff]
    %v2512 = vld [vmem:[%s2 + $0x98] sm:$0xff]
    %v2513 = vld [vmem:[%s2 + $0xa6] sm:$0x1]
    %v2515 = vsel %vm21, %v2499, 0
    %v2518 = vsel %vm21, %v2500, 0
    %v2521 = vsel %vm21, %v2501, 0
    %v2524 = vsel %vm21, %v2502, 0
    %v2527 = vsel %vm21, %v2503, 0
    %v2530 = vsel %vm21, %v2504, 0
    %2532 = vmatprep.subr.mxu0 0.0
    %2533 = vmatpush1.msra.mxu0 %v2505
    %2534 = vmatprep.subr.mxu0 0.0
    %2535 = vmatpush1.msra.mxu0 %v2506
    %2536 = vmatprep.subr.mxu0 0.0
    %2537 = vmatpush1.msra.mxu0 %v2507
    %2538 = vmatprep.subr.mxu0 0.0
    %2539 = vmatpush1.msra.mxu0 %v2508
    %2540 = vmatprep.subr.mxu0 0.0
    %2541 = vmatpush1.msra.mxu0 %v2509
    %2542 = vmatprep.subr.mxu0 0.0
    %2543 = vmatpush1.msra.mxu0 %v2510
    %2544 = vmatprep.subr.mxu0 0.0
    %2545 = vmatpush1.msra.mxu0 %v2511
    %2546 = vmatprep.subr.mxu0 0.0
    %2547 = vmatpush1.msra.mxu0 %v2512
    %2548 = vmatprep.subr.mxu0 0.0
    %2549 = vmatpush1.msra.mxu0 0.0
    %2550 = vmatprep.subr.mxu0 0.0
    %2551 = vmatpush1.msra.mxu0 0.0
    %2552 = vmatprep.subr.mxu0 0.0
    %2553 = vmatpush1.msra.mxu0 0.0
    %2554 = vmatprep.subr.mxu0 0.0
    %2555 = vmatpush1.msra.mxu0 0.0
    %2556 = vmatprep.subr.mxu0 0.0
    %2557 = vmatpush1.msra.mxu0 0.0
    %2558 = vmatprep.subr.mxu0 0.0
    %2559 = vmatpush1.msra.mxu0 0.0
    %2560 = vmatprep.subr.mxu0 0.0
    %2561 = vmatpush1.msra.mxu0 0.0
    %2562 = vmatprep.subr.mxu0 0.0
    %2563 = vmatpush1.msra.mxu0 0.0
    %2564 = vmatprep.subr.mxu0 0.0
    %2565 = vmatpush1.msra.mxu0 0.0
    %2566 = vmatprep.subr.mxu0 0.0
    %2567 = vmatpush1.msra.mxu0 0.0
    %2568 = vmatprep.subr.mxu0 0.0
    %2569 = vmatpush1.msra.mxu0 0.0
    %2570 = vmatprep.subr.mxu0 0.0
    %2571 = vmatpush1.msra.mxu0 0.0
    %2572 = vmatprep.subr.mxu0 0.0
    %2573 = vmatpush1.msra.mxu0 0.0
    %2574 = vmatprep.subr.mxu0 0.0
    %2575 = vmatpush1.msra.mxu0 0.0
    %2576 = vmatprep.subr.mxu0 0.0
    %2577 = vmatpush1.msra.mxu0 0.0
    %2578 = vmatprep.subr.mxu0 0.0
    %2579 = vmatpush1.msra.mxu0 0.0
    %2580 = vmatprep.subr.mxu0 0.0
    %2581 = vmatpush1.msra.mxu0 0.0
    %2582 = vmatprep.subr.mxu0 0.0
    %2583 = vmatpush1.msra.mxu0 0.0
    %2584 = vmatprep.subr.mxu0 0.0
    %2585 = vmatpush1.msra.mxu0 0.0
    %2586 = vmatprep.subr.mxu0 0.0
    %2587 = vmatpush1.msra.mxu0 0.0
    %2588 = vmatprep.subr.mxu0 0.0
    %2589 = vmatpush1.msra.mxu0 0.0
    %2590 = vmatprep.subr.mxu0 0.0
    %2591 = vmatpush1.msra.mxu0 0.0
    %2592 = vmatprep.subr.mxu0 0.0
    %2593 = vmatpush1.msra.mxu0 0.0
    %2594 = vmatprep.subr.mxu0 0.0
    %2595 = vmatpush1.msra.mxu0 0.0
    %2596 = vmatprep.mubr.f32.mxu0 0.0
    %2597 = vmatmul.mubr.f32.gmra.mrb[0].mxu0 %v2515
    %v2598 = vpop.f32.mrb[0].mxu0
    %v2599 = vadd.f32 0.0, %v2598
    %v2600 = vpop.f32.mrb[0].mxu0
    %2601 = vmatprep.mubr.f32.mxu0 0.0
    %2602 = vmatmul.mubr.f32.gmra.mrb[0].mxu0 %v2518
    %v2603 = vpop.f32.mrb[0].mxu0
    %v2604 = vadd.f32 0.0, %v2603
    %v2605 = vpop.f32.mrb[0].mxu0
    %2606 = vmatprep.mubr.f32.mxu0 0.0
    %2607 = vmatmul.mubr.f32.gmra.mrb[0].mxu0 %v2521
    %v2608 = vpop.f32.mrb[0].mxu0
    %v2609 = vadd.f32 0.0, %v2608
    %v2610 = vpop.f32.mrb[0].mxu0
    %2611 = vmatprep.mubr.f32.mxu0 0.0
    %2612 = vmatmul.mubr.f32.gmra.mrb[0].mxu0 %v2524
    %v2613 = vpop.f32.mrb[0].mxu0
    %v2614 = vadd.f32 0.0, %v2613
    %v2615 = vpop.f32.mrb[0].mxu0
    %2616 = vmatprep.mubr.f32.mxu0 0.0
    %2617 = vmatmul.mubr.f32.gmra.mrb[0].mxu0 %v2527
    %v2618 = vpop.f32.mrb[0].mxu0
    %v2619 = vadd.f32 0.0, %v2618
    %v2620 = vpop.f32.mrb[0].mxu0
    %2621 = vmatprep.mubr.f32.mxu0 0.0
    %2622 = vmatmul.mubr.f32.gmra.mrb[0].mxu0 %v2530
    %v2623 = vpop.f32.mrb[0].mxu0
    %v2624 = vadd.f32 0.0, %v2623
    %v2625 = vpop.f32.mrb[0].mxu0
    %2626 = vdwg.mxu0
    %v2627 = vadd.f32 %v2249, %v2599
    %v2628 = vadd.f32 %v2250, %v2604
    %v2629 = vadd.f32 %v2251, %v2609
    %v2630 = vadd.f32 %v2252, %v2614
    %v2631 = vadd.f32 %v2253, %v2619
    %v2632 = vadd.f32 %v2254, %v2624
    %v2633 = vlaneseq
    %v2634 = vshrl.u32 %v2633, 7
    %v2635 = vsub.s32 0, %v2634
    %v2636 = vrot.slane %v2513, %v2635
    %v2637 = vadd.f32 %v2627, %v2636
    %v2638 = vadd.f32 %v2628, %v2636
    %v2639 = vadd.f32 %v2629, %v2636
    %v2640 = vadd.f32 %v2630, %v2636
    %v2641 = vadd.f32 %v2631, %v2636
    %v2642 = vadd.f32 %v2632, %v2636
    %2643 = vst.msk [vmem:[#allocation2] sm:$0xff] %vm203, %v2637
    %2644 = vst.msk [vmem:[#allocation2 + $0x8] sm:$0xff] %vm203, %v2638
    %2645 = vst.msk [vmem:[#allocation2 + $0x10] sm:$0xff] %vm203, %v2639
    %2646 = vst.msk [vmem:[#allocation2 + $0x18] sm:$0xff] %vm203, %v2640
    %2647 = vst.msk [vmem:[#allocation2 + $0x20] sm:$0xff] %vm203, %v2641
    %2648 = vst.msk [vmem:[#allocation2 + $0x28] sm:$0xff] %vm203, %v2642
    %s2649 = scalar_lea.vmem %s2, 168
    %v2650 = vld [vmem:[%s2649 + $0xa0] sm:$0x1]
    %v2651 = vld [vmem:[%s2649 + $0xa1] sm:$0x1]
    %v2652 = vld [vmem:[#allocation2] sm:$0xff]
    %v2653 = vld [vmem:[#allocation2 + $0x8] sm:$0xff]
    %v2654 = vld [vmem:[#allocation2 + $0x10] sm:$0xff]
    %v2655 = vld [vmem:[#allocation2 + $0x18] sm:$0xff]
    %v2656 = vld [vmem:[#allocation2 + $0x20] sm:$0xff]
    %v2657 = vld [vmem:[#allocation2 + $0x28] sm:$0xff]
    %v2658 = vsel %vm203, %v2652, 0.0
    %2659 = vadd.xlane.f32.xlu0 %v2658
    %v2660 = vpop.xlane.xlu0 %2659
    %v2661 = vsel %vm203, %v2653, 0.0
    %2662 = vadd.xlane.f32.xlu0 %v2661
    %v2663 = vpop.xlane.xlu0 %2662
    %v2664 = vsel %vm203, %v2654, 0.0
    %2665 = vadd.xlane.f32.xlu0 %v2664
    %v2666 = vpop.xlane.xlu0 %2665
    %v2667 = vsel %vm203, %v2655, 0.0
    %2668 = vadd.xlane.f32.xlu0 %v2667
    %v2669 = vpop.xlane.xlu0 %2668
    %v2670 = vsel %vm203, %v2656, 0.0
    %2671 = vadd.xlane.f32.xlu0 %v2670
    %v2672 = vpop.xlane.xlu0 %2671
    %v2673 = vsel %vm203, %v2657, 0.0
    %2674 = vadd.xlane.f32.xlu0 %v2673
    %v2675 = vpop.xlane.xlu0 %2674
    %v2676 = vmul.f32 %v2660, %v216
    %v2677 = vmul.f32 %v2663, %v216
    %v2678 = vmul.f32 %v2666, %v216
    %v2679 = vmul.f32 %v2669, %v216
    %v2680 = vmul.f32 %v2672, %v216
    %v2681 = vmul.f32 %v2675, %v216
    %v2682 = vsub.f32 %v2652, %v2676
    %v2683 = vsub.f32 %v2653, %v2677
    %v2684 = vsub.f32 %v2654, %v2678
    %v2685 = vsub.f32 %v2655, %v2679
    %v2686 = vsub.f32 %v2656, %v2680
    %v2687 = vsub.f32 %v2657, %v2681
    %v2688 = vmul.f32 %v2682, %v2682
    %v2689 = vmul.f32 %v2683, %v2683
    %v2690 = vmul.f32 %v2684, %v2684
    %v2691 = vmul.f32 %v2685, %v2685
    %v2692 = vmul.f32 %v2686, %v2686
    %v2693 = vmul.f32 %v2687, %v2687
    %v2694 = vsel %vm203, %v2688, 0.0
    %2695 = vadd.xlane.f32.xlu0 %v2694
    %v2696 = vpop.xlane.xlu0 %2695
    %v2697 = vsel %vm203, %v2689, 0.0
    %2698 = vadd.xlane.f32.xlu0 %v2697
    %v2699 = vpop.xlane.xlu0 %2698
    %v2700 = vsel %vm203, %v2690, 0.0
    %2701 = vadd.xlane.f32.xlu0 %v2700
    %v2702 = vpop.xlane.xlu0 %2701
    %v2703 = vsel %vm203, %v2691, 0.0
    %2704 = vadd.xlane.f32.xlu0 %v2703
    %v2705 = vpop.xlane.xlu0 %2704
    %v2706 = vsel %vm203, %v2692, 0.0
    %2707 = vadd.xlane.f32.xlu0 %v2706
    %v2708 = vpop.xlane.xlu0 %2707
    %v2709 = vsel %vm203, %v2693, 0.0
    %2710 = vadd.xlane.f32.xlu0 %v2709
    %v2711 = vpop.xlane.xlu0 %2710
    %v2712 = vmul.f32 %v2696, %v216
    %v2713 = vmul.f32 %v2699, %v216
    %v2714 = vmul.f32 %v2702, %v216
    %v2715 = vmul.f32 %v2705, %v216
    %v2716 = vmul.f32 %v2708, %v216
    %v2717 = vmul.f32 %v2711, %v216
    %v2718 = vadd.f32 %v2712, 1e-05
    %v2719 = vadd.f32 %v2713, 1e-05
    %v2720 = vadd.f32 %v2714, 1e-05
    %v2721 = vadd.f32 %v2715, 1e-05
    %v2722 = vadd.f32 %v2716, 1e-05
    %v2723 = vadd.f32 %v2717, 1e-05
    %v2724 = vrsqrt.pop %v2718
    %v2725 = vrsqrt.pop %v2719
    %v2726 = vrsqrt.pop %v2720
    %v2727 = vrsqrt.pop %v2721
    %v2728 = vrsqrt.pop %v2722
    %v2729 = vrsqrt.pop %v2723
    %v2730 = vmul.f32 %v2682, %v2724
    %v2731 = vmul.f32 %v2683, %v2725
    %v2732 = vmul.f32 %v2684, %v2726
    %v2733 = vmul.f32 %v2685, %v2727
    %v2734 = vmul.f32 %v2686, %v2728
    %v2735 = vmul.f32 %v2687, %v2729
    %v2736 = vlaneseq
    %v2737 = vshrl.u32 %v2736, 7
    %v2738 = vsub.s32 0, %v2737
    %v2739 = vrot.slane %v2650, %v2738
    %v2740 = vmul.f32 %v2730, %v2739
    %v2741 = vmul.f32 %v2731, %v2739
    %v2742 = vmul.f32 %v2732, %v2739
    %v2743 = vmul.f32 %v2733, %v2739
    %v2744 = vmul.f32 %v2734, %v2739
    %v2745 = vmul.f32 %v2735, %v2739
    %v2746 = vlaneseq
    %v2747 = vshrl.u32 %v2746, 7
    %v2748 = vsub.s32 0, %v2747
    %v2749 = vrot.slane %v2651, %v2748
    %v2750 = vadd.f32 %v2740, %v2749
    %v2751 = vadd.f32 %v2741, %v2749
    %v2752 = vadd.f32 %v2742, %v2749
    %v2753 = vadd.f32 %v2743, %v2749
    %v2754 = vadd.f32 %v2744, %v2749
    %v2755 = vadd.f32 %v2745, %v2749
    %v2756 = vld [vmem:[%s2649] sm:$0xff]
    %v2757 = vld [vmem:[%s2649 + $0x8] sm:$0xff]
    %v2758 = vld [vmem:[%s2649 + $0x10] sm:$0xff]
    %v2759 = vld [vmem:[%s2649 + $0x18] sm:$0xff]
    %v2761 = vsel %vm203, %v2750, 0
    %v2764 = vsel %vm203, %v2751, 0
    %v2767 = vsel %vm203, %v2752, 0
    %v2770 = vsel %vm203, %v2753, 0
    %v2773 = vsel %vm203, %v2754, 0
    %v2776 = vsel %vm203, %v2755, 0
    %2778 = vmatprep.subr.mxu0 0.0
    %2779 = vmatpush1.msra.mxu0 %v2756
    %2780 = vmatprep.subr.mxu0 0.0
    %2781 = vmatpush1.msra.mxu0 %v2757
    %2782 = vmatprep.subr.mxu0 0.0
    %2783 = vmatpush1.msra.mxu0 %v2758
    %2784 = vmatprep.subr.mxu0 0.0
    %2785 = vmatpush1.msra.mxu0 %v2759
    %2786 = vmatprep.subr.mxu0 0.0
    %2787 = vmatpush1.msra.mxu0 0.0
    %2788 = vmatprep.subr.mxu0 0.0
    %2789 = vmatpush1.msra.mxu0 0.0
    %2790 = vmatprep.subr.mxu0 0.0
    %2791 = vmatpush1.msra.mxu0 0.0
    %2792 = vmatprep.subr.mxu0 0.0
    %2793 = vmatpush1.msra.mxu0 0.0
    %2794 = vmatprep.subr.mxu0 0.0
    %2795 = vmatpush1.msra.mxu0 0.0
    %2796 = vmatprep.subr.mxu0 0.0
    %2797 = vmatpush1.msra.mxu0 0.0
    %2798 = vmatprep.subr.mxu0 0.0
    %2799 = vmatpush1.msra.mxu0 0.0
    %2800 = vmatprep.subr.mxu0 0.0
    %2801 = vmatpush1.msra.mxu0 0.0
    %2802 = vmatprep.subr.mxu0 0.0
    %2803 = vmatpush1.msra.mxu0 0.0
    %2804 = vmatprep.subr.mxu0 0.0
    %2805 = vmatpush1.msra.mxu0 0.0
    %2806 = vmatprep.subr.mxu0 0.0
    %2807 = vmatpush1.msra.mxu0 0.0
    %2808 = vmatprep.subr.mxu0 0.0
    %2809 = vmatpush1.msra.mxu0 0.0
    %2810 = vmatprep.subr.mxu0 0.0
    %2811 = vmatpush1.msra.mxu0 0.0
    %2812 = vmatprep.subr.mxu0 0.0
    %2813 = vmatpush1.msra.mxu0 0.0
    %2814 = vmatprep.subr.mxu0 0.0
    %2815 = vmatpush1.msra.mxu0 0.0
    %2816 = vmatprep.subr.mxu0 0.0
    %2817 = vmatpush1.msra.mxu0 0.0
    %2818 = vmatprep.subr.mxu0 0.0
    %2819 = vmatpush1.msra.mxu0 0.0
    %2820 = vmatprep.subr.mxu0 0.0
    %2821 = vmatpush1.msra.mxu0 0.0
    %2822 = vmatprep.subr.mxu0 0.0
    %2823 = vmatpush1.msra.mxu0 0.0
    %2824 = vmatprep.subr.mxu0 0.0
    %2825 = vmatpush1.msra.mxu0 0.0
    %2826 = vmatprep.subr.mxu0 0.0
    %2827 = vmatpush1.msra.mxu0 0.0
    %2828 = vmatprep.subr.mxu0 0.0
    %2829 = vmatpush1.msra.mxu0 0.0
    %2830 = vmatprep.subr.mxu0 0.0
    %2831 = vmatpush1.msra.mxu0 0.0
    %2832 = vmatprep.subr.mxu0 0.0
    %2833 = vmatpush1.msra.mxu0 0.0
    %2834 = vmatprep.subr.mxu0 0.0
    %2835 = vmatpush1.msra.mxu0 0.0
    %2836 = vmatprep.subr.mxu0 0.0
    %2837 = vmatpush1.msra.mxu0 0.0
    %2838 = vmatprep.subr.mxu0 0.0
    %2839 = vmatpush1.msra.mxu0 0.0
    %2840 = vmatprep.subr.mxu0 0.0
    %2841 = vmatpush1.msra.mxu0 0.0
    %2842 = vmatprep.mubr.f32.mxu0 0.0
    %2843 = vmatmul.mubr.f32.gmra.mrb[0].mxu0 %v2761
    %v2844 = vpop.f32.mrb[0].mxu0
    %v2845 = vadd.f32 0.0, %v2844
    %v2846 = vpop.f32.mrb[0].mxu0
    %2847 = vmatprep.mubr.f32.mxu0 0.0
    %2848 = vmatmul.mubr.f32.gmra.mrb[0].mxu0 %v2764
    %v2849 = vpop.f32.mrb[0].mxu0
    %v2850 = vadd.f32 0.0, %v2849
    %v2851 = vpop.f32.mrb[0].mxu0
    %2852 = vmatprep.mubr.f32.mxu0 0.0
    %2853 = vmatmul.mubr.f32.gmra.mrb[0].mxu0 %v2767
    %v2854 = vpop.f32.mrb[0].mxu0
    %v2855 = vadd.f32 0.0, %v2854
    %v2856 = vpop.f32.mrb[0].mxu0
    %2857 = vmatprep.mubr.f32.mxu0 0.0
    %2858 = vmatmul.mubr.f32.gmra.mrb[0].mxu0 %v2770
    %v2859 = vpop.f32.mrb[0].mxu0
    %v2860 = vadd.f32 0.0, %v2859
    %v2861 = vpop.f32.mrb[0].mxu0
    %2862 = vmatprep.mubr.f32.mxu0 0.0
    %2863 = vmatmul.mubr.f32.gmra.mrb[0].mxu0 %v2773
    %v2864 = vpop.f32.mrb[0].mxu0
    %v2865 = vadd.f32 0.0, %v2864
    %v2866 = vpop.f32.mrb[0].mxu0
    %2867 = vmatprep.mubr.f32.mxu0 0.0
    %2868 = vmatmul.mubr.f32.gmra.mrb[0].mxu0 %v2776
    %v2869 = vpop.f32.mrb[0].mxu0
    %v2870 = vadd.f32 0.0, %v2869
    %v2871 = vpop.f32.mrb[0].mxu0
    %2872 = vdwg.mxu0
    %2879 = vrot.lane.b32.xlu0 %v2845, 96
    %v2880 = vpop.permute.xlu0 %2879
    %2881 = vrot.lane.b32.xlu0 %v2850, 96
    %v2882 = vpop.permute.xlu0 %2881
    %2883 = vrot.lane.b32.xlu0 %v2855, 96
    %v2884 = vpop.permute.xlu0 %2883
    %2885 = vrot.lane.b32.xlu0 %v2860, 96
    %v2886 = vpop.permute.xlu0 %2885
    %2887 = vrot.lane.b32.xlu0 %v2865, 96
    %v2888 = vpop.permute.xlu0 %2887
    %2889 = vrot.lane.b32.xlu0 %v2870, 96
    %v2890 = vpop.permute.xlu0 %2889
    %v2891 = vsel %vm610, %v2845, 0
    %v2893 = vsel %vm610, %v2850, 0
    %v2895 = vsel %vm610, %v2855, 0
    %v2897 = vsel %vm610, %v2860, 0
    %v2899 = vsel %vm610, %v2865, 0
    %v2901 = vsel %vm610, %v2870, 0
    %v2903 = vsel %vm610, %v2880, 0
    %v2905 = vsel %vm610, %v2882, 0
    %v2907 = vsel %vm610, %v2884, 0
    %v2909 = vsel %vm610, %v2886, 0
    %v2911 = vsel %vm610, %v2888, 0
    %v2913 = vsel %vm610, %v2890, 0
    %2915 = vmatprep.subr.mxu0 0.0
    %2916 = vmatpush1.xpose.msra.mxu0 %v2903
    %2917 = vmatprep.subr.mxu0 0.0
    %2918 = vmatpush1.xpose.msra.mxu0 %v2905
    %2919 = vmatprep.subr.mxu0 0.0
    %2920 = vmatpush1.xpose.msra.mxu0 %v2907
    %2921 = vmatprep.subr.mxu0 0.0
    %2922 = vmatpush1.xpose.msra.mxu0 %v2909
    %2923 = vmatprep.subr.mxu0 0.0
    %2924 = vmatpush1.xpose.msra.mxu0 %v2911
    %2925 = vmatprep.subr.mxu0 0.0
    %2926 = vmatpush1.xpose.msra.mxu0 %v2913
    %2927 = vmatprep.subr.mxu0 0.0
    %2928 = vmatpush1.xpose.msra.mxu0 0.0
    %2929 = vmatprep.subr.mxu0 0.0
    %2930 = vmatpush1.xpose.msra.mxu0 0.0
    %2931 = vmatprep.subr.mxu0 0.0
    %2932 = vmatpush1.xpose.msra.mxu0 0.0
    %2933 = vmatprep.subr.mxu0 0.0
    %2934 = vmatpush1.xpose.msra.mxu0 0.0
    %2935 = vmatprep.subr.mxu0 0.0
    %2936 = vmatpush1.xpose.msra.mxu0 0.0
    %2937 = vmatprep.subr.mxu0 0.0
    %2938 = vmatpush1.xpose.msra.mxu0 0.0
    %2939 = vmatprep.subr.mxu0 0.0
    %2940 = vmatpush1.xpose.msra.mxu0 0.0
    %2941 = vmatprep.subr.mxu0 0.0
    %2942 = vmatpush1.xpose.msra.mxu0 0.0
    %2943 = vmatprep.subr.mxu0 0.0
    %2944 = vmatpush1.xpose.msra.mxu0 0.0
    %2945 = vmatprep.subr.mxu0 0.0
    %2946 = vmatpush1.xpose.msra.mxu0 0.0
    %2947 = vmatprep.subr.mxu0 0.0
    %2948 = vmatpush1.xpose.msra.mxu0 0.0
    %2949 = vmatprep.subr.mxu0 0.0
    %2950 = vmatpush1.xpose.msra.mxu0 0.0
    %2951 = vmatprep.subr.mxu0 0.0
    %2952 = vmatpush1.xpose.msra.mxu0 0.0
    %2953 = vmatprep.subr.mxu0 0.0
    %2954 = vmatpush1.xpose.msra.mxu0 0.0
    %2955 = vmatprep.subr.mxu0 0.0
    %2956 = vmatpush1.xpose.msra.mxu0 0.0
    %2957 = vmatprep.subr.mxu0 0.0
    %2958 = vmatpush1.xpose.msra.mxu0 0.0
    %2959 = vmatprep.subr.mxu0 0.0
    %2960 = vmatpush1.xpose.msra.mxu0 0.0
    %2961 = vmatprep.subr.mxu0 0.0
    %2962 = vmatpush1.xpose.msra.mxu0 0.0
    %2963 = vmatprep.subr.mxu0 0.0
    %2964 = vmatpush1.xpose.msra.mxu0 0.0
    %2965 = vmatprep.subr.mxu0 0.0
    %2966 = vmatpush1.xpose.msra.mxu0 0.0
    %2967 = vmatprep.subr.mxu0 0.0
    %2968 = vmatpush1.xpose.msra.mxu0 0.0
    %2969 = vmatprep.subr.mxu0 0.0
    %2970 = vmatpush1.xpose.msra.mxu0 0.0
    %2971 = vmatprep.subr.mxu0 0.0
    %2972 = vmatpush1.xpose.msra.mxu0 0.0
    %2973 = vmatprep.subr.mxu0 0.0
    %2974 = vmatpush1.xpose.msra.mxu0 0.0
    %2975 = vmatprep.subr.mxu0 0.0
    %2976 = vmatpush1.xpose.msra.mxu0 0.0
    %2977 = vmatprep.subr.mxu0 0.0
    %2978 = vmatpush1.xpose.msra.mxu0 0.0
    %2979 = vmatprep.mubr.f32.mxu0 0.0
    %2980 = vmatmul.mubr.f32.gmra.mrb[0].mxu0 %v2891
    %v2981 = vpop.f32.mrb[0].mxu0
    %v2982 = vadd.f32 0.0, %v2981
    %v2983 = vpop.f32.mrb[0].mxu0
    %2984 = vmatprep.mubr.f32.mxu0 0.0
    %2985 = vmatmul.mubr.f32.gmra.mrb[0].mxu0 %v2893
    %v2986 = vpop.f32.mrb[0].mxu0
    %v2987 = vadd.f32 0.0, %v2986
    %v2988 = vpop.f32.mrb[0].mxu0
    %2989 = vmatprep.mubr.f32.mxu0 0.0
    %2990 = vmatmul.mubr.f32.gmra.mrb[0].mxu0 %v2895
    %v2991 = vpop.f32.mrb[0].mxu0
    %v2992 = vadd.f32 0.0, %v2991
    %v2993 = vpop.f32.mrb[0].mxu0
    %2994 = vmatprep.mubr.f32.mxu0 0.0
    %2995 = vmatmul.mubr.f32.gmra.mrb[0].mxu0 %v2897
    %v2996 = vpop.f32.mrb[0].mxu0
    %v2997 = vadd.f32 0.0, %v2996
    %v2998 = vpop.f32.mrb[0].mxu0
    %2999 = vmatprep.mubr.f32.mxu0 0.0
    %3000 = vmatmul.mubr.f32.gmra.mrb[0].mxu0 %v2899
    %v3001 = vpop.f32.mrb[0].mxu0
    %v3002 = vadd.f32 0.0, %v3001
    %v3003 = vpop.f32.mrb[0].mxu0
    %3004 = vmatprep.mubr.f32.mxu0 0.0
    %3005 = vmatmul.mubr.f32.gmra.mrb[0].mxu0 %v2901
    %v3006 = vpop.f32.mrb[0].mxu0
    %v3007 = vadd.f32 0.0, %v3006
    %v3008 = vpop.f32.mrb[0].mxu0
    %3009 = vdwg.mxu0
    %v3010 = vsel %vm363, %v2982, -1e+30
    %v3011 = vsel %vm364, %v2987, -1e+30
    %v3012 = vsel %vm365, %v2992, -1e+30
    %v3013 = vsel %vm366, %v2997, -1e+30
    %v3014 = vsel %vm367, %v3002, -1e+30
    %v3015 = vsel %vm368, %v3007, -1e+30
    %v3016 = vsel %vm736, %v3010, -inf
    %3017 = vmax.xlane.f32.xlu0 %v3016
    %v3018 = vpop.xlane.xlu0 %3017
    %v3019 = vsel %vm736, %v3011, -inf
    %3020 = vmax.xlane.f32.xlu0 %v3019
    %v3021 = vpop.xlane.xlu0 %3020
    %v3022 = vsel %vm736, %v3012, -inf
    %3023 = vmax.xlane.f32.xlu0 %v3022
    %v3024 = vpop.xlane.xlu0 %3023
    %v3025 = vsel %vm736, %v3013, -inf
    %3026 = vmax.xlane.f32.xlu0 %v3025
    %v3027 = vpop.xlane.xlu0 %3026
    %v3028 = vsel %vm736, %v3014, -inf
    %3029 = vmax.xlane.f32.xlu0 %v3028
    %v3030 = vpop.xlane.xlu0 %3029
    %v3031 = vsel %vm736, %v3015, -inf
    %3032 = vmax.xlane.f32.xlu0 %v3031
    %v3033 = vpop.xlane.xlu0 %3032
    %v3034 = vsub.f32 %v3010, %v3018
    %v3035 = vsub.f32 %v3011, %v3021
    %v3036 = vsub.f32 %v3012, %v3024
    %v3037 = vsub.f32 %v3013, %v3027
    %v3038 = vsub.f32 %v3014, %v3030
    %v3039 = vsub.f32 %v3015, %v3033
    %v3040 = vmul.f32 %v3034, 1.442695
    %v3041 = vpow.pop %v3040
    %v3042 = vmul.f32 %v3035, 1.442695
    %v3043 = vpow.pop %v3042
    %v3044 = vmul.f32 %v3036, 1.442695
    %v3045 = vpow.pop %v3044
    %v3046 = vmul.f32 %v3037, 1.442695
    %v3047 = vpow.pop %v3046
    %v3048 = vmul.f32 %v3038, 1.442695
    %v3049 = vpow.pop %v3048
    %v3050 = vmul.f32 %v3039, 1.442695
    %v3051 = vpow.pop %v3050
    %v3052 = vsel %vm736, %v3041, 0.0
    %3053 = vadd.xlane.f32.xlu0 %v3052
    %v3054 = vpop.xlane.xlu0 %3053
    %v3055 = vsel %vm736, %v3043, 0.0
    %3056 = vadd.xlane.f32.xlu0 %v3055
    %v3057 = vpop.xlane.xlu0 %3056
    %v3058 = vsel %vm736, %v3045, 0.0
    %3059 = vadd.xlane.f32.xlu0 %v3058
    %v3060 = vpop.xlane.xlu0 %3059
    %v3061 = vsel %vm736, %v3047, 0.0
    %3062 = vadd.xlane.f32.xlu0 %v3061
    %v3063 = vpop.xlane.xlu0 %3062
    %v3064 = vsel %vm736, %v3049, 0.0
    %3065 = vadd.xlane.f32.xlu0 %v3064
    %v3066 = vpop.xlane.xlu0 %3065
    %v3067 = vsel %vm736, %v3051, 0.0
    %3068 = vadd.xlane.f32.xlu0 %v3067
    %v3069 = vpop.xlane.xlu0 %3068
    %v3070 = vrcp.pop %v3054
    %v3071 = vmul.f32 1.0, %v3070
    %v3072 = vrcp.pop %v3057
    %v3073 = vmul.f32 1.0, %v3072
    %v3074 = vrcp.pop %v3060
    %v3075 = vmul.f32 1.0, %v3074
    %v3076 = vrcp.pop %v3063
    %v3077 = vmul.f32 1.0, %v3076
    %v3078 = vrcp.pop %v3066
    %v3079 = vmul.f32 1.0, %v3078
    %v3080 = vrcp.pop %v3069
    %v3081 = vmul.f32 1.0, %v3080
    %v3082 = vmul.f32 %v3041, %v3071
    %v3083 = vmul.f32 %v3043, %v3073
    %v3084 = vmul.f32 %v3045, %v3075
    %v3085 = vmul.f32 %v3047, %v3077
    %v3086 = vmul.f32 %v3049, %v3079
    %v3087 = vmul.f32 %v3051, %v3081
    %3088 = vrot.lane.b32.xlu0 %v2845, 64
    %v3089 = vpop.permute.xlu0 %3088
    %3090 = vrot.lane.b32.xlu0 %v2850, 64
    %v3091 = vpop.permute.xlu0 %3090
    %3092 = vrot.lane.b32.xlu0 %v2855, 64
    %v3093 = vpop.permute.xlu0 %3092
    %3094 = vrot.lane.b32.xlu0 %v2860, 64
    %v3095 = vpop.permute.xlu0 %3094
    %3096 = vrot.lane.b32.xlu0 %v2865, 64
    %v3097 = vpop.permute.xlu0 %3096
    %3098 = vrot.lane.b32.xlu0 %v2870, 64
    %v3099 = vpop.permute.xlu0 %3098
    %v3107 = vsel %vm736, %v3082, 0
    %v3110 = vsel %vm736, %v3083, 0
    %v3113 = vsel %vm736, %v3084, 0
    %v3116 = vsel %vm736, %v3085, 0
    %v3119 = vsel %vm736, %v3086, 0
    %v3122 = vsel %vm736, %v3087, 0
    %3124 = vmatprep.subr.mxu0 0.0
    %3125 = vmatpush1.msra.mxu0 %v3089
    %3126 = vmatprep.subr.mxu0 0.0
    %3127 = vmatpush1.msra.mxu0 %v3091
    %3128 = vmatprep.subr.mxu0 0.0
    %3129 = vmatpush1.msra.mxu0 %v3093
    %3130 = vmatprep.subr.mxu0 0.0
    %3131 = vmatpush1.msra.mxu0 %v3095
    %3132 = vmatprep.subr.mxu0 0.0
    %3133 = vmatpush1.msra.mxu0 %v3097
    %3134 = vmatprep.subr.mxu0 0.0
    %3135 = vmatpush1.msra.mxu0 %v3099
    %3136 = vmatprep.subr.mxu0 0.0
    %3137 = vmatpush1.msra.mxu0 0.0
    %3138 = vmatprep.subr.mxu0 0.0
    %3139 = vmatpush1.msra.mxu0 0.0
    %3140 = vmatprep.subr.mxu0 0.0
    %3141 = vmatpush1.msra.mxu0 0.0
    %3142 = vmatprep.subr.mxu0 0.0
    %3143 = vmatpush1.msra.mxu0 0.0
    %3144 = vmatprep.subr.mxu0 0.0
    %3145 = vmatpush1.msra.mxu0 0.0
    %3146 = vmatprep.subr.mxu0 0.0
    %3147 = vmatpush1.msra.mxu0 0.0
    %3148 = vmatprep.subr.mxu0 0.0
    %3149 = vmatpush1.msra.mxu0 0.0
    %3150 = vmatprep.subr.mxu0 0.0
    %3151 = vmatpush1.msra.mxu0 0.0
    %3152 = vmatprep.subr.mxu0 0.0
    %3153 = vmatpush1.msra.mxu0 0.0
    %3154 = vmatprep.subr.mxu0 0.0
    %3155 = vmatpush1.msra.mxu0 0.0
    %3156 = vmatprep.subr.mxu0 0.0
    %3157 = vmatpush1.msra.mxu0 0.0
    %3158 = vmatprep.subr.mxu0 0.0
    %3159 = vmatpush1.msra.mxu0 0.0
    %3160 = vmatprep.subr.mxu0 0.0
    %3161 = vmatpush1.msra.mxu0 0.0
    %3162 = vmatprep.subr.mxu0 0.0
    %3163 = vmatpush1.msra.mxu0 0.0
    %3164 = vmatprep.subr.mxu0 0.0
    %3165 = vmatpush1.msra.mxu0 0.0
    %3166 = vmatprep.subr.mxu0 0.0
    %3167 = vmatpush1.msra.mxu0 0.0
    %3168 = vmatprep.subr.mxu0 0.0
    %3169 = vmatpush1.msra.mxu0 0.0
    %3170 = vmatprep.subr.mxu0 0.0
    %3171 = vmatpush1.msra.mxu0 0.0
    %3172 = vmatprep.subr.mxu0 0.0
    %3173 = vmatpush1.msra.mxu0 0.0
    %3174 = vmatprep.subr.mxu0 0.0
    %3175 = vmatpush1.msra.mxu0 0.0
    %3176 = vmatprep.subr.mxu0 0.0
    %3177 = vmatpush1.msra.mxu0 0.0
    %3178 = vmatprep.subr.mxu0 0.0
    %3179 = vmatpush1.msra.mxu0 0.0
    %3180 = vmatprep.subr.mxu0 0.0
    %3181 = vmatpush1.msra.mxu0 0.0
    %3182 = vmatprep.subr.mxu0 0.0
    %3183 = vmatpush1.msra.mxu0 0.0
    %3184 = vmatprep.subr.mxu0 0.0
    %3185 = vmatpush1.msra.mxu0 0.0
    %3186 = vmatprep.subr.mxu0 0.0
    %3187 = vmatpush1.msra.mxu0 0.0
    %3188 = vmatprep.mubr.f32.mxu0 0.0
    %3189 = vmatmul.mubr.f32.gmra.mrb[0].mxu0 %v3107
    %v3190 = vpop.f32.mrb[0].mxu0
    %v3191 = vadd.f32 0.0, %v3190
    %v3192 = vpop.f32.mrb[0].mxu0
    %3193 = vmatprep.mubr.f32.mxu0 0.0
    %3194 = vmatmul.mubr.f32.gmra.mrb[0].mxu0 %v3110
    %v3195 = vpop.f32.mrb[0].mxu0
    %v3196 = vadd.f32 0.0, %v3195
    %v3197 = vpop.f32.mrb[0].mxu0
    %3198 = vmatprep.mubr.f32.mxu0 0.0
    %3199 = vmatmul.mubr.f32.gmra.mrb[0].mxu0 %v3113
    %v3200 = vpop.f32.mrb[0].mxu0
    %v3201 = vadd.f32 0.0, %v3200
    %v3202 = vpop.f32.mrb[0].mxu0
    %3203 = vmatprep.mubr.f32.mxu0 0.0
    %3204 = vmatmul.mubr.f32.gmra.mrb[0].mxu0 %v3116
    %v3205 = vpop.f32.mrb[0].mxu0
    %v3206 = vadd.f32 0.0, %v3205
    %v3207 = vpop.f32.mrb[0].mxu0
    %3208 = vmatprep.mubr.f32.mxu0 0.0
    %3209 = vmatmul.mubr.f32.gmra.mrb[0].mxu0 %v3119
    %v3210 = vpop.f32.mrb[0].mxu0
    %v3211 = vadd.f32 0.0, %v3210
    %v3212 = vpop.f32.mrb[0].mxu0
    %3213 = vmatprep.mubr.f32.mxu0 0.0
    %3214 = vmatmul.mubr.f32.gmra.mrb[0].mxu0 %v3122
    %v3215 = vpop.f32.mrb[0].mxu0
    %v3216 = vadd.f32 0.0, %v3215
    %v3217 = vpop.f32.mrb[0].mxu0
    %3218 = vdwg.mxu0
    %3219 = vst.msk [vmem:[#allocation3] sm:$0xff] %vm610, %v3191
    %3220 = vst.msk [vmem:[#allocation3 + $0x8] sm:$0xff] %vm610, %v3196
    %3221 = vst.msk [vmem:[#allocation3 + $0x10] sm:$0xff] %vm610, %v3201
    %3222 = vst.msk [vmem:[#allocation3 + $0x18] sm:$0xff] %vm610, %v3206
    %3223 = vst.msk [vmem:[#allocation3 + $0x20] sm:$0xff] %vm610, %v3211
    %3224 = vst.msk [vmem:[#allocation3 + $0x28] sm:$0xff] %vm610, %v3216
    %3225 = vrot.lane.b32.xlu0 %v2845, 120
    %v3226 = vpop.permute.xlu0 %3225
    %3227 = vrot.lane.b32.xlu0 %v2850, 120
    %v3228 = vpop.permute.xlu0 %3227
    %3229 = vrot.lane.b32.xlu0 %v2855, 120
    %v3230 = vpop.permute.xlu0 %3229
    %3231 = vrot.lane.b32.xlu0 %v2860, 120
    %v3232 = vpop.permute.xlu0 %3231
    %3233 = vrot.lane.b32.xlu0 %v2865, 120
    %v3234 = vpop.permute.xlu0 %3233
    %3235 = vrot.lane.b32.xlu0 %v2870, 120
    %v3236 = vpop.permute.xlu0 %3235
    %3237 = vrot.lane.b32.xlu0 %v2845, 88
    %v3238 = vpop.permute.xlu0 %3237
    %3239 = vrot.lane.b32.xlu0 %v2850, 88
    %v3240 = vpop.permute.xlu0 %3239
    %3241 = vrot.lane.b32.xlu0 %v2855, 88
    %v3242 = vpop.permute.xlu0 %3241
    %3243 = vrot.lane.b32.xlu0 %v2860, 88
    %v3244 = vpop.permute.xlu0 %3243
    %3245 = vrot.lane.b32.xlu0 %v2865, 88
    %v3246 = vpop.permute.xlu0 %3245
    %3247 = vrot.lane.b32.xlu0 %v2870, 88
    %v3248 = vpop.permute.xlu0 %3247
    %v3249 = vsel %vm610, %v3226, 0
    %v3251 = vsel %vm610, %v3228, 0
    %v3253 = vsel %vm610, %v3230, 0
    %v3255 = vsel %vm610, %v3232, 0
    %v3257 = vsel %vm610, %v3234, 0
    %v3259 = vsel %vm610, %v3236, 0
    %v3261 = vsel %vm610, %v3238, 0
    %v3263 = vsel %vm610, %v3240, 0
    %v3265 = vsel %vm610, %v3242, 0
    %v3267 = vsel %vm610, %v3244, 0
    %v3269 = vsel %vm610, %v3246, 0
    %v3271 = vsel %vm610, %v3248, 0
    %3273 = vmatprep.subr.mxu0 0.0
    %3274 = vmatpush1.xpose.msra.mxu0 %v3261
    %3275 = vmatprep.subr.mxu0 0.0
    %3276 = vmatpush1.xpose.msra.mxu0 %v3263
    %3277 = vmatprep.subr.mxu0 0.0
    %3278 = vmatpush1.xpose.msra.mxu0 %v3265
    %3279 = vmatprep.subr.mxu0 0.0
    %3280 = vmatpush1.xpose.msra.mxu0 %v3267
    %3281 = vmatprep.subr.mxu0 0.0
    %3282 = vmatpush1.xpose.msra.mxu0 %v3269
    %3283 = vmatprep.subr.mxu0 0.0
    %3284 = vmatpush1.xpose.msra.mxu0 %v3271
    %3285 = vmatprep.subr.mxu0 0.0
    %3286 = vmatpush1.xpose.msra.mxu0 0.0
    %3287 = vmatprep.subr.mxu0 0.0
    %3288 = vmatpush1.xpose.msra.mxu0 0.0
    %3289 = vmatprep.subr.mxu0 0.0
    %3290 = vmatpush1.xpose.msra.mxu0 0.0
    %3291 = vmatprep.subr.mxu0 0.0
    %3292 = vmatpush1.xpose.msra.mxu0 0.0
    %3293 = vmatprep.subr.mxu0 0.0
    %3294 = vmatpush1.xpose.msra.mxu0 0.0
    %3295 = vmatprep.subr.mxu0 0.0
    %3296 = vmatpush1.xpose.msra.mxu0 0.0
    %3297 = vmatprep.subr.mxu0 0.0
    %3298 = vmatpush1.xpose.msra.mxu0 0.0
    %3299 = vmatprep.subr.mxu0 0.0
    %3300 = vmatpush1.xpose.msra.mxu0 0.0
    %3301 = vmatprep.subr.mxu0 0.0
    %3302 = vmatpush1.xpose.msra.mxu0 0.0
    %3303 = vmatprep.subr.mxu0 0.0
    %3304 = vmatpush1.xpose.msra.mxu0 0.0
    %3305 = vmatprep.subr.mxu0 0.0
    %3306 = vmatpush1.xpose.msra.mxu0 0.0
    %3307 = vmatprep.subr.mxu0 0.0
    %3308 = vmatpush1.xpose.msra.mxu0 0.0
    %3309 = vmatprep.subr.mxu0 0.0
    %3310 = vmatpush1.xpose.msra.mxu0 0.0
    %3311 = vmatprep.subr.mxu0 0.0
    %3312 = vmatpush1.xpose.msra.mxu0 0.0
    %3313 = vmatprep.subr.mxu0 0.0
    %3314 = vmatpush1.xpose.msra.mxu0 0.0
    %3315 = vmatprep.subr.mxu0 0.0
    %3316 = vmatpush1.xpose.msra.mxu0 0.0
    %3317 = vmatprep.subr.mxu0 0.0
    %3318 = vmatpush1.xpose.msra.mxu0 0.0
    %3319 = vmatprep.subr.mxu0 0.0
    %3320 = vmatpush1.xpose.msra.mxu0 0.0
    %3321 = vmatprep.subr.mxu0 0.0
    %3322 = vmatpush1.xpose.msra.mxu0 0.0
    %3323 = vmatprep.subr.mxu0 0.0
    %3324 = vmatpush1.xpose.msra.mxu0 0.0
    %3325 = vmatprep.subr.mxu0 0.0
    %3326 = vmatpush1.xpose.msra.mxu0 0.0
    %3327 = vmatprep.subr.mxu0 0.0
    %3328 = vmatpush1.xpose.msra.mxu0 0.0
    %3329 = vmatprep.subr.mxu0 0.0
    %3330 = vmatpush1.xpose.msra.mxu0 0.0
    %3331 = vmatprep.subr.mxu0 0.0
    %3332 = vmatpush1.xpose.msra.mxu0 0.0
    %3333 = vmatprep.subr.mxu0 0.0
    %3334 = vmatpush1.xpose.msra.mxu0 0.0
    %3335 = vmatprep.subr.mxu0 0.0
    %3336 = vmatpush1.xpose.msra.mxu0 0.0
    %3337 = vmatprep.mubr.f32.mxu0 0.0
    %3338 = vmatmul.mubr.f32.gmra.mrb[0].mxu0 %v3249
    %v3339 = vpop.f32.mrb[0].mxu0
    %v3340 = vadd.f32 0.0, %v3339
    %v3341 = vpop.f32.mrb[0].mxu0
    %3342 = vmatprep.mubr.f32.mxu0 0.0
    %3343 = vmatmul.mubr.f32.gmra.mrb[0].mxu0 %v3251
    %v3344 = vpop.f32.mrb[0].mxu0
    %v3345 = vadd.f32 0.0, %v3344
    %v3346 = vpop.f32.mrb[0].mxu0
    %3347 = vmatprep.mubr.f32.mxu0 0.0
    %3348 = vmatmul.mubr.f32.gmra.mrb[0].mxu0 %v3253
    %v3349 = vpop.f32.mrb[0].mxu0
    %v3350 = vadd.f32 0.0, %v3349
    %v3351 = vpop.f32.mrb[0].mxu0
    %3352 = vmatprep.mubr.f32.mxu0 0.0
    %3353 = vmatmul.mubr.f32.gmra.mrb[0].mxu0 %v3255
    %v3354 = vpop.f32.mrb[0].mxu0
    %v3355 = vadd.f32 0.0, %v3354
    %v3356 = vpop.f32.mrb[0].mxu0
    %3357 = vmatprep.mubr.f32.mxu0 0.0
    %3358 = vmatmul.mubr.f32.gmra.mrb[0].mxu0 %v3257
    %v3359 = vpop.f32.mrb[0].mxu0
    %v3360 = vadd.f32 0.0, %v3359
    %v3361 = vpop.f32.mrb[0].mxu0
    %3362 = vmatprep.mubr.f32.mxu0 0.0
    %3363 = vmatmul.mubr.f32.gmra.mrb[0].mxu0 %v3259
    %v3364 = vpop.f32.mrb[0].mxu0
    %v3365 = vadd.f32 0.0, %v3364
    %v3366 = vpop.f32.mrb[0].mxu0
    %3367 = vdwg.mxu0
    %v3368 = vsel %vm363, %v3340, -1e+30
    %v3369 = vsel %vm364, %v3345, -1e+30
    %v3370 = vsel %vm365, %v3350, -1e+30
    %v3371 = vsel %vm366, %v3355, -1e+30
    %v3372 = vsel %vm367, %v3360, -1e+30
    %v3373 = vsel %vm368, %v3365, -1e+30
    %v3374 = vsel %vm736, %v3368, -inf
    %3375 = vmax.xlane.f32.xlu0 %v3374
    %v3376 = vpop.xlane.xlu0 %3375
    %v3377 = vsel %vm736, %v3369, -inf
    %3378 = vmax.xlane.f32.xlu0 %v3377
    %v3379 = vpop.xlane.xlu0 %3378
    %v3380 = vsel %vm736, %v3370, -inf
    %3381 = vmax.xlane.f32.xlu0 %v3380
    %v3382 = vpop.xlane.xlu0 %3381
    %v3383 = vsel %vm736, %v3371, -inf
    %3384 = vmax.xlane.f32.xlu0 %v3383
    %v3385 = vpop.xlane.xlu0 %3384
    %v3386 = vsel %vm736, %v3372, -inf
    %3387 = vmax.xlane.f32.xlu0 %v3386
    %v3388 = vpop.xlane.xlu0 %3387
    %v3389 = vsel %vm736, %v3373, -inf
    %3390 = vmax.xlane.f32.xlu0 %v3389
    %v3391 = vpop.xlane.xlu0 %3390
    %v3392 = vsub.f32 %v3368, %v3376
    %v3393 = vsub.f32 %v3369, %v3379
    %v3394 = vsub.f32 %v3370, %v3382
    %v3395 = vsub.f32 %v3371, %v3385
    %v3396 = vsub.f32 %v3372, %v3388
    %v3397 = vsub.f32 %v3373, %v3391
    %v3398 = vmul.f32 %v3392, 1.442695
    %v3399 = vpow.pop %v3398
    %v3400 = vmul.f32 %v3393, 1.442695
    %v3401 = vpow.pop %v3400
    %v3402 = vmul.f32 %v3394, 1.442695
    %v3403 = vpow.pop %v3402
    %v3404 = vmul.f32 %v3395, 1.442695
    %v3405 = vpow.pop %v3404
    %v3406 = vmul.f32 %v3396, 1.442695
    %v3407 = vpow.pop %v3406
    %v3408 = vmul.f32 %v3397, 1.442695
    %v3409 = vpow.pop %v3408
    %v3410 = vsel %vm736, %v3399, 0.0
    %3411 = vadd.xlane.f32.xlu0 %v3410
    %v3412 = vpop.xlane.xlu0 %3411
    %v3413 = vsel %vm736, %v3401, 0.0
    %3414 = vadd.xlane.f32.xlu0 %v3413
    %v3415 = vpop.xlane.xlu0 %3414
    %v3416 = vsel %vm736, %v3403, 0.0
    %3417 = vadd.xlane.f32.xlu0 %v3416
    %v3418 = vpop.xlane.xlu0 %3417
    %v3419 = vsel %vm736, %v3405, 0.0
    %3420 = vadd.xlane.f32.xlu0 %v3419
    %v3421 = vpop.xlane.xlu0 %3420
    %v3422 = vsel %vm736, %v3407, 0.0
    %3423 = vadd.xlane.f32.xlu0 %v3422
    %v3424 = vpop.xlane.xlu0 %3423
    %v3425 = vsel %vm736, %v3409, 0.0
    %3426 = vadd.xlane.f32.xlu0 %v3425
    %v3427 = vpop.xlane.xlu0 %3426
    %v3428 = vrcp.pop %v3412
    %v3429 = vmul.f32 1.0, %v3428
    %v3430 = vrcp.pop %v3415
    %v3431 = vmul.f32 1.0, %v3430
    %v3432 = vrcp.pop %v3418
    %v3433 = vmul.f32 1.0, %v3432
    %v3434 = vrcp.pop %v3421
    %v3435 = vmul.f32 1.0, %v3434
    %v3436 = vrcp.pop %v3424
    %v3437 = vmul.f32 1.0, %v3436
    %v3438 = vrcp.pop %v3427
    %v3439 = vmul.f32 1.0, %v3438
    %v3440 = vmul.f32 %v3399, %v3429
    %v3441 = vmul.f32 %v3401, %v3431
    %v3442 = vmul.f32 %v3403, %v3433
    %v3443 = vmul.f32 %v3405, %v3435
    %v3444 = vmul.f32 %v3407, %v3437
    %v3445 = vmul.f32 %v3409, %v3439
    %3446 = vrot.lane.b32.xlu0 %v2845, 56
    %v3447 = vpop.permute.xlu0 %3446
    %3448 = vrot.lane.b32.xlu0 %v2850, 56
    %v3449 = vpop.permute.xlu0 %3448
    %3450 = vrot.lane.b32.xlu0 %v2855, 56
    %v3451 = vpop.permute.xlu0 %3450
    %3452 = vrot.lane.b32.xlu0 %v2860, 56
    %v3453 = vpop.permute.xlu0 %3452
    %3454 = vrot.lane.b32.xlu0 %v2865, 56
    %v3455 = vpop.permute.xlu0 %3454
    %3456 = vrot.lane.b32.xlu0 %v2870, 56
    %v3457 = vpop.permute.xlu0 %3456
    %v3465 = vsel %vm736, %v3440, 0
    %v3468 = vsel %vm736, %v3441, 0
    %v3471 = vsel %vm736, %v3442, 0
    %v3474 = vsel %vm736, %v3443, 0
    %v3477 = vsel %vm736, %v3444, 0
    %v3480 = vsel %vm736, %v3445, 0
    %3482 = vmatprep.subr.mxu0 0.0
    %3483 = vmatpush1.msra.mxu0 %v3447
    %3484 = vmatprep.subr.mxu0 0.0
    %3485 = vmatpush1.msra.mxu0 %v3449
    %3486 = vmatprep.subr.mxu0 0.0
    %3487 = vmatpush1.msra.mxu0 %v3451
    %3488 = vmatprep.subr.mxu0 0.0
    %3489 = vmatpush1.msra.mxu0 %v3453
    %3490 = vmatprep.subr.mxu0 0.0
    %3491 = vmatpush1.msra.mxu0 %v3455
    %3492 = vmatprep.subr.mxu0 0.0
    %3493 = vmatpush1.msra.mxu0 %v3457
    %3494 = vmatprep.subr.mxu0 0.0
    %3495 = vmatpush1.msra.mxu0 0.0
    %3496 = vmatprep.subr.mxu0 0.0
    %3497 = vmatpush1.msra.mxu0 0.0
    %3498 = vmatprep.subr.mxu0 0.0
    %3499 = vmatpush1.msra.mxu0 0.0
    %3500 = vmatprep.subr.mxu0 0.0
    %3501 = vmatpush1.msra.mxu0 0.0
    %3502 = vmatprep.subr.mxu0 0.0
    %3503 = vmatpush1.msra.mxu0 0.0
    %3504 = vmatprep.subr.mxu0 0.0
    %3505 = vmatpush1.msra.mxu0 0.0
    %3506 = vmatprep.subr.mxu0 0.0
    %3507 = vmatpush1.msra.mxu0 0.0
    %3508 = vmatprep.subr.mxu0 0.0
    %3509 = vmatpush1.msra.mxu0 0.0
    %3510 = vmatprep.subr.mxu0 0.0
    %3511 = vmatpush1.msra.mxu0 0.0
    %3512 = vmatprep.subr.mxu0 0.0
    %3513 = vmatpush1.msra.mxu0 0.0
    %3514 = vmatprep.subr.mxu0 0.0
    %3515 = vmatpush1.msra.mxu0 0.0
    %3516 = vmatprep.subr.mxu0 0.0
    %3517 = vmatpush1.msra.mxu0 0.0
    %3518 = vmatprep.subr.mxu0 0.0
    %3519 = vmatpush1.msra.mxu0 0.0
    %3520 = vmatprep.subr.mxu0 0.0
    %3521 = vmatpush1.msra.mxu0 0.0
    %3522 = vmatprep.subr.mxu0 0.0
    %3523 = vmatpush1.msra.mxu0 0.0
    %3524 = vmatprep.subr.mxu0 0.0
    %3525 = vmatpush1.msra.mxu0 0.0
    %3526 = vmatprep.subr.mxu0 0.0
    %3527 = vmatpush1.msra.mxu0 0.0
    %3528 = vmatprep.subr.mxu0 0.0
    %3529 = vmatpush1.msra.mxu0 0.0
    %3530 = vmatprep.subr.mxu0 0.0
    %3531 = vmatpush1.msra.mxu0 0.0
    %3532 = vmatprep.subr.mxu0 0.0
    %3533 = vmatpush1.msra.mxu0 0.0
    %3534 = vmatprep.subr.mxu0 0.0
    %3535 = vmatpush1.msra.mxu0 0.0
    %3536 = vmatprep.subr.mxu0 0.0
    %3537 = vmatpush1.msra.mxu0 0.0
    %3538 = vmatprep.subr.mxu0 0.0
    %3539 = vmatpush1.msra.mxu0 0.0
    %3540 = vmatprep.subr.mxu0 0.0
    %3541 = vmatpush1.msra.mxu0 0.0
    %3542 = vmatprep.subr.mxu0 0.0
    %3543 = vmatpush1.msra.mxu0 0.0
    %3544 = vmatprep.subr.mxu0 0.0
    %3545 = vmatpush1.msra.mxu0 0.0
    %3546 = vmatprep.mubr.f32.mxu0 0.0
    %3547 = vmatmul.mubr.f32.gmra.mrb[0].mxu0 %v3465
    %v3548 = vpop.f32.mrb[0].mxu0
    %v3549 = vadd.f32 0.0, %v3548
    %v3550 = vpop.f32.mrb[0].mxu0
    %3551 = vmatprep.mubr.f32.mxu0 0.0
    %3552 = vmatmul.mubr.f32.gmra.mrb[0].mxu0 %v3468
    %v3553 = vpop.f32.mrb[0].mxu0
    %v3554 = vadd.f32 0.0, %v3553
    %v3555 = vpop.f32.mrb[0].mxu0
    %3556 = vmatprep.mubr.f32.mxu0 0.0
    %3557 = vmatmul.mubr.f32.gmra.mrb[0].mxu0 %v3471
    %v3558 = vpop.f32.mrb[0].mxu0
    %v3559 = vadd.f32 0.0, %v3558
    %v3560 = vpop.f32.mrb[0].mxu0
    %3561 = vmatprep.mubr.f32.mxu0 0.0
    %3562 = vmatmul.mubr.f32.gmra.mrb[0].mxu0 %v3474
    %v3563 = vpop.f32.mrb[0].mxu0
    %v3564 = vadd.f32 0.0, %v3563
    %v3565 = vpop.f32.mrb[0].mxu0
    %3566 = vmatprep.mubr.f32.mxu0 0.0
    %3567 = vmatmul.mubr.f32.gmra.mrb[0].mxu0 %v3477
    %v3568 = vpop.f32.mrb[0].mxu0
    %v3569 = vadd.f32 0.0, %v3568
    %v3570 = vpop.f32.mrb[0].mxu0
    %3571 = vmatprep.mubr.f32.mxu0 0.0
    %3572 = vmatmul.mubr.f32.gmra.mrb[0].mxu0 %v3480
    %v3573 = vpop.f32.mrb[0].mxu0
    %v3574 = vadd.f32 0.0, %v3573
    %v3575 = vpop.f32.mrb[0].mxu0
    %3576 = vdwg.mxu0
    %3583 = vrot.lane.b32.xlu0 %v3549, 8
    %v3584 = vpop.permute.xlu0 %3583
    %3585 = vrot.lane.b32.xlu0 %v3554, 8
    %v3586 = vpop.permute.xlu0 %3585
    %3587 = vrot.lane.b32.xlu0 %v3559, 8
    %v3588 = vpop.permute.xlu0 %3587
    %3589 = vrot.lane.b32.xlu0 %v3564, 8
    %v3590 = vpop.permute.xlu0 %3589
    %3591 = vrot.lane.b32.xlu0 %v3569, 8
    %v3592 = vpop.permute.xlu0 %3591
    %3593 = vrot.lane.b32.xlu0 %v3574, 8
    %v3594 = vpop.permute.xlu0 %3593
    %3601 = vst.msk [vmem:[#allocation3] sm:$0xff] %vm1322, %v3584
    %3602 = vst.msk [vmem:[#allocation3 + $0x8] sm:$0xff] %vm1322, %v3586
    %3603 = vst.msk [vmem:[#allocation3 + $0x10] sm:$0xff] %vm1322, %v3588
    %3604 = vst.msk [vmem:[#allocation3 + $0x18] sm:$0xff] %vm1322, %v3590
    %3605 = vst.msk [vmem:[#allocation3 + $0x20] sm:$0xff] %vm1322, %v3592
    %3606 = vst.msk [vmem:[#allocation3 + $0x28] sm:$0xff] %vm1322, %v3594
    %3607 = vrot.lane.b32.xlu0 %v2845, 112
    %v3608 = vpop.permute.xlu0 %3607
    %3609 = vrot.lane.b32.xlu0 %v2850, 112
    %v3610 = vpop.permute.xlu0 %3609
    %3611 = vrot.lane.b32.xlu0 %v2855, 112
    %v3612 = vpop.permute.xlu0 %3611
    %3613 = vrot.lane.b32.xlu0 %v2860, 112
    %v3614 = vpop.permute.xlu0 %3613
    %3615 = vrot.lane.b32.xlu0 %v2865, 112
    %v3616 = vpop.permute.xlu0 %3615
    %3617 = vrot.lane.b32.xlu0 %v2870, 112
    %v3618 = vpop.permute.xlu0 %3617
    %3619 = vrot.lane.b32.xlu0 %v2845, 80
    %v3620 = vpop.permute.xlu0 %3619
    %3621 = vrot.lane.b32.xlu0 %v2850, 80
    %v3622 = vpop.permute.xlu0 %3621
    %3623 = vrot.lane.b32.xlu0 %v2855, 80
    %v3624 = vpop.permute.xlu0 %3623
    %3625 = vrot.lane.b32.xlu0 %v2860, 80
    %v3626 = vpop.permute.xlu0 %3625
    %3627 = vrot.lane.b32.xlu0 %v2865, 80
    %v3628 = vpop.permute.xlu0 %3627
    %3629 = vrot.lane.b32.xlu0 %v2870, 80
    %v3630 = vpop.permute.xlu0 %3629
    %v3631 = vsel %vm610, %v3608, 0
    %v3633 = vsel %vm610, %v3610, 0
    %v3635 = vsel %vm610, %v3612, 0
    %v3637 = vsel %vm610, %v3614, 0
    %v3639 = vsel %vm610, %v3616, 0
    %v3641 = vsel %vm610, %v3618, 0
    %v3643 = vsel %vm610, %v3620, 0
    %v3645 = vsel %vm610, %v3622, 0
    %v3647 = vsel %vm610, %v3624, 0
    %v3649 = vsel %vm610, %v3626, 0
    %v3651 = vsel %vm610, %v3628, 0
    %v3653 = vsel %vm610, %v3630, 0
    %3655 = vmatprep.subr.mxu0 0.0
    %3656 = vmatpush1.xpose.msra.mxu0 %v3643
    %3657 = vmatprep.subr.mxu0 0.0
    %3658 = vmatpush1.xpose.msra.mxu0 %v3645
    %3659 = vmatprep.subr.mxu0 0.0
    %3660 = vmatpush1.xpose.msra.mxu0 %v3647
    %3661 = vmatprep.subr.mxu0 0.0
    %3662 = vmatpush1.xpose.msra.mxu0 %v3649
    %3663 = vmatprep.subr.mxu0 0.0
    %3664 = vmatpush1.xpose.msra.mxu0 %v3651
    %3665 = vmatprep.subr.mxu0 0.0
    %3666 = vmatpush1.xpose.msra.mxu0 %v3653
    %3667 = vmatprep.subr.mxu0 0.0
    %3668 = vmatpush1.xpose.msra.mxu0 0.0
    %3669 = vmatprep.subr.mxu0 0.0
    %3670 = vmatpush1.xpose.msra.mxu0 0.0
    %3671 = vmatprep.subr.mxu0 0.0
    %3672 = vmatpush1.xpose.msra.mxu0 0.0
    %3673 = vmatprep.subr.mxu0 0.0
    %3674 = vmatpush1.xpose.msra.mxu0 0.0
    %3675 = vmatprep.subr.mxu0 0.0
    %3676 = vmatpush1.xpose.msra.mxu0 0.0
    %3677 = vmatprep.subr.mxu0 0.0
    %3678 = vmatpush1.xpose.msra.mxu0 0.0
    %3679 = vmatprep.subr.mxu0 0.0
    %3680 = vmatpush1.xpose.msra.mxu0 0.0
    %3681 = vmatprep.subr.mxu0 0.0
    %3682 = vmatpush1.xpose.msra.mxu0 0.0
    %3683 = vmatprep.subr.mxu0 0.0
    %3684 = vmatpush1.xpose.msra.mxu0 0.0
    %3685 = vmatprep.subr.mxu0 0.0
    %3686 = vmatpush1.xpose.msra.mxu0 0.0
    %3687 = vmatprep.subr.mxu0 0.0
    %3688 = vmatpush1.xpose.msra.mxu0 0.0
    %3689 = vmatprep.subr.mxu0 0.0
    %3690 = vmatpush1.xpose.msra.mxu0 0.0
    %3691 = vmatprep.subr.mxu0 0.0
    %3692 = vmatpush1.xpose.msra.mxu0 0.0
    %3693 = vmatprep.subr.mxu0 0.0
    %3694 = vmatpush1.xpose.msra.mxu0 0.0
    %3695 = vmatprep.subr.mxu0 0.0
    %3696 = vmatpush1.xpose.msra.mxu0 0.0
    %3697 = vmatprep.subr.mxu0 0.0
    %3698 = vmatpush1.xpose.msra.mxu0 0.0
    %3699 = vmatprep.subr.mxu0 0.0
    %3700 = vmatpush1.xpose.msra.mxu0 0.0
    %3701 = vmatprep.subr.mxu0 0.0
    %3702 = vmatpush1.xpose.msra.mxu0 0.0
    %3703 = vmatprep.subr.mxu0 0.0
    %3704 = vmatpush1.xpose.msra.mxu0 0.0
    %3705 = vmatprep.subr.mxu0 0.0
    %3706 = vmatpush1.xpose.msra.mxu0 0.0
    %3707 = vmatprep.subr.mxu0 0.0
    %3708 = vmatpush1.xpose.msra.mxu0 0.0
    %3709 = vmatprep.subr.mxu0 0.0
    %3710 = vmatpush1.xpose.msra.mxu0 0.0
    %3711 = vmatprep.subr.mxu0 0.0
    %3712 = vmatpush1.xpose.msra.mxu0 0.0
    %3713 = vmatprep.subr.mxu0 0.0
    %3714 = vmatpush1.xpose.msra.mxu0 0.0
    %3715 = vmatprep.subr.mxu0 0.0
    %3716 = vmatpush1.xpose.msra.mxu0 0.0
    %3717 = vmatprep.subr.mxu0 0.0
    %3718 = vmatpush1.xpose.msra.mxu0 0.0
    %3719 = vmatprep.mubr.f32.mxu0 0.0
    %3720 = vmatmul.mubr.f32.gmra.mrb[0].mxu0 %v3631
    %v3721 = vpop.f32.mrb[0].mxu0
    %v3722 = vadd.f32 0.0, %v3721
    %v3723 = vpop.f32.mrb[0].mxu0
    %3724 = vmatprep.mubr.f32.mxu0 0.0
    %3725 = vmatmul.mubr.f32.gmra.mrb[0].mxu0 %v3633
    %v3726 = vpop.f32.mrb[0].mxu0
    %v3727 = vadd.f32 0.0, %v3726
    %v3728 = vpop.f32.mrb[0].mxu0
    %3729 = vmatprep.mubr.f32.mxu0 0.0
    %3730 = vmatmul.mubr.f32.gmra.mrb[0].mxu0 %v3635
    %v3731 = vpop.f32.mrb[0].mxu0
    %v3732 = vadd.f32 0.0, %v3731
    %v3733 = vpop.f32.mrb[0].mxu0
    %3734 = vmatprep.mubr.f32.mxu0 0.0
    %3735 = vmatmul.mubr.f32.gmra.mrb[0].mxu0 %v3637
    %v3736 = vpop.f32.mrb[0].mxu0
    %v3737 = vadd.f32 0.0, %v3736
    %v3738 = vpop.f32.mrb[0].mxu0
    %3739 = vmatprep.mubr.f32.mxu0 0.0
    %3740 = vmatmul.mubr.f32.gmra.mrb[0].mxu0 %v3639
    %v3741 = vpop.f32.mrb[0].mxu0
    %v3742 = vadd.f32 0.0, %v3741
    %v3743 = vpop.f32.mrb[0].mxu0
    %3744 = vmatprep.mubr.f32.mxu0 0.0
    %3745 = vmatmul.mubr.f32.gmra.mrb[0].mxu0 %v3641
    %v3746 = vpop.f32.mrb[0].mxu0
    %v3747 = vadd.f32 0.0, %v3746
    %v3748 = vpop.f32.mrb[0].mxu0
    %3749 = vdwg.mxu0
    %v3750 = vsel %vm363, %v3722, -1e+30
    %v3751 = vsel %vm364, %v3727, -1e+30
    %v3752 = vsel %vm365, %v3732, -1e+30
    %v3753 = vsel %vm366, %v3737, -1e+30
    %v3754 = vsel %vm367, %v3742, -1e+30
    %v3755 = vsel %vm368, %v3747, -1e+30
    %v3756 = vsel %vm736, %v3750, -inf
    %3757 = vmax.xlane.f32.xlu0 %v3756
    %v3758 = vpop.xlane.xlu0 %3757
    %v3759 = vsel %vm736, %v3751, -inf
    %3760 = vmax.xlane.f32.xlu0 %v3759
    %v3761 = vpop.xlane.xlu0 %3760
    %v3762 = vsel %vm736, %v3752, -inf
    %3763 = vmax.xlane.f32.xlu0 %v3762
    %v3764 = vpop.xlane.xlu0 %3763
    %v3765 = vsel %vm736, %v3753, -inf
    %3766 = vmax.xlane.f32.xlu0 %v3765
    %v3767 = vpop.xlane.xlu0 %3766
    %v3768 = vsel %vm736, %v3754, -inf
    %3769 = vmax.xlane.f32.xlu0 %v3768
    %v3770 = vpop.xlane.xlu0 %3769
    %v3771 = vsel %vm736, %v3755, -inf
    %3772 = vmax.xlane.f32.xlu0 %v3771
    %v3773 = vpop.xlane.xlu0 %3772
    %v3774 = vsub.f32 %v3750, %v3758
    %v3775 = vsub.f32 %v3751, %v3761
    %v3776 = vsub.f32 %v3752, %v3764
    %v3777 = vsub.f32 %v3753, %v3767
    %v3778 = vsub.f32 %v3754, %v3770
    %v3779 = vsub.f32 %v3755, %v3773
    %v3780 = vmul.f32 %v3774, 1.442695
    %v3781 = vpow.pop %v3780
    %v3782 = vmul.f32 %v3775, 1.442695
    %v3783 = vpow.pop %v3782
    %v3784 = vmul.f32 %v3776, 1.442695
    %v3785 = vpow.pop %v3784
    %v3786 = vmul.f32 %v3777, 1.442695
    %v3787 = vpow.pop %v3786
    %v3788 = vmul.f32 %v3778, 1.442695
    %v3789 = vpow.pop %v3788
    %v3790 = vmul.f32 %v3779, 1.442695
    %v3791 = vpow.pop %v3790
    %v3792 = vsel %vm736, %v3781, 0.0
    %3793 = vadd.xlane.f32.xlu0 %v3792
    %v3794 = vpop.xlane.xlu0 %3793
    %v3795 = vsel %vm736, %v3783, 0.0
    %3796 = vadd.xlane.f32.xlu0 %v3795
    %v3797 = vpop.xlane.xlu0 %3796
    %v3798 = vsel %vm736, %v3785, 0.0
    %3799 = vadd.xlane.f32.xlu0 %v3798
    %v3800 = vpop.xlane.xlu0 %3799
    %v3801 = vsel %vm736, %v3787, 0.0
    %3802 = vadd.xlane.f32.xlu0 %v3801
    %v3803 = vpop.xlane.xlu0 %3802
    %v3804 = vsel %vm736, %v3789, 0.0
    %3805 = vadd.xlane.f32.xlu0 %v3804
    %v3806 = vpop.xlane.xlu0 %3805
    %v3807 = vsel %vm736, %v3791, 0.0
    %3808 = vadd.xlane.f32.xlu0 %v3807
    %v3809 = vpop.xlane.xlu0 %3808
    %v3810 = vrcp.pop %v3794
    %v3811 = vmul.f32 1.0, %v3810
    %v3812 = vrcp.pop %v3797
    %v3813 = vmul.f32 1.0, %v3812
    %v3814 = vrcp.pop %v3800
    %v3815 = vmul.f32 1.0, %v3814
    %v3816 = vrcp.pop %v3803
    %v3817 = vmul.f32 1.0, %v3816
    %v3818 = vrcp.pop %v3806
    %v3819 = vmul.f32 1.0, %v3818
    %v3820 = vrcp.pop %v3809
    %v3821 = vmul.f32 1.0, %v3820
    %v3822 = vmul.f32 %v3781, %v3811
    %v3823 = vmul.f32 %v3783, %v3813
    %v3824 = vmul.f32 %v3785, %v3815
    %v3825 = vmul.f32 %v3787, %v3817
    %v3826 = vmul.f32 %v3789, %v3819
    %v3827 = vmul.f32 %v3791, %v3821
    %3828 = vrot.lane.b32.xlu0 %v2845, 48
    %v3829 = vpop.permute.xlu0 %3828
    %3830 = vrot.lane.b32.xlu0 %v2850, 48
    %v3831 = vpop.permute.xlu0 %3830
    %3832 = vrot.lane.b32.xlu0 %v2855, 48
    %v3833 = vpop.permute.xlu0 %3832
    %3834 = vrot.lane.b32.xlu0 %v2860, 48
    %v3835 = vpop.permute.xlu0 %3834
    %3836 = vrot.lane.b32.xlu0 %v2865, 48
    %v3837 = vpop.permute.xlu0 %3836
    %3838 = vrot.lane.b32.xlu0 %v2870, 48
    %v3839 = vpop.permute.xlu0 %3838
    %v3847 = vsel %vm736, %v3822, 0
    %v3850 = vsel %vm736, %v3823, 0
    %v3853 = vsel %vm736, %v3824, 0
    %v3856 = vsel %vm736, %v3825, 0
    %v3859 = vsel %vm736, %v3826, 0
    %v3862 = vsel %vm736, %v3827, 0
    %3864 = vmatprep.subr.mxu0 0.0
    %3865 = vmatpush1.msra.mxu0 %v3829
    %3866 = vmatprep.subr.mxu0 0.0
    %3867 = vmatpush1.msra.mxu0 %v3831
    %3868 = vmatprep.subr.mxu0 0.0
    %3869 = vmatpush1.msra.mxu0 %v3833
    %3870 = vmatprep.subr.mxu0 0.0
    %3871 = vmatpush1.msra.mxu0 %v3835
    %3872 = vmatprep.subr.mxu0 0.0
    %3873 = vmatpush1.msra.mxu0 %v3837
    %3874 = vmatprep.subr.mxu0 0.0
    %3875 = vmatpush1.msra.mxu0 %v3839
    %3876 = vmatprep.subr.mxu0 0.0
    %3877 = vmatpush1.msra.mxu0 0.0
    %3878 = vmatprep.subr.mxu0 0.0
    %3879 = vmatpush1.msra.mxu0 0.0
    %3880 = vmatprep.subr.mxu0 0.0
    %3881 = vmatpush1.msra.mxu0 0.0
    %3882 = vmatprep.subr.mxu0 0.0
    %3883 = vmatpush1.msra.mxu0 0.0
    %3884 = vmatprep.subr.mxu0 0.0
    %3885 = vmatpush1.msra.mxu0 0.0
    %3886 = vmatprep.subr.mxu0 0.0
    %3887 = vmatpush1.msra.mxu0 0.0
    %3888 = vmatprep.subr.mxu0 0.0
    %3889 = vmatpush1.msra.mxu0 0.0
    %3890 = vmatprep.subr.mxu0 0.0
    %3891 = vmatpush1.msra.mxu0 0.0
    %3892 = vmatprep.subr.mxu0 0.0
    %3893 = vmatpush1.msra.mxu0 0.0
    %3894 = vmatprep.subr.mxu0 0.0
    %3895 = vmatpush1.msra.mxu0 0.0
    %3896 = vmatprep.subr.mxu0 0.0
    %3897 = vmatpush1.msra.mxu0 0.0
    %3898 = vmatprep.subr.mxu0 0.0
    %3899 = vmatpush1.msra.mxu0 0.0
    %3900 = vmatprep.subr.mxu0 0.0
    %3901 = vmatpush1.msra.mxu0 0.0
    %3902 = vmatprep.subr.mxu0 0.0
    %3903 = vmatpush1.msra.mxu0 0.0
    %3904 = vmatprep.subr.mxu0 0.0
    %3905 = vmatpush1.msra.mxu0 0.0
    %3906 = vmatprep.subr.mxu0 0.0
    %3907 = vmatpush1.msra.mxu0 0.0
    %3908 = vmatprep.subr.mxu0 0.0
    %3909 = vmatpush1.msra.mxu0 0.0
    %3910 = vmatprep.subr.mxu0 0.0
    %3911 = vmatpush1.msra.mxu0 0.0
    %3912 = vmatprep.subr.mxu0 0.0
    %3913 = vmatpush1.msra.mxu0 0.0
    %3914 = vmatprep.subr.mxu0 0.0
    %3915 = vmatpush1.msra.mxu0 0.0
    %3916 = vmatprep.subr.mxu0 0.0
    %3917 = vmatpush1.msra.mxu0 0.0
    %3918 = vmatprep.subr.mxu0 0.0
    %3919 = vmatpush1.msra.mxu0 0.0
    %3920 = vmatprep.subr.mxu0 0.0
    %3921 = vmatpush1.msra.mxu0 0.0
    %3922 = vmatprep.subr.mxu0 0.0
    %3923 = vmatpush1.msra.mxu0 0.0
    %3924 = vmatprep.subr.mxu0 0.0
    %3925 = vmatpush1.msra.mxu0 0.0
    %3926 = vmatprep.subr.mxu0 0.0
    %3927 = vmatpush1.msra.mxu0 0.0
    %3928 = vmatprep.mubr.f32.mxu0 0.0
    %3929 = vmatmul.mubr.f32.gmra.mrb[0].mxu0 %v3847
    %v3930 = vpop.f32.mrb[0].mxu0
    %v3931 = vadd.f32 0.0, %v3930
    %v3932 = vpop.f32.mrb[0].mxu0
    %3933 = vmatprep.mubr.f32.mxu0 0.0
    %3934 = vmatmul.mubr.f32.gmra.mrb[0].mxu0 %v3850
    %v3935 = vpop.f32.mrb[0].mxu0
    %v3936 = vadd.f32 0.0, %v3935
    %v3937 = vpop.f32.mrb[0].mxu0
    %3938 = vmatprep.mubr.f32.mxu0 0.0
    %3939 = vmatmul.mubr.f32.gmra.mrb[0].mxu0 %v3853
    %v3940 = vpop.f32.mrb[0].mxu0
    %v3941 = vadd.f32 0.0, %v3940
    %v3942 = vpop.f32.mrb[0].mxu0
    %3943 = vmatprep.mubr.f32.mxu0 0.0
    %3944 = vmatmul.mubr.f32.gmra.mrb[0].mxu0 %v3856
    %v3945 = vpop.f32.mrb[0].mxu0
    %v3946 = vadd.f32 0.0, %v3945
    %v3947 = vpop.f32.mrb[0].mxu0
    %3948 = vmatprep.mubr.f32.mxu0 0.0
    %3949 = vmatmul.mubr.f32.gmra.mrb[0].mxu0 %v3859
    %v3950 = vpop.f32.mrb[0].mxu0
    %v3951 = vadd.f32 0.0, %v3950
    %v3952 = vpop.f32.mrb[0].mxu0
    %3953 = vmatprep.mubr.f32.mxu0 0.0
    %3954 = vmatmul.mubr.f32.gmra.mrb[0].mxu0 %v3862
    %v3955 = vpop.f32.mrb[0].mxu0
    %v3956 = vadd.f32 0.0, %v3955
    %v3957 = vpop.f32.mrb[0].mxu0
    %3958 = vdwg.mxu0
    %3965 = vrot.lane.b32.xlu0 %v3931, 16
    %v3966 = vpop.permute.xlu0 %3965
    %3967 = vrot.lane.b32.xlu0 %v3936, 16
    %v3968 = vpop.permute.xlu0 %3967
    %3969 = vrot.lane.b32.xlu0 %v3941, 16
    %v3970 = vpop.permute.xlu0 %3969
    %3971 = vrot.lane.b32.xlu0 %v3946, 16
    %v3972 = vpop.permute.xlu0 %3971
    %3973 = vrot.lane.b32.xlu0 %v3951, 16
    %v3974 = vpop.permute.xlu0 %3973
    %3975 = vrot.lane.b32.xlu0 %v3956, 16
    %v3976 = vpop.permute.xlu0 %3975
    %3983 = vst.msk [vmem:[#allocation3] sm:$0xff] %vm1705, %v3966
    %3984 = vst.msk [vmem:[#allocation3 + $0x8] sm:$0xff] %vm1705, %v3968
    %3985 = vst.msk [vmem:[#allocation3 + $0x10] sm:$0xff] %vm1705, %v3970
    %3986 = vst.msk [vmem:[#allocation3 + $0x18] sm:$0xff] %vm1705, %v3972
    %3987 = vst.msk [vmem:[#allocation3 + $0x20] sm:$0xff] %vm1705, %v3974
    %3988 = vst.msk [vmem:[#allocation3 + $0x28] sm:$0xff] %vm1705, %v3976
    %3989 = vrot.lane.b32.xlu0 %v2845, 104
    %v3990 = vpop.permute.xlu0 %3989
    %3991 = vrot.lane.b32.xlu0 %v2850, 104
    %v3992 = vpop.permute.xlu0 %3991
    %3993 = vrot.lane.b32.xlu0 %v2855, 104
    %v3994 = vpop.permute.xlu0 %3993
    %3995 = vrot.lane.b32.xlu0 %v2860, 104
    %v3996 = vpop.permute.xlu0 %3995
    %3997 = vrot.lane.b32.xlu0 %v2865, 104
    %v3998 = vpop.permute.xlu0 %3997
    %3999 = vrot.lane.b32.xlu0 %v2870, 104
    %v4000 = vpop.permute.xlu0 %3999
    %4001 = vrot.lane.b32.xlu0 %v2845, 72
    %v4002 = vpop.permute.xlu0 %4001
    %4003 = vrot.lane.b32.xlu0 %v2850, 72
    %v4004 = vpop.permute.xlu0 %4003
    %4005 = vrot.lane.b32.xlu0 %v2855, 72
    %v4006 = vpop.permute.xlu0 %4005
    %4007 = vrot.lane.b32.xlu0 %v2860, 72
    %v4008 = vpop.permute.xlu0 %4007
    %4009 = vrot.lane.b32.xlu0 %v2865, 72
    %v4010 = vpop.permute.xlu0 %4009
    %4011 = vrot.lane.b32.xlu0 %v2870, 72
    %v4012 = vpop.permute.xlu0 %4011
    %v4013 = vsel %vm610, %v3990, 0
    %v4015 = vsel %vm610, %v3992, 0
    %v4017 = vsel %vm610, %v3994, 0
    %v4019 = vsel %vm610, %v3996, 0
    %v4021 = vsel %vm610, %v3998, 0
    %v4023 = vsel %vm610, %v4000, 0
    %v4025 = vsel %vm610, %v4002, 0
    %v4027 = vsel %vm610, %v4004, 0
    %v4029 = vsel %vm610, %v4006, 0
    %v4031 = vsel %vm610, %v4008, 0
    %v4033 = vsel %vm610, %v4010, 0
    %v4035 = vsel %vm610, %v4012, 0
    %4037 = vmatprep.subr.mxu0 0.0
    %4038 = vmatpush1.xpose.msra.mxu0 %v4025
    %4039 = vmatprep.subr.mxu0 0.0
    %4040 = vmatpush1.xpose.msra.mxu0 %v4027
    %4041 = vmatprep.subr.mxu0 0.0
    %4042 = vmatpush1.xpose.msra.mxu0 %v4029
    %4043 = vmatprep.subr.mxu0 0.0
    %4044 = vmatpush1.xpose.msra.mxu0 %v4031
    %4045 = vmatprep.subr.mxu0 0.0
    %4046 = vmatpush1.xpose.msra.mxu0 %v4033
    %4047 = vmatprep.subr.mxu0 0.0
    %4048 = vmatpush1.xpose.msra.mxu0 %v4035
    %4049 = vmatprep.subr.mxu0 0.0
    %4050 = vmatpush1.xpose.msra.mxu0 0.0
    %4051 = vmatprep.subr.mxu0 0.0
    %4052 = vmatpush1.xpose.msra.mxu0 0.0
    %4053 = vmatprep.subr.mxu0 0.0
    %4054 = vmatpush1.xpose.msra.mxu0 0.0
    %4055 = vmatprep.subr.mxu0 0.0
    %4056 = vmatpush1.xpose.msra.mxu0 0.0
    %4057 = vmatprep.subr.mxu0 0.0
    %4058 = vmatpush1.xpose.msra.mxu0 0.0
    %4059 = vmatprep.subr.mxu0 0.0
    %4060 = vmatpush1.xpose.msra.mxu0 0.0
    %4061 = vmatprep.subr.mxu0 0.0
    %4062 = vmatpush1.xpose.msra.mxu0 0.0
    %4063 = vmatprep.subr.mxu0 0.0
    %4064 = vmatpush1.xpose.msra.mxu0 0.0
    %4065 = vmatprep.subr.mxu0 0.0
    %4066 = vmatpush1.xpose.msra.mxu0 0.0
    %4067 = vmatprep.subr.mxu0 0.0
    %4068 = vmatpush1.xpose.msra.mxu0 0.0
    %4069 = vmatprep.subr.mxu0 0.0
    %4070 = vmatpush1.xpose.msra.mxu0 0.0
    %4071 = vmatprep.subr.mxu0 0.0
    %4072 = vmatpush1.xpose.msra.mxu0 0.0
    %4073 = vmatprep.subr.mxu0 0.0
    %4074 = vmatpush1.xpose.msra.mxu0 0.0
    %4075 = vmatprep.subr.mxu0 0.0
    %4076 = vmatpush1.xpose.msra.mxu0 0.0
    %4077 = vmatprep.subr.mxu0 0.0
    %4078 = vmatpush1.xpose.msra.mxu0 0.0
    %4079 = vmatprep.subr.mxu0 0.0
    %4080 = vmatpush1.xpose.msra.mxu0 0.0
    %4081 = vmatprep.subr.mxu0 0.0
    %4082 = vmatpush1.xpose.msra.mxu0 0.0
    %4083 = vmatprep.subr.mxu0 0.0
    %4084 = vmatpush1.xpose.msra.mxu0 0.0
    %4085 = vmatprep.subr.mxu0 0.0
    %4086 = vmatpush1.xpose.msra.mxu0 0.0
    %4087 = vmatprep.subr.mxu0 0.0
    %4088 = vmatpush1.xpose.msra.mxu0 0.0
    %4089 = vmatprep.subr.mxu0 0.0
    %4090 = vmatpush1.xpose.msra.mxu0 0.0
    %4091 = vmatprep.subr.mxu0 0.0
    %4092 = vmatpush1.xpose.msra.mxu0 0.0
    %4093 = vmatprep.subr.mxu0 0.0
    %4094 = vmatpush1.xpose.msra.mxu0 0.0
    %4095 = vmatprep.subr.mxu0 0.0
    %4096 = vmatpush1.xpose.msra.mxu0 0.0
    %4097 = vmatprep.subr.mxu0 0.0
    %4098 = vmatpush1.xpose.msra.mxu0 0.0
    %4099 = vmatprep.subr.mxu0 0.0
    %4100 = vmatpush1.xpose.msra.mxu0 0.0
    %4101 = vmatprep.mubr.f32.mxu0 0.0
    %4102 = vmatmul.mubr.f32.gmra.mrb[0].mxu0 %v4013
    %v4103 = vpop.f32.mrb[0].mxu0
    %v4104 = vadd.f32 0.0, %v4103
    %v4105 = vpop.f32.mrb[0].mxu0
    %4106 = vmatprep.mubr.f32.mxu0 0.0
    %4107 = vmatmul.mubr.f32.gmra.mrb[0].mxu0 %v4015
    %v4108 = vpop.f32.mrb[0].mxu0
    %v4109 = vadd.f32 0.0, %v4108
    %v4110 = vpop.f32.mrb[0].mxu0
    %4111 = vmatprep.mubr.f32.mxu0 0.0
    %4112 = vmatmul.mubr.f32.gmra.mrb[0].mxu0 %v4017
    %v4113 = vpop.f32.mrb[0].mxu0
    %v4114 = vadd.f32 0.0, %v4113
    %v4115 = vpop.f32.mrb[0].mxu0
    %4116 = vmatprep.mubr.f32.mxu0 0.0
    %4117 = vmatmul.mubr.f32.gmra.mrb[0].mxu0 %v4019
    %v4118 = vpop.f32.mrb[0].mxu0
    %v4119 = vadd.f32 0.0, %v4118
    %v4120 = vpop.f32.mrb[0].mxu0
    %4121 = vmatprep.mubr.f32.mxu0 0.0
    %4122 = vmatmul.mubr.f32.gmra.mrb[0].mxu0 %v4021
    %v4123 = vpop.f32.mrb[0].mxu0
    %v4124 = vadd.f32 0.0, %v4123
    %v4125 = vpop.f32.mrb[0].mxu0
    %4126 = vmatprep.mubr.f32.mxu0 0.0
    %4127 = vmatmul.mubr.f32.gmra.mrb[0].mxu0 %v4023
    %v4128 = vpop.f32.mrb[0].mxu0
    %v4129 = vadd.f32 0.0, %v4128
    %v4130 = vpop.f32.mrb[0].mxu0
    %4131 = vdwg.mxu0
    %v4132 = vsel %vm363, %v4104, -1e+30
    %v4133 = vsel %vm364, %v4109, -1e+30
    %v4134 = vsel %vm365, %v4114, -1e+30
    %v4135 = vsel %vm366, %v4119, -1e+30
    %v4136 = vsel %vm367, %v4124, -1e+30
    %v4137 = vsel %vm368, %v4129, -1e+30
    %v4138 = vsel %vm736, %v4132, -inf
    %4139 = vmax.xlane.f32.xlu0 %v4138
    %v4140 = vpop.xlane.xlu0 %4139
    %v4141 = vsel %vm736, %v4133, -inf
    %4142 = vmax.xlane.f32.xlu0 %v4141
    %v4143 = vpop.xlane.xlu0 %4142
    %v4144 = vsel %vm736, %v4134, -inf
    %4145 = vmax.xlane.f32.xlu0 %v4144
    %v4146 = vpop.xlane.xlu0 %4145
    %v4147 = vsel %vm736, %v4135, -inf
    %4148 = vmax.xlane.f32.xlu0 %v4147
    %v4149 = vpop.xlane.xlu0 %4148
    %v4150 = vsel %vm736, %v4136, -inf
    %4151 = vmax.xlane.f32.xlu0 %v4150
    %v4152 = vpop.xlane.xlu0 %4151
    %v4153 = vsel %vm736, %v4137, -inf
    %4154 = vmax.xlane.f32.xlu0 %v4153
    %v4155 = vpop.xlane.xlu0 %4154
    %v4156 = vsub.f32 %v4132, %v4140
    %v4157 = vsub.f32 %v4133, %v4143
    %v4158 = vsub.f32 %v4134, %v4146
    %v4159 = vsub.f32 %v4135, %v4149
    %v4160 = vsub.f32 %v4136, %v4152
    %v4161 = vsub.f32 %v4137, %v4155
    %v4162 = vmul.f32 %v4156, 1.442695
    %v4163 = vpow.pop %v4162
    %v4164 = vmul.f32 %v4157, 1.442695
    %v4165 = vpow.pop %v4164
    %v4166 = vmul.f32 %v4158, 1.442695
    %v4167 = vpow.pop %v4166
    %v4168 = vmul.f32 %v4159, 1.442695
    %v4169 = vpow.pop %v4168
    %v4170 = vmul.f32 %v4160, 1.442695
    %v4171 = vpow.pop %v4170
    %v4172 = vmul.f32 %v4161, 1.442695
    %v4173 = vpow.pop %v4172
    %v4174 = vsel %vm736, %v4163, 0.0
    %4175 = vadd.xlane.f32.xlu0 %v4174
    %v4176 = vpop.xlane.xlu0 %4175
    %v4177 = vsel %vm736, %v4165, 0.0
    %4178 = vadd.xlane.f32.xlu0 %v4177
    %v4179 = vpop.xlane.xlu0 %4178
    %v4180 = vsel %vm736, %v4167, 0.0
    %4181 = vadd.xlane.f32.xlu0 %v4180
    %v4182 = vpop.xlane.xlu0 %4181
    %v4183 = vsel %vm736, %v4169, 0.0
    %4184 = vadd.xlane.f32.xlu0 %v4183
    %v4185 = vpop.xlane.xlu0 %4184
    %v4186 = vsel %vm736, %v4171, 0.0
    %4187 = vadd.xlane.f32.xlu0 %v4186
    %v4188 = vpop.xlane.xlu0 %4187
    %v4189 = vsel %vm736, %v4173, 0.0
    %4190 = vadd.xlane.f32.xlu0 %v4189
    %v4191 = vpop.xlane.xlu0 %4190
    %v4192 = vrcp.pop %v4176
    %v4193 = vmul.f32 1.0, %v4192
    %v4194 = vrcp.pop %v4179
    %v4195 = vmul.f32 1.0, %v4194
    %v4196 = vrcp.pop %v4182
    %v4197 = vmul.f32 1.0, %v4196
    %v4198 = vrcp.pop %v4185
    %v4199 = vmul.f32 1.0, %v4198
    %v4200 = vrcp.pop %v4188
    %v4201 = vmul.f32 1.0, %v4200
    %v4202 = vrcp.pop %v4191
    %v4203 = vmul.f32 1.0, %v4202
    %v4204 = vmul.f32 %v4163, %v4193
    %v4205 = vmul.f32 %v4165, %v4195
    %v4206 = vmul.f32 %v4167, %v4197
    %v4207 = vmul.f32 %v4169, %v4199
    %v4208 = vmul.f32 %v4171, %v4201
    %v4209 = vmul.f32 %v4173, %v4203
    %4210 = vrot.lane.b32.xlu0 %v2845, 40
    %v4211 = vpop.permute.xlu0 %4210
    %4212 = vrot.lane.b32.xlu0 %v2850, 40
    %v4213 = vpop.permute.xlu0 %4212
    %4214 = vrot.lane.b32.xlu0 %v2855, 40
    %v4215 = vpop.permute.xlu0 %4214
    %4216 = vrot.lane.b32.xlu0 %v2860, 40
    %v4217 = vpop.permute.xlu0 %4216
    %4218 = vrot.lane.b32.xlu0 %v2865, 40
    %v4219 = vpop.permute.xlu0 %4218
    %4220 = vrot.lane.b32.xlu0 %v2870, 40
    %v4221 = vpop.permute.xlu0 %4220
    %v4229 = vsel %vm736, %v4204, 0
    %v4232 = vsel %vm736, %v4205, 0
    %v4235 = vsel %vm736, %v4206, 0
    %v4238 = vsel %vm736, %v4207, 0
    %v4241 = vsel %vm736, %v4208, 0
    %v4244 = vsel %vm736, %v4209, 0
    %4246 = vmatprep.subr.mxu0 0.0
    %4247 = vmatpush1.msra.mxu0 %v4211
    %4248 = vmatprep.subr.mxu0 0.0
    %4249 = vmatpush1.msra.mxu0 %v4213
    %4250 = vmatprep.subr.mxu0 0.0
    %4251 = vmatpush1.msra.mxu0 %v4215
    %4252 = vmatprep.subr.mxu0 0.0
    %4253 = vmatpush1.msra.mxu0 %v4217
    %4254 = vmatprep.subr.mxu0 0.0
    %4255 = vmatpush1.msra.mxu0 %v4219
    %4256 = vmatprep.subr.mxu0 0.0
    %4257 = vmatpush1.msra.mxu0 %v4221
    %4258 = vmatprep.subr.mxu0 0.0
    %4259 = vmatpush1.msra.mxu0 0.0
    %4260 = vmatprep.subr.mxu0 0.0
    %4261 = vmatpush1.msra.mxu0 0.0
    %4262 = vmatprep.subr.mxu0 0.0
    %4263 = vmatpush1.msra.mxu0 0.0
    %4264 = vmatprep.subr.mxu0 0.0
    %4265 = vmatpush1.msra.mxu0 0.0
    %4266 = vmatprep.subr.mxu0 0.0
    %4267 = vmatpush1.msra.mxu0 0.0
    %4268 = vmatprep.subr.mxu0 0.0
    %4269 = vmatpush1.msra.mxu0 0.0
    %4270 = vmatprep.subr.mxu0 0.0
    %4271 = vmatpush1.msra.mxu0 0.0
    %4272 = vmatprep.subr.mxu0 0.0
    %4273 = vmatpush1.msra.mxu0 0.0
    %4274 = vmatprep.subr.mxu0 0.0
    %4275 = vmatpush1.msra.mxu0 0.0
    %4276 = vmatprep.subr.mxu0 0.0
    %4277 = vmatpush1.msra.mxu0 0.0
    %4278 = vmatprep.subr.mxu0 0.0
    %4279 = vmatpush1.msra.mxu0 0.0
    %4280 = vmatprep.subr.mxu0 0.0
    %4281 = vmatpush1.msra.mxu0 0.0
    %4282 = vmatprep.subr.mxu0 0.0
    %4283 = vmatpush1.msra.mxu0 0.0
    %4284 = vmatprep.subr.mxu0 0.0
    %4285 = vmatpush1.msra.mxu0 0.0
    %4286 = vmatprep.subr.mxu0 0.0
    %4287 = vmatpush1.msra.mxu0 0.0
    %4288 = vmatprep.subr.mxu0 0.0
    %4289 = vmatpush1.msra.mxu0 0.0
    %4290 = vmatprep.subr.mxu0 0.0
    %4291 = vmatpush1.msra.mxu0 0.0
    %4292 = vmatprep.subr.mxu0 0.0
    %4293 = vmatpush1.msra.mxu0 0.0
    %4294 = vmatprep.subr.mxu0 0.0
    %4295 = vmatpush1.msra.mxu0 0.0
    %4296 = vmatprep.subr.mxu0 0.0
    %4297 = vmatpush1.msra.mxu0 0.0
    %4298 = vmatprep.subr.mxu0 0.0
    %4299 = vmatpush1.msra.mxu0 0.0
    %4300 = vmatprep.subr.mxu0 0.0
    %4301 = vmatpush1.msra.mxu0 0.0
    %4302 = vmatprep.subr.mxu0 0.0
    %4303 = vmatpush1.msra.mxu0 0.0
    %4304 = vmatprep.subr.mxu0 0.0
    %4305 = vmatpush1.msra.mxu0 0.0
    %4306 = vmatprep.subr.mxu0 0.0
    %4307 = vmatpush1.msra.mxu0 0.0
    %4308 = vmatprep.subr.mxu0 0.0
    %4309 = vmatpush1.msra.mxu0 0.0
    %4310 = vmatprep.mubr.f32.mxu0 0.0
    %4311 = vmatmul.mubr.f32.gmra.mrb[0].mxu0 %v4229
    %v4312 = vpop.f32.mrb[0].mxu0
    %v4313 = vadd.f32 0.0, %v4312
    %v4314 = vpop.f32.mrb[0].mxu0
    %4315 = vmatprep.mubr.f32.mxu0 0.0
    %4316 = vmatmul.mubr.f32.gmra.mrb[0].mxu0 %v4232
    %v4317 = vpop.f32.mrb[0].mxu0
    %v4318 = vadd.f32 0.0, %v4317
    %v4319 = vpop.f32.mrb[0].mxu0
    %4320 = vmatprep.mubr.f32.mxu0 0.0
    %4321 = vmatmul.mubr.f32.gmra.mrb[0].mxu0 %v4235
    %v4322 = vpop.f32.mrb[0].mxu0
    %v4323 = vadd.f32 0.0, %v4322
    %v4324 = vpop.f32.mrb[0].mxu0
    %4325 = vmatprep.mubr.f32.mxu0 0.0
    %4326 = vmatmul.mubr.f32.gmra.mrb[0].mxu0 %v4238
    %v4327 = vpop.f32.mrb[0].mxu0
    %v4328 = vadd.f32 0.0, %v4327
    %v4329 = vpop.f32.mrb[0].mxu0
    %4330 = vmatprep.mubr.f32.mxu0 0.0
    %4331 = vmatmul.mubr.f32.gmra.mrb[0].mxu0 %v4241
    %v4332 = vpop.f32.mrb[0].mxu0
    %v4333 = vadd.f32 0.0, %v4332
    %v4334 = vpop.f32.mrb[0].mxu0
    %4335 = vmatprep.mubr.f32.mxu0 0.0
    %4336 = vmatmul.mubr.f32.gmra.mrb[0].mxu0 %v4244
    %v4337 = vpop.f32.mrb[0].mxu0
    %v4338 = vadd.f32 0.0, %v4337
    %v4339 = vpop.f32.mrb[0].mxu0
    %4340 = vdwg.mxu0
    %4347 = vrot.lane.b32.xlu0 %v4313, 24
    %v4348 = vpop.permute.xlu0 %4347
    %4349 = vrot.lane.b32.xlu0 %v4318, 24
    %v4350 = vpop.permute.xlu0 %4349
    %4351 = vrot.lane.b32.xlu0 %v4323, 24
    %v4352 = vpop.permute.xlu0 %4351
    %4353 = vrot.lane.b32.xlu0 %v4328, 24
    %v4354 = vpop.permute.xlu0 %4353
    %4355 = vrot.lane.b32.xlu0 %v4333, 24
    %v4356 = vpop.permute.xlu0 %4355
    %4357 = vrot.lane.b32.xlu0 %v4338, 24
    %v4358 = vpop.permute.xlu0 %4357
    %4365 = vst.msk [vmem:[#allocation3] sm:$0xff] %vm2088, %v4348
    %4366 = vst.msk [vmem:[#allocation3 + $0x8] sm:$0xff] %vm2088, %v4350
    %4367 = vst.msk [vmem:[#allocation3 + $0x10] sm:$0xff] %vm2088, %v4352
    %4368 = vst.msk [vmem:[#allocation3 + $0x18] sm:$0xff] %vm2088, %v4354
    %4369 = vst.msk [vmem:[#allocation3 + $0x20] sm:$0xff] %vm2088, %v4356
    %4370 = vst.msk [vmem:[#allocation3 + $0x28] sm:$0xff] %vm2088, %v4358
    %v4371 = vld [vmem:[%s2649 + $0x20] sm:$0xff]
    %v4372 = vld [vmem:[%s2649 + $0x28] sm:$0xff]
    %v4373 = vld [vmem:[%s2649 + $0x30] sm:$0xff]
    %v4374 = vld [vmem:[%s2649 + $0x38] sm:$0xff]
    %v4375 = vld [vmem:[%s2649 + $0xa2] sm:$0x1]
    %v4376 = vld [vmem:[#allocation2] sm:$0xff]
    %v4377 = vld [vmem:[#allocation2 + $0x8] sm:$0xff]
    %v4378 = vld [vmem:[#allocation2 + $0x10] sm:$0xff]
    %v4379 = vld [vmem:[#allocation2 + $0x18] sm:$0xff]
    %v4380 = vld [vmem:[#allocation2 + $0x20] sm:$0xff]
    %v4381 = vld [vmem:[#allocation2 + $0x28] sm:$0xff]
    %v4382 = vld [vmem:[#allocation3] sm:$0xff]
    %v4383 = vld [vmem:[#allocation3 + $0x8] sm:$0xff]
    %v4384 = vld [vmem:[#allocation3 + $0x10] sm:$0xff]
    %v4385 = vld [vmem:[#allocation3 + $0x18] sm:$0xff]
    %v4386 = vld [vmem:[#allocation3 + $0x20] sm:$0xff]
    %v4387 = vld [vmem:[#allocation3 + $0x28] sm:$0xff]
    %v4389 = vsel %vm203, %v4382, 0
    %v4392 = vsel %vm203, %v4383, 0
    %v4395 = vsel %vm203, %v4384, 0
    %v4398 = vsel %vm203, %v4385, 0
    %v4401 = vsel %vm203, %v4386, 0
    %v4404 = vsel %vm203, %v4387, 0
    %4406 = vmatprep.subr.mxu0 0.0
    %4407 = vmatpush1.msra.mxu0 %v4371
    %4408 = vmatprep.subr.mxu0 0.0
    %4409 = vmatpush1.msra.mxu0 %v4372
    %4410 = vmatprep.subr.mxu0 0.0
    %4411 = vmatpush1.msra.mxu0 %v4373
    %4412 = vmatprep.subr.mxu0 0.0
    %4413 = vmatpush1.msra.mxu0 %v4374
    %4414 = vmatprep.subr.mxu0 0.0
    %4415 = vmatpush1.msra.mxu0 0.0
    %4416 = vmatprep.subr.mxu0 0.0
    %4417 = vmatpush1.msra.mxu0 0.0
    %4418 = vmatprep.subr.mxu0 0.0
    %4419 = vmatpush1.msra.mxu0 0.0
    %4420 = vmatprep.subr.mxu0 0.0
    %4421 = vmatpush1.msra.mxu0 0.0
    %4422 = vmatprep.subr.mxu0 0.0
    %4423 = vmatpush1.msra.mxu0 0.0
    %4424 = vmatprep.subr.mxu0 0.0
    %4425 = vmatpush1.msra.mxu0 0.0
    %4426 = vmatprep.subr.mxu0 0.0
    %4427 = vmatpush1.msra.mxu0 0.0
    %4428 = vmatprep.subr.mxu0 0.0
    %4429 = vmatpush1.msra.mxu0 0.0
    %4430 = vmatprep.subr.mxu0 0.0
    %4431 = vmatpush1.msra.mxu0 0.0
    %4432 = vmatprep.subr.mxu0 0.0
    %4433 = vmatpush1.msra.mxu0 0.0
    %4434 = vmatprep.subr.mxu0 0.0
    %4435 = vmatpush1.msra.mxu0 0.0
    %4436 = vmatprep.subr.mxu0 0.0
    %4437 = vmatpush1.msra.mxu0 0.0
    %4438 = vmatprep.subr.mxu0 0.0
    %4439 = vmatpush1.msra.mxu0 0.0
    %4440 = vmatprep.subr.mxu0 0.0
    %4441 = vmatpush1.msra.mxu0 0.0
    %4442 = vmatprep.subr.mxu0 0.0
    %4443 = vmatpush1.msra.mxu0 0.0
    %4444 = vmatprep.subr.mxu0 0.0
    %4445 = vmatpush1.msra.mxu0 0.0
    %4446 = vmatprep.subr.mxu0 0.0
    %4447 = vmatpush1.msra.mxu0 0.0
    %4448 = vmatprep.subr.mxu0 0.0
    %4449 = vmatpush1.msra.mxu0 0.0
    %4450 = vmatprep.subr.mxu0 0.0
    %4451 = vmatpush1.msra.mxu0 0.0
    %4452 = vmatprep.subr.mxu0 0.0
    %4453 = vmatpush1.msra.mxu0 0.0
    %4454 = vmatprep.subr.mxu0 0.0
    %4455 = vmatpush1.msra.mxu0 0.0
    %4456 = vmatprep.subr.mxu0 0.0
    %4457 = vmatpush1.msra.mxu0 0.0
    %4458 = vmatprep.subr.mxu0 0.0
    %4459 = vmatpush1.msra.mxu0 0.0
    %4460 = vmatprep.subr.mxu0 0.0
    %4461 = vmatpush1.msra.mxu0 0.0
    %4462 = vmatprep.subr.mxu0 0.0
    %4463 = vmatpush1.msra.mxu0 0.0
    %4464 = vmatprep.subr.mxu0 0.0
    %4465 = vmatpush1.msra.mxu0 0.0
    %4466 = vmatprep.subr.mxu0 0.0
    %4467 = vmatpush1.msra.mxu0 0.0
    %4468 = vmatprep.subr.mxu0 0.0
    %4469 = vmatpush1.msra.mxu0 0.0
    %4470 = vmatprep.mubr.f32.mxu0 0.0
    %4471 = vmatmul.mubr.f32.gmra.mrb[0].mxu0 %v4389
    %v4472 = vpop.f32.mrb[0].mxu0
    %v4473 = vadd.f32 0.0, %v4472
    %v4474 = vpop.f32.mrb[0].mxu0
    %4475 = vmatprep.mubr.f32.mxu0 0.0
    %4476 = vmatmul.mubr.f32.gmra.mrb[0].mxu0 %v4392
    %v4477 = vpop.f32.mrb[0].mxu0
    %v4478 = vadd.f32 0.0, %v4477
    %v4479 = vpop.f32.mrb[0].mxu0
    %4480 = vmatprep.mubr.f32.mxu0 0.0
    %4481 = vmatmul.mubr.f32.gmra.mrb[0].mxu0 %v4395
    %v4482 = vpop.f32.mrb[0].mxu0
    %v4483 = vadd.f32 0.0, %v4482
    %v4484 = vpop.f32.mrb[0].mxu0
    %4485 = vmatprep.mubr.f32.mxu0 0.0
    %4486 = vmatmul.mubr.f32.gmra.mrb[0].mxu0 %v4398
    %v4487 = vpop.f32.mrb[0].mxu0
    %v4488 = vadd.f32 0.0, %v4487
    %v4489 = vpop.f32.mrb[0].mxu0
    %4490 = vmatprep.mubr.f32.mxu0 0.0
    %4491 = vmatmul.mubr.f32.gmra.mrb[0].mxu0 %v4401
    %v4492 = vpop.f32.mrb[0].mxu0
    %v4493 = vadd.f32 0.0, %v4492
    %v4494 = vpop.f32.mrb[0].mxu0
    %4495 = vmatprep.mubr.f32.mxu0 0.0
    %4496 = vmatmul.mubr.f32.gmra.mrb[0].mxu0 %v4404
    %v4497 = vpop.f32.mrb[0].mxu0
    %v4498 = vadd.f32 0.0, %v4497
    %v4499 = vpop.f32.mrb[0].mxu0
    %4500 = vdwg.mxu0
    %v4501 = vadd.f32 %v4376, %v4473
    %v4502 = vadd.f32 %v4377, %v4478
    %v4503 = vadd.f32 %v4378, %v4483
    %v4504 = vadd.f32 %v4379, %v4488
    %v4505 = vadd.f32 %v4380, %v4493
    %v4506 = vadd.f32 %v4381, %v4498
    %v4507 = vlaneseq
    %v4508 = vshrl.u32 %v4507, 7
    %v4509 = vsub.s32 0, %v4508
    %v4510 = vrot.slane %v4375, %v4509
    %v4511 = vadd.f32 %v4501, %v4510
    %v4512 = vadd.f32 %v4502, %v4510
    %v4513 = vadd.f32 %v4503, %v4510
    %v4514 = vadd.f32 %v4504, %v4510
    %v4515 = vadd.f32 %v4505, %v4510
    %v4516 = vadd.f32 %v4506, %v4510
    %4517 = vst.msk [vmem:[#allocation2] sm:$0xff] %vm203, %v4511
    %4518 = vst.msk [vmem:[#allocation2 + $0x8] sm:$0xff] %vm203, %v4512
    %4519 = vst.msk [vmem:[#allocation2 + $0x10] sm:$0xff] %vm203, %v4513
    %4520 = vst.msk [vmem:[#allocation2 + $0x18] sm:$0xff] %vm203, %v4514
    %4521 = vst.msk [vmem:[#allocation2 + $0x20] sm:$0xff] %vm203, %v4515
    %4522 = vst.msk [vmem:[#allocation2 + $0x28] sm:$0xff] %vm203, %v4516
    %v4523 = vld [vmem:[%s2649 + $0xa3] sm:$0x1]
    %v4524 = vld [vmem:[%s2649 + $0xa4] sm:$0x1]
    %v4525 = vld [vmem:[#allocation2] sm:$0xff]
    %v4526 = vld [vmem:[#allocation2 + $0x8] sm:$0xff]
    %v4527 = vld [vmem:[#allocation2 + $0x10] sm:$0xff]
    %v4528 = vld [vmem:[#allocation2 + $0x18] sm:$0xff]
    %v4529 = vld [vmem:[#allocation2 + $0x20] sm:$0xff]
    %v4530 = vld [vmem:[#allocation2 + $0x28] sm:$0xff]
    %v4531 = vsel %vm203, %v4525, 0.0
    %4532 = vadd.xlane.f32.xlu0 %v4531
    %v4533 = vpop.xlane.xlu0 %4532
    %v4534 = vsel %vm203, %v4526, 0.0
    %4535 = vadd.xlane.f32.xlu0 %v4534
    %v4536 = vpop.xlane.xlu0 %4535
    %v4537 = vsel %vm203, %v4527, 0.0
    %4538 = vadd.xlane.f32.xlu0 %v4537
    %v4539 = vpop.xlane.xlu0 %4538
    %v4540 = vsel %vm203, %v4528, 0.0
    %4541 = vadd.xlane.f32.xlu0 %v4540
    %v4542 = vpop.xlane.xlu0 %4541
    %v4543 = vsel %vm203, %v4529, 0.0
    %4544 = vadd.xlane.f32.xlu0 %v4543
    %v4545 = vpop.xlane.xlu0 %4544
    %v4546 = vsel %vm203, %v4530, 0.0
    %4547 = vadd.xlane.f32.xlu0 %v4546
    %v4548 = vpop.xlane.xlu0 %4547
    %v4549 = vmul.f32 %v4533, %v216
    %v4550 = vmul.f32 %v4536, %v216
    %v4551 = vmul.f32 %v4539, %v216
    %v4552 = vmul.f32 %v4542, %v216
    %v4553 = vmul.f32 %v4545, %v216
    %v4554 = vmul.f32 %v4548, %v216
    %v4555 = vsub.f32 %v4525, %v4549
    %v4556 = vsub.f32 %v4526, %v4550
    %v4557 = vsub.f32 %v4527, %v4551
    %v4558 = vsub.f32 %v4528, %v4552
    %v4559 = vsub.f32 %v4529, %v4553
    %v4560 = vsub.f32 %v4530, %v4554
    %v4561 = vmul.f32 %v4555, %v4555
    %v4562 = vmul.f32 %v4556, %v4556
    %v4563 = vmul.f32 %v4557, %v4557
    %v4564 = vmul.f32 %v4558, %v4558
    %v4565 = vmul.f32 %v4559, %v4559
    %v4566 = vmul.f32 %v4560, %v4560
    %v4567 = vsel %vm203, %v4561, 0.0
    %4568 = vadd.xlane.f32.xlu0 %v4567
    %v4569 = vpop.xlane.xlu0 %4568
    %v4570 = vsel %vm203, %v4562, 0.0
    %4571 = vadd.xlane.f32.xlu0 %v4570
    %v4572 = vpop.xlane.xlu0 %4571
    %v4573 = vsel %vm203, %v4563, 0.0
    %4574 = vadd.xlane.f32.xlu0 %v4573
    %v4575 = vpop.xlane.xlu0 %4574
    %v4576 = vsel %vm203, %v4564, 0.0
    %4577 = vadd.xlane.f32.xlu0 %v4576
    %v4578 = vpop.xlane.xlu0 %4577
    %v4579 = vsel %vm203, %v4565, 0.0
    %4580 = vadd.xlane.f32.xlu0 %v4579
    %v4581 = vpop.xlane.xlu0 %4580
    %v4582 = vsel %vm203, %v4566, 0.0
    %4583 = vadd.xlane.f32.xlu0 %v4582
    %v4584 = vpop.xlane.xlu0 %4583
    %v4585 = vmul.f32 %v4569, %v216
    %v4586 = vmul.f32 %v4572, %v216
    %v4587 = vmul.f32 %v4575, %v216
    %v4588 = vmul.f32 %v4578, %v216
    %v4589 = vmul.f32 %v4581, %v216
    %v4590 = vmul.f32 %v4584, %v216
    %v4591 = vadd.f32 %v4585, 1e-05
    %v4592 = vadd.f32 %v4586, 1e-05
    %v4593 = vadd.f32 %v4587, 1e-05
    %v4594 = vadd.f32 %v4588, 1e-05
    %v4595 = vadd.f32 %v4589, 1e-05
    %v4596 = vadd.f32 %v4590, 1e-05
    %v4597 = vrsqrt.pop %v4591
    %v4598 = vrsqrt.pop %v4592
    %v4599 = vrsqrt.pop %v4593
    %v4600 = vrsqrt.pop %v4594
    %v4601 = vrsqrt.pop %v4595
    %v4602 = vrsqrt.pop %v4596
    %v4603 = vmul.f32 %v4555, %v4597
    %v4604 = vmul.f32 %v4556, %v4598
    %v4605 = vmul.f32 %v4557, %v4599
    %v4606 = vmul.f32 %v4558, %v4600
    %v4607 = vmul.f32 %v4559, %v4601
    %v4608 = vmul.f32 %v4560, %v4602
    %v4609 = vlaneseq
    %v4610 = vshrl.u32 %v4609, 7
    %v4611 = vsub.s32 0, %v4610
    %v4612 = vrot.slane %v4523, %v4611
    %v4613 = vmul.f32 %v4603, %v4612
    %v4614 = vmul.f32 %v4604, %v4612
    %v4615 = vmul.f32 %v4605, %v4612
    %v4616 = vmul.f32 %v4606, %v4612
    %v4617 = vmul.f32 %v4607, %v4612
    %v4618 = vmul.f32 %v4608, %v4612
    %v4619 = vlaneseq
    %v4620 = vshrl.u32 %v4619, 7
    %v4621 = vsub.s32 0, %v4620
    %v4622 = vrot.slane %v4524, %v4621
    %v4623 = vadd.f32 %v4613, %v4622
    %v4624 = vadd.f32 %v4614, %v4622
    %v4625 = vadd.f32 %v4615, %v4622
    %v4626 = vadd.f32 %v4616, %v4622
    %v4627 = vadd.f32 %v4617, %v4622
    %v4628 = vadd.f32 %v4618, %v4622
    %v4629 = vld [vmem:[%s2649 + $0x40] sm:$0xff]
    %v4630 = vld [vmem:[%s2649 + $0x48] sm:$0xff]
    %v4631 = vld [vmem:[%s2649 + $0x50] sm:$0xff]
    %v4632 = vld [vmem:[%s2649 + $0x58] sm:$0xff]
    %v4633 = vld [vmem:[%s2649 + $0xa5] sm:$0x1]
    %v4634 = vlaneseq
    %v4635 = vshrl.u32 %v4634, 7
    %v4636 = vsub.s32 0, %v4635
    %v4637 = vrot.slane %v4633, %v4636
    %v4639 = vsel %vm203, %v4623, 0
    %v4642 = vsel %vm203, %v4624, 0
    %v4645 = vsel %vm203, %v4625, 0
    %v4648 = vsel %vm203, %v4626, 0
    %v4651 = vsel %vm203, %v4627, 0
    %v4654 = vsel %vm203, %v4628, 0
    %4656 = vmatprep.subr.mxu0 0.0
    %4657 = vmatpush1.msra.mxu0 %v4629
    %4658 = vmatprep.subr.mxu0 0.0
    %4659 = vmatpush1.msra.mxu0 %v4630
    %4660 = vmatprep.subr.mxu0 0.0
    %4661 = vmatpush1.msra.mxu0 %v4631
    %4662 = vmatprep.subr.mxu0 0.0
    %4663 = vmatpush1.msra.mxu0 %v4632
    %4664 = vmatprep.subr.mxu0 0.0
    %4665 = vmatpush1.msra.mxu0 0.0
    %4666 = vmatprep.subr.mxu0 0.0
    %4667 = vmatpush1.msra.mxu0 0.0
    %4668 = vmatprep.subr.mxu0 0.0
    %4669 = vmatpush1.msra.mxu0 0.0
    %4670 = vmatprep.subr.mxu0 0.0
    %4671 = vmatpush1.msra.mxu0 0.0
    %4672 = vmatprep.subr.mxu0 0.0
    %4673 = vmatpush1.msra.mxu0 0.0
    %4674 = vmatprep.subr.mxu0 0.0
    %4675 = vmatpush1.msra.mxu0 0.0
    %4676 = vmatprep.subr.mxu0 0.0
    %4677 = vmatpush1.msra.mxu0 0.0
    %4678 = vmatprep.subr.mxu0 0.0
    %4679 = vmatpush1.msra.mxu0 0.0
    %4680 = vmatprep.subr.mxu0 0.0
    %4681 = vmatpush1.msra.mxu0 0.0
    %4682 = vmatprep.subr.mxu0 0.0
    %4683 = vmatpush1.msra.mxu0 0.0
    %4684 = vmatprep.subr.mxu0 0.0
    %4685 = vmatpush1.msra.mxu0 0.0
    %4686 = vmatprep.subr.mxu0 0.0
    %4687 = vmatpush1.msra.mxu0 0.0
    %4688 = vmatprep.subr.mxu0 0.0
    %4689 = vmatpush1.msra.mxu0 0.0
    %4690 = vmatprep.subr.mxu0 0.0
    %4691 = vmatpush1.msra.mxu0 0.0
    %4692 = vmatprep.subr.mxu0 0.0
    %4693 = vmatpush1.msra.mxu0 0.0
    %4694 = vmatprep.subr.mxu0 0.0
    %4695 = vmatpush1.msra.mxu0 0.0
    %4696 = vmatprep.subr.mxu0 0.0
    %4697 = vmatpush1.msra.mxu0 0.0
    %4698 = vmatprep.subr.mxu0 0.0
    %4699 = vmatpush1.msra.mxu0 0.0
    %4700 = vmatprep.subr.mxu0 0.0
    %4701 = vmatpush1.msra.mxu0 0.0
    %4702 = vmatprep.subr.mxu0 0.0
    %4703 = vmatpush1.msra.mxu0 0.0
    %4704 = vmatprep.subr.mxu0 0.0
    %4705 = vmatpush1.msra.mxu0 0.0
    %4706 = vmatprep.subr.mxu0 0.0
    %4707 = vmatpush1.msra.mxu0 0.0
    %4708 = vmatprep.subr.mxu0 0.0
    %4709 = vmatpush1.msra.mxu0 0.0
    %4710 = vmatprep.subr.mxu0 0.0
    %4711 = vmatpush1.msra.mxu0 0.0
    %4712 = vmatprep.subr.mxu0 0.0
    %4713 = vmatpush1.msra.mxu0 0.0
    %4714 = vmatprep.subr.mxu0 0.0
    %4715 = vmatpush1.msra.mxu0 0.0
    %4716 = vmatprep.subr.mxu0 0.0
    %4717 = vmatpush1.msra.mxu0 0.0
    %4718 = vmatprep.subr.mxu0 0.0
    %4719 = vmatpush1.msra.mxu0 0.0
    %4720 = vmatprep.mubr.f32.mxu0 0.0
    %4721 = vmatmul.mubr.f32.gmra.mrb[0].mxu0 %v4639
    %v4722 = vpop.f32.mrb[0].mxu0
    %v4723 = vadd.f32 %v4637, %v4722
    %v4724 = vpop.f32.mrb[0].mxu0
    %4725 = vmatprep.mubr.f32.mxu0 0.0
    %4726 = vmatmul.mubr.f32.gmra.mrb[0].mxu0 %v4642
    %v4727 = vpop.f32.mrb[0].mxu0
    %v4728 = vadd.f32 %v4637, %v4727
    %v4729 = vpop.f32.mrb[0].mxu0
    %4730 = vmatprep.mubr.f32.mxu0 0.0
    %4731 = vmatmul.mubr.f32.gmra.mrb[0].mxu0 %v4645
    %v4732 = vpop.f32.mrb[0].mxu0
    %v4733 = vadd.f32 %v4637, %v4732
    %v4734 = vpop.f32.mrb[0].mxu0
    %4735 = vmatprep.mubr.f32.mxu0 0.0
    %4736 = vmatmul.mubr.f32.gmra.mrb[0].mxu0 %v4648
    %v4737 = vpop.f32.mrb[0].mxu0
    %v4738 = vadd.f32 %v4637, %v4737
    %v4739 = vpop.f32.mrb[0].mxu0
    %4740 = vmatprep.mubr.f32.mxu0 0.0
    %4741 = vmatmul.mubr.f32.gmra.mrb[0].mxu0 %v4651
    %v4742 = vpop.f32.mrb[0].mxu0
    %v4743 = vadd.f32 %v4637, %v4742
    %v4744 = vpop.f32.mrb[0].mxu0
    %4745 = vmatprep.mubr.f32.mxu0 0.0
    %4746 = vmatmul.mubr.f32.gmra.mrb[0].mxu0 %v4654
    %v4747 = vpop.f32.mrb[0].mxu0
    %v4748 = vadd.f32 %v4637, %v4747
    %v4749 = vpop.f32.mrb[0].mxu0
    %4750 = vdwg.mxu0
    %v4751 = vmul.f32 %v4723, 0.5
    %v4752 = vmul.f32 %v4728, 0.5
    %v4753 = vmul.f32 %v4733, 0.5
    %v4754 = vmul.f32 %v4738, 0.5
    %v4755 = vmul.f32 %v4743, 0.5
    %v4756 = vmul.f32 %v4748, 0.5
    %v4757 = vmul.f32 %v4723, 0.70710677
    %v4758 = vmul.f32 %v4728, 0.70710677
    %v4759 = vmul.f32 %v4733, 0.70710677
    %v4760 = vmul.f32 %v4738, 0.70710677
    %v4761 = vmul.f32 %v4743, 0.70710677
    %v4762 = vmul.f32 %v4748, 0.70710677
    %v4763 = verf.f32.pop %v4757
    %v4764 = verf.f32.pop %v4758
    %v4765 = verf.f32.pop %v4759
    %v4766 = verf.f32.pop %v4760
    %v4767 = verf.f32.pop %v4761
    %v4768 = verf.f32.pop %v4762
    %v4769 = vadd.f32 %v4763, 1.0
    %v4770 = vadd.f32 %v4764, 1.0
    %v4771 = vadd.f32 %v4765, 1.0
    %v4772 = vadd.f32 %v4766, 1.0
    %v4773 = vadd.f32 %v4767, 1.0
    %v4774 = vadd.f32 %v4768, 1.0
    %v4775 = vmul.f32 %v4751, %v4769
    %v4776 = vmul.f32 %v4752, %v4770
    %v4777 = vmul.f32 %v4753, %v4771
    %v4778 = vmul.f32 %v4754, %v4772
    %v4779 = vmul.f32 %v4755, %v4773
    %v4780 = vmul.f32 %v4756, %v4774
    %v4781 = vld [vmem:[%s2649 + $0x60] sm:$0xff]
    %v4782 = vld [vmem:[%s2649 + $0x68] sm:$0xff]
    %v4783 = vld [vmem:[%s2649 + $0x70] sm:$0xff]
    %v4784 = vld [vmem:[%s2649 + $0x78] sm:$0xff]
    %v4785 = vld [vmem:[%s2649 + $0x80] sm:$0xff]
    %v4786 = vld [vmem:[%s2649 + $0x88] sm:$0xff]
    %v4787 = vld [vmem:[%s2649 + $0x90] sm:$0xff]
    %v4788 = vld [vmem:[%s2649 + $0x98] sm:$0xff]
    %v4789 = vld [vmem:[%s2649 + $0xa6] sm:$0x1]
    %v4791 = vsel %vm21, %v4775, 0
    %v4794 = vsel %vm21, %v4776, 0
    %v4797 = vsel %vm21, %v4777, 0
    %v4800 = vsel %vm21, %v4778, 0
    %v4803 = vsel %vm21, %v4779, 0
    %v4806 = vsel %vm21, %v4780, 0
    %4808 = vmatprep.subr.mxu0 0.0
    %4809 = vmatpush1.msra.mxu0 %v4781
    %4810 = vmatprep.subr.mxu0 0.0
    %4811 = vmatpush1.msra.mxu0 %v4782
    %4812 = vmatprep.subr.mxu0 0.0
    %4813 = vmatpush1.msra.mxu0 %v4783
    %4814 = vmatprep.subr.mxu0 0.0
    %4815 = vmatpush1.msra.mxu0 %v4784
    %4816 = vmatprep.subr.mxu0 0.0
    %4817 = vmatpush1.msra.mxu0 %v4785
    %4818 = vmatprep.subr.mxu0 0.0
    %4819 = vmatpush1.msra.mxu0 %v4786
    %4820 = vmatprep.subr.mxu0 0.0
    %4821 = vmatpush1.msra.mxu0 %v4787
    %4822 = vmatprep.subr.mxu0 0.0
    %4823 = vmatpush1.msra.mxu0 %v4788
    %4824 = vmatprep.subr.mxu0 0.0
    %4825 = vmatpush1.msra.mxu0 0.0
    %4826 = vmatprep.subr.mxu0 0.0
    %4827 = vmatpush1.msra.mxu0 0.0
    %4828 = vmatprep.subr.mxu0 0.0
    %4829 = vmatpush1.msra.mxu0 0.0
    %4830 = vmatprep.subr.mxu0 0.0
    %4831 = vmatpush1.msra.mxu0 0.0
    %4832 = vmatprep.subr.mxu0 0.0
    %4833 = vmatpush1.msra.mxu0 0.0
    %4834 = vmatprep.subr.mxu0 0.0
    %4835 = vmatpush1.msra.mxu0 0.0
    %4836 = vmatprep.subr.mxu0 0.0
    %4837 = vmatpush1.msra.mxu0 0.0
    %4838 = vmatprep.subr.mxu0 0.0
    %4839 = vmatpush1.msra.mxu0 0.0
    %4840 = vmatprep.subr.mxu0 0.0
    %4841 = vmatpush1.msra.mxu0 0.0
    %4842 = vmatprep.subr.mxu0 0.0
    %4843 = vmatpush1.msra.mxu0 0.0
    %4844 = vmatprep.subr.mxu0 0.0
    %4845 = vmatpush1.msra.mxu0 0.0
    %4846 = vmatprep.subr.mxu0 0.0
    %4847 = vmatpush1.msra.mxu0 0.0
    %4848 = vmatprep.subr.mxu0 0.0
    %4849 = vmatpush1.msra.mxu0 0.0
    %4850 = vmatprep.subr.mxu0 0.0
    %4851 = vmatpush1.msra.mxu0 0.0
    %4852 = vmatprep.subr.mxu0 0.0
    %4853 = vmatpush1.msra.mxu0 0.0
    %4854 = vmatprep.subr.mxu0 0.0
    %4855 = vmatpush1.msra.mxu0 0.0
    %4856 = vmatprep.subr.mxu0 0.0
    %4857 = vmatpush1.msra.mxu0 0.0
    %4858 = vmatprep.subr.mxu0 0.0
    %4859 = vmatpush1.msra.mxu0 0.0
    %4860 = vmatprep.subr.mxu0 0.0
    %4861 = vmatpush1.msra.mxu0 0.0
    %4862 = vmatprep.subr.mxu0 0.0
    %4863 = vmatpush1.msra.mxu0 0.0
    %4864 = vmatprep.subr.mxu0 0.0
    %4865 = vmatpush1.msra.mxu0 0.0
    %4866 = vmatprep.subr.mxu0 0.0
    %4867 = vmatpush1.msra.mxu0 0.0
    %4868 = vmatprep.subr.mxu0 0.0
    %4869 = vmatpush1.msra.mxu0 0.0
    %4870 = vmatprep.subr.mxu0 0.0
    %4871 = vmatpush1.msra.mxu0 0.0
    %4872 = vmatprep.mubr.f32.mxu0 0.0
    %4873 = vmatmul.mubr.f32.gmra.mrb[0].mxu0 %v4791
    %v4874 = vpop.f32.mrb[0].mxu0
    %v4875 = vadd.f32 0.0, %v4874
    %v4876 = vpop.f32.mrb[0].mxu0
    %4877 = vmatprep.mubr.f32.mxu0 0.0
    %4878 = vmatmul.mubr.f32.gmra.mrb[0].mxu0 %v4794
    %v4879 = vpop.f32.mrb[0].mxu0
    %v4880 = vadd.f32 0.0, %v4879
    %v4881 = vpop.f32.mrb[0].mxu0
    %4882 = vmatprep.mubr.f32.mxu0 0.0
    %4883 = vmatmul.mubr.f32.gmra.mrb[0].mxu0 %v4797
    %v4884 = vpop.f32.mrb[0].mxu0
    %v4885 = vadd.f32 0.0, %v4884
    %v4886 = vpop.f32.mrb[0].mxu0
    %4887 = vmatprep.mubr.f32.mxu0 0.0
    %4888 = vmatmul.mubr.f32.gmra.mrb[0].mxu0 %v4800
    %v4889 = vpop.f32.mrb[0].mxu0
    %v4890 = vadd.f32 0.0, %v4889
    %v4891 = vpop.f32.mrb[0].mxu0
    %4892 = vmatprep.mubr.f32.mxu0 0.0
    %4893 = vmatmul.mubr.f32.gmra.mrb[0].mxu0 %v4803
    %v4894 = vpop.f32.mrb[0].mxu0
    %v4895 = vadd.f32 0.0, %v4894
    %v4896 = vpop.f32.mrb[0].mxu0
    %4897 = vmatprep.mubr.f32.mxu0 0.0
    %4898 = vmatmul.mubr.f32.gmra.mrb[0].mxu0 %v4806
    %v4899 = vpop.f32.mrb[0].mxu0
    %v4900 = vadd.f32 0.0, %v4899
    %v4901 = vpop.f32.mrb[0].mxu0
    %4902 = vdwg.mxu0
    %v4903 = vadd.f32 %v4525, %v4875
    %v4904 = vadd.f32 %v4526, %v4880
    %v4905 = vadd.f32 %v4527, %v4885
    %v4906 = vadd.f32 %v4528, %v4890
    %v4907 = vadd.f32 %v4529, %v4895
    %v4908 = vadd.f32 %v4530, %v4900
    %v4909 = vlaneseq
    %v4910 = vshrl.u32 %v4909, 7
    %v4911 = vsub.s32 0, %v4910
    %v4912 = vrot.slane %v4789, %v4911
    %v4913 = vadd.f32 %v4903, %v4912
    %v4914 = vadd.f32 %v4904, %v4912
    %v4915 = vadd.f32 %v4905, %v4912
    %v4916 = vadd.f32 %v4906, %v4912
    %v4917 = vadd.f32 %v4907, %v4912
    %v4918 = vadd.f32 %v4908, %v4912
    %4919 = vst.msk [vmem:[#allocation2] sm:$0xff] %vm203, %v4913
    %4920 = vst.msk [vmem:[#allocation2 + $0x8] sm:$0xff] %vm203, %v4914
    %4921 = vst.msk [vmem:[#allocation2 + $0x10] sm:$0xff] %vm203, %v4915
    %4922 = vst.msk [vmem:[#allocation2 + $0x18] sm:$0xff] %vm203, %v4916
    %4923 = vst.msk [vmem:[#allocation2 + $0x20] sm:$0xff] %vm203, %v4917
    %4924 = vst.msk [vmem:[#allocation2 + $0x28] sm:$0xff] %vm203, %v4918
    %v4925 = vld [vmem:[#allocation2] sm:$0x1]
    %4926 = vst.msk [vmem:[#allocation4] sm:$0x1] %vm276, %v4925
    %v4927 = vld [vmem:[#allocation2 + $0x18] sm:$0x1]
    %4928 = vst.msk [vmem:[#allocation4 + $0x1] sm:$0x1] %vm276, %v4927
    %v4929 = vld [vmem:[%s1 + $0x46] sm:$0x1]
    %v4930 = vld [vmem:[%s1 + $0x47] sm:$0x1]
    %v4931 = vld [vmem:[#allocation4] sm:$0x3]
    %vm4932 = vcmask 254976
    %v4933 = vsel %vm4932, %v4931, 0.0
    %4934 = vadd.xlane.f32.xlu0 %v4933
    %v4935 = vpop.xlane.xlu0 %4934
    %v4936 = vmul.f32 %v4935, %v216
    %v4937 = vsub.f32 %v4931, %v4936
    %v4938 = vmul.f32 %v4937, %v4937
    %v4939 = vsel %vm4932, %v4938, 0.0
    %4940 = vadd.xlane.f32.xlu0 %v4939
    %v4941 = vpop.xlane.xlu0 %4940
    %v4942 = vmul.f32 %v4941, %v216
    %v4943 = vadd.f32 %v4942, 1e-05
    %v4944 = vrsqrt.pop %v4943
    %v4945 = vmul.f32 %v4937, %v4944
    %v4946 = vlaneseq
    %v4947 = vshrl.u32 %v4946, 7
    %v4948 = vsub.s32 0, %v4947
    %v4949 = vrot.slane %v4929, %v4948
    %v4950 = vmul.f32 %v4945, %v4949
    %v4951 = vlaneseq
    %v4952 = vshrl.u32 %v4951, 7
    %v4953 = vsub.s32 0, %v4952
    %v4954 = vrot.slane %v4930, %v4953
    %v4955 = vadd.f32 %v4950, %v4954
    %v4956 = vld [vmem:[%s1 + $0x58] sm:$0xff]
    %v4957 = vld [vmem:[%s1 + $0x60] sm:$0xff]
    %v4958 = vld [vmem:[%s1 + $0x68] sm:$0xff]
    %v4959 = vld [vmem:[%s1 + $0x70] sm:$0xff]
    %v4960 = vld [vmem:[%s1 + $0x78] sm:$0x1]
    %v4961 = vlaneseq
    %v4962 = vshrl.u32 %v4961, 7
    %v4963 = vsub.s32 0, %v4962
    %v4964 = vrot.slane %v4960, %v4963
    %v4966 = vsel %vm203, %v4955, 0
    %4968 = vmatprep.subr.mxu0 0.0
    %4969 = vmatpush1.msra.mxu0 %v4956
    %4970 = vmatprep.subr.mxu0 0.0
    %4971 = vmatpush1.msra.mxu0 %v4957
    %4972 = vmatprep.subr.mxu0 0.0
    %4973 = vmatpush1.msra.mxu0 %v4958
    %4974 = vmatprep.subr.mxu0 0.0
    %4975 = vmatpush1.msra.mxu0 %v4959
    %4976 = vmatprep.subr.mxu0 0.0
    %4977 = vmatpush1.msra.mxu0 0.0
    %4978 = vmatprep.subr.mxu0 0.0
    %4979 = vmatpush1.msra.mxu0 0.0
    %4980 = vmatprep.subr.mxu0 0.0
    %4981 = vmatpush1.msra.mxu0 0.0
    %4982 = vmatprep.subr.mxu0 0.0
    %4983 = vmatpush1.msra.mxu0 0.0
    %4984 = vmatprep.subr.mxu0 0.0
    %4985 = vmatpush1.msra.mxu0 0.0
    %4986 = vmatprep.subr.mxu0 0.0
    %4987 = vmatpush1.msra.mxu0 0.0
    %4988 = vmatprep.subr.mxu0 0.0
    %4989 = vmatpush1.msra.mxu0 0.0
    %4990 = vmatprep.subr.mxu0 0.0
    %4991 = vmatpush1.msra.mxu0 0.0
    %4992 = vmatprep.subr.mxu0 0.0
    %4993 = vmatpush1.msra.mxu0 0.0
    %4994 = vmatprep.subr.mxu0 0.0
    %4995 = vmatpush1.msra.mxu0 0.0
    %4996 = vmatprep.subr.mxu0 0.0
    %4997 = vmatpush1.msra.mxu0 0.0
    %4998 = vmatprep.subr.mxu0 0.0
    %4999 = vmatpush1.msra.mxu0 0.0
    %5000 = vmatprep.subr.mxu0 0.0
    %5001 = vmatpush1.msra.mxu0 0.0
    %5002 = vmatprep.subr.mxu0 0.0
    %5003 = vmatpush1.msra.mxu0 0.0
    %5004 = vmatprep.subr.mxu0 0.0
    %5005 = vmatpush1.msra.mxu0 0.0
    %5006 = vmatprep.subr.mxu0 0.0
    %5007 = vmatpush1.msra.mxu0 0.0
    %5008 = vmatprep.subr.mxu0 0.0
    %5009 = vmatpush1.msra.mxu0 0.0
    %5010 = vmatprep.subr.mxu0 0.0
    %5011 = vmatpush1.msra.mxu0 0.0
    %5012 = vmatprep.subr.mxu0 0.0
    %5013 = vmatpush1.msra.mxu0 0.0
    %5014 = vmatprep.subr.mxu0 0.0
    %5015 = vmatpush1.msra.mxu0 0.0
    %5016 = vmatprep.subr.mxu0 0.0
    %5017 = vmatpush1.msra.mxu0 0.0
    %5018 = vmatprep.subr.mxu0 0.0
    %5019 = vmatpush1.msra.mxu0 0.0
    %5020 = vmatprep.subr.mxu0 0.0
    %5021 = vmatpush1.msra.mxu0 0.0
    %5022 = vmatprep.subr.mxu0 0.0
    %5023 = vmatpush1.msra.mxu0 0.0
    %5024 = vmatprep.subr.mxu0 0.0
    %5025 = vmatpush1.msra.mxu0 0.0
    %5026 = vmatprep.subr.mxu0 0.0
    %5027 = vmatpush1.msra.mxu0 0.0
    %5028 = vmatprep.subr.mxu0 0.0
    %5029 = vmatpush1.msra.mxu0 0.0
    %5030 = vmatprep.subr.mxu0 0.0
    %5031 = vmatpush1.msra.mxu0 0.0
    %5032 = vmatprep.mubr.f32.mxu0 0.0
    %5033 = vmatmul.mubr.f32.gmra.mrb[0].mxu0 %v4966
    %v5034 = vpop.f32.mrb[0].mxu0
    %v5035 = vadd.f32 %v4964, %v5034
    %v5036 = vpop.f32.mrb[0].mxu0
    %5037 = vdwg.mxu0
    %vm5038 = vcmask 74752
    %5039 = vst.msk [vmem:[#allocation5] sm:$0x3] %vm5038, %v5035
    // Predicated region
    $region14: #{vit_forward.1} parent=1 // pred_check
      _
    $region15: #{vit_forward.1} parent=1 // pred_check_branch
      %5041 = sbr.rel (0) target = $region17
    $region16: #{vit_forward.1} parent=1 // pred_region
      %s5043 = ssub.s32 32, 32
      %5044 = vsyncadd [#allocation6], %s5043
      %s5046 = sshll.u32 [#allocation5], 4
      %s5047 = int_to_ptr.vmem [resolvable:$true] %s5046
      %5049 = dma.vmem_to_hbm [thread:$0]  %s5047, 32, %s3, [#allocation6]
    $region17: #{vit_forward.1} parent=1 // pred_fallthru
      _
    // Predicated region
    $region18: #{vit_forward.1} parent=1 // pred_check
      _
    $region19: #{vit_forward.1} parent=1 // pred_check_branch
      %5051 = sbr.rel (0) target = $region21
    $region20: #{vit_forward.1} parent=1 // pred_region
      %5052 = dma.done [#allocation6], 32
    $region21: #{vit_forward.1} parent=1 // pred_fallthru
      _
    %5053 = vsyncpa [#allocation6], 1

</llo_original>
